<compile_context>
chip_gen: v7x
topology: tpu7x:2x2x1
jax: 0.10.0
libtpu: 0.0.40
codegen_flags: <defaults>
</compile_context>

<pallas_src>
import functools

import jax
import jax.numpy as jnp
from jax.experimental import pallas as pl
from jax.experimental.pallas import tpu as pltpu

LEAKY_SLOPE = 0.01
BN_EPS = 1e-5
MARGIN = 128   # lane margin around the staged pixel axis: keeps every tap slice in-bounds and
               # keeps all staging stores 128-lane aligned (bf16 lane tile).


def _fused_kernel(x_ref, w1_ref, w2_ref, p1_ref, p2_ref, m_ref,
                  o_ref, s1_ref, *, shifts, n_valid):
    """Fused [conv3x3(pad=1) + training-mode BN + LeakyReLU] x 2, pixels-on-lanes layout.

    x_ref  : (Cin, MARGIN + NPIX + MARGIN) bf16  halo-padded input slab (pixels on lanes)
    w1_ref : (C1, 9*Cin) bf16   conv1 taps, column = k*Cin + ci, k = (dy+1)*3 + (dx+1)
    w2_ref : (C2, 9*C1)  bf16   conv2 taps
    p1_ref : (C1, 3) f32        columns = [bias, gamma, beta] of stage 1
    p2_ref : (C2, 3) f32        columns = [bias, gamma, beta] of stage 2
    m_ref  : (1, NPIX) f32      1.0 at real pixels, 0.0 at halo-ring / tail lanes
    o_ref  : (C2, NPIX) f32     output (lane-dense; wrapper strips the halo ring)
    s1_ref : (C1, MARGIN + NPIX + MARGIN) bf16  scratch: staged stage-1 activation
    """
    npix = o_ref.shape[1]
    mask = m_ref[...]                                    # (1, NPIX) f32
    inv_n = 1.0 / n_valid

    def conv_bn_act(src_ref, w_ref, p_ref):
        cin = src_ref.shape[0]
        # 3x3 conv: 9 statically shifted lane slices fed to the MXU (bf16 in, f32 accumulation).
        y = None
        for k, s in enumerate(shifts):
            tap = src_ref[:, MARGIN + s:MARGIN + s + npix]             # (cin, NPIX) bf16
            wk = w_ref[:, k * cin:(k + 1) * cin]                        # (cout, cin) bf16
            d = jnp.dot(wk, tap, preferred_element_type=jnp.float32)
            y = d if y is None else y + d
        p = p_ref[...]
        y = y + p[:, 0:1]                                               # conv bias
        # Training-mode BatchNorm: biased batch stats over the real pixels only
        # (masked sums, two-pass centered variance, all in f32).
        mu = jnp.sum(y * mask, axis=1, keepdims=True) * inv_n
        yc = y - mu
        var = jnp.sum(yc * yc * mask, axis=1, keepdims=True) * inv_n
        y = p[:, 1:2] * (yc * jax.lax.rsqrt(var + BN_EPS)) + p[:, 2:3]
        y = jnp.where(y > 0, y, LEAKY_SLOPE * y)                        # leaky_relu(0.01)
        # Re-zero halo-ring / tail lanes: they are the zero padding of the next conv.
        return y * mask

    # ---- stage 1 (input slab already halo-padded + margin-padded by the wrapper) ----
    a1 = conv_bn_act(x_ref, w1_ref, p1_ref)

    # ---- stage 2 (intermediate activation staged in VMEM as bf16, never touches HBM) ----
    c1 = s1_ref.shape[0]
    s1_ref[:, 0:MARGIN] = jnp.zeros((c1, MARGIN), s1_ref.dtype)
    s1_ref[:, MARGIN + npix:2 * MARGIN + npix] = jnp.zeros((c1, MARGIN), s1_ref.dtype)
    s1_ref[:, MARGIN:MARGIN + npix] = a1.astype(s1_ref.dtype)          # 128-aligned store
    a2 = conv_bn_act(s1_ref, w2_ref, p2_ref)

    o_ref[...] = a2                                      # unmasked, fully lane-dense store


def _fused_forward(x_slab, w1m, w2m, p1, p2, mask, *, shifts, n_valid):
    cin, slab_w = x_slab.shape
    c1 = w1m.shape[0]
    c2 = w2m.shape[0]
    npix = mask.shape[1]

    kernel = functools.partial(_fused_kernel, shifts=shifts, n_valid=n_valid)
    return pl.pallas_call(
        kernel,
        out_shape=jax.ShapeDtypeStruct((c2, npix), jnp.float32),
        grid=(1,),   # toy shapes: whole problem is VMEM-resident; BN needs full-batch stats
        in_specs=[
            pl.BlockSpec((cin, slab_w), lambda i: (0, 0)),
            pl.BlockSpec(w1m.shape, lambda i: (0, 0)),
            pl.BlockSpec(w2m.shape, lambda i: (0, 0)),
            pl.BlockSpec(p1.shape, lambda i: (0, 0)),
            pl.BlockSpec(p2.shape, lambda i: (0, 0)),
            pl.BlockSpec((1, npix), lambda i: (0, 0)),
        ],
        out_specs=pl.BlockSpec((c2, npix), lambda i: (0, 0)),
        scratch_shapes=[pltpu.VMEM((c1, npix + 2 * MARGIN), jnp.bfloat16)],
        compiler_params=pltpu.CompilerParams(dimension_semantics=("arbitrary",)),
    )(x_slab, w1m, w2m, p1, p2, mask)


def _pack_weight(w_oihw):
    """(Cout, Cin, 3, 3) PyTorch layout -> (Cout, 9*Cin) bf16, column = (dy*3+dx)*Cin + ci."""
    co, ci, kh, kw = w_oihw.shape
    return jnp.transpose(w_oihw, (0, 2, 3, 1)).reshape(co, kh * kw * ci).astype(jnp.bfloat16)


@jax.jit
def conv_batchnorm_act_x2(x_nchw, params):
    """Forward of ConvBatchNormAct_x2. Input/output: NCHW, like PyTorch."""
    N, Cin, H, W = x_nchw.shape
    C2 = params["w2"].shape[0]
    Hp, Wp = H + 2, W + 2                 # spatially halo-padded image
    P = Hp * Wp
    NP = N * P
    npix = -(-NP // 128) * 128            # pixel axis rounded up to a full lane tile

    # Halo-padded, channel-major, pixels-on-lanes input slab (bf16: it only feeds the MXU).
    xp = jnp.pad(x_nchw, ((0, 0), (0, 0), (1, 1), (1, 1)))
    x_cp = jnp.transpose(xp, (1, 0, 2, 3)).reshape(Cin, NP)
    x_slab = jnp.pad(x_cp, ((0, 0), (MARGIN, MARGIN + npix - NP))).astype(jnp.bfloat16)

    # {0,1} mask of real (non-halo, non-tail) pixels: BN stats + ring re-zeroing.
    mask_img = jnp.zeros((Hp, Wp), jnp.float32).at[1:H + 1, 1:W + 1].set(1.0)
    mask = jnp.pad(jnp.tile(mask_img.reshape(-1), N), (0, npix - NP)).reshape(1, npix)

    # Per-channel params packed as (C, 3) = [bias | gamma | beta] -> 2 tiny DMAs.
    p1 = jnp.stack([params["b1"], params["g1"], params["be1"]], axis=1).astype(jnp.float32)
    p2 = jnp.stack([params["b2"], params["g2"], params["be2"]], axis=1).astype(jnp.float32)

    # Static per-tap lane shifts in the padded flat pixel coordinate (same order as weights).
    shifts = tuple((dy - 1) * Wp + (dx - 1) for dy in range(3) for dx in range(3))

    out_slab = _fused_forward(x_slab, _pack_weight(params["w1"]), _pack_weight(params["w2"]),
                              p1, p2, mask, shifts=shifts, n_valid=N * H * W)

    # Strip halo ring / tail and return NCHW (wrapper-side layout plumbing, pure XLA).
    out = out_slab[:, :NP].reshape(C2, N, Hp, Wp)[:, :, 1:H + 1, 1:W + 1]
    # Dropout2d(spatial_dropout=0) == nn.Identity
    return jnp.transpose(out, (1, 0, 2, 3))


def _reference_forward(x_nchw, params):
    """Pure-JAX (f32) reference of the PyTorch forward (training-mode BN)."""
    def conv(x, w, b):
        y = jax.lax.conv_general_dilated(
            x, w, window_strides=(1, 1), padding="SAME",
            dimension_numbers=("NCHW", "OIHW", "NCHW"))
        return y + b[None, :, None, None]

    def bn(x, g, be):
        mean = jnp.mean(x, axis=(0, 2, 3), keepdims=True)
        var = jnp.var(x, axis=(0, 2, 3), keepdims=True)   # biased, as in PyTorch training
        return (g[None, :, None, None] * (x - mean) * jax.lax.rsqrt(var + BN_EPS)
                + be[None, :, None, None])

    act = lambda v: jnp.where(v > 0, v, LEAKY_SLOPE * v)
    h = act(bn(conv(x_nchw, params["w1"], params["b1"]), params["g1"], params["be1"]))
    h = act(bn(conv(h, params["w2"], params["b2"]), params["g2"], params["be2"]))
    return h


if __name__ == "__main__":
    key = jax.random.PRNGKey(0)
    N, in_ch, H, W = 2, 4, 16, 16
    n_filters = 8

    ks = jax.random.split(key, 9)
    x = jax.random.normal(ks[0], (N, in_ch, H, W), jnp.float32)
    params = {
        "w1": 0.2 * jax.random.normal(ks[1], (n_filters, in_ch, 3, 3), jnp.float32),
        "b1": 0.1 * jax.random.normal(ks[2], (n_filters,), jnp.float32),
        "g1": 1.0 + 0.1 * jax.random.normal(ks[3], (n_filters,), jnp.float32),
        "be1": 0.1 * jax.random.normal(ks[4], (n_filters,), jnp.float32),
        "w2": 0.2 * jax.random.normal(ks[5], (n_filters, n_filters, 3, 3), jnp.float32),
        "b2": 0.1 * jax.random.normal(ks[6], (n_filters,), jnp.float32),
        "g2": 1.0 + 0.1 * jax.random.normal(ks[7], (n_filters,), jnp.float32),
        "be2": 0.1 * jax.random.normal(ks[8], (n_filters,), jnp.float32),
    }

    out = conv_batchnorm_act_x2(x, params)
    out = jax.block_until_ready(out)
    assert out.shape == (N, n_filters, H, W), out.shape

    ref = _reference_forward(x, params)
    max_diff = float(jnp.max(jnp.abs(out - ref)))
    # bf16 MXU operands (f32 accumulation) vs. an all-f32 reference.
    if max_diff > 5e-2:
        raise AssertionError(f"Pallas kernel mismatch vs reference, max |diff| = {max_diff}")

    print("KERNEL_OK")
</pallas_src>

<mosaic_0001>
module attributes {stable_mosaic.version = 11 : i64} {
  func.func @_fused_kernel(%arg0: i32, %arg1: memref<4x1024xbf16, #tpu.memory_space<vmem>>, %arg2: memref<8x36xbf16, #tpu.memory_space<vmem>>, %arg3: memref<8x72xbf16, #tpu.memory_space<vmem>>, %arg4: memref<8x3xf32, #tpu.memory_space<vmem>>, %arg5: memref<8x3xf32, #tpu.memory_space<vmem>>, %arg6: memref<1x768xf32, #tpu.memory_space<vmem>>, %arg7: memref<8x768xf32, #tpu.memory_space<vmem>>, %arg8: memref<8x1024xbf16, #tpu.memory_space<vmem>>) attributes {dimension_semantics = [#tpu.dimension_semantics<arbitrary>], iteration_bounds = array<i64: 1>, scalar_prefetch = 0 : i64, scratch_operands = 1 : i64, tpu.core_type = #tpu.core_type<tc>, window_params = [{pipeline_mode = #tpu.pipeline_mode<synchronous>, transform_indices = @transform_0, window_bounds = array<i64: 4, 1024>}, {pipeline_mode = #tpu.pipeline_mode<synchronous>, transform_indices = @transform_1, window_bounds = array<i64: 8, 36>}, {pipeline_mode = #tpu.pipeline_mode<synchronous>, transform_indices = @transform_2, window_bounds = array<i64: 8, 72>}, {pipeline_mode = #tpu.pipeline_mode<synchronous>, transform_indices = @transform_3, window_bounds = array<i64: 8, 3>}, {pipeline_mode = #tpu.pipeline_mode<synchronous>, transform_indices = @transform_4, window_bounds = array<i64: 8, 3>}, {pipeline_mode = #tpu.pipeline_mode<synchronous>, transform_indices = @transform_5, window_bounds = array<i64: 1, 768>}, {pipeline_mode = #tpu.pipeline_mode<synchronous>, transform_indices = @transform_6, window_bounds = array<i64: 8, 768>}]} {
    %c0 = arith.constant 0 : index
    %c0_0 = arith.constant 0 : index
    %0 = vector.load %arg6[%c0, %c0_0] : memref<1x768xf32, #tpu.memory_space<vmem>>, vector<1x768xf32>
    %c0_1 = arith.constant 0 : index
    %c109 = arith.constant 109 : index
    %1 = vector.load %arg1[%c0_1, %c109] : memref<4x1024xbf16, #tpu.memory_space<vmem>>, vector<4x768xbf16>
    %c0_2 = arith.constant 0 : index
    %c0_3 = arith.constant 0 : index
    %2 = vector.load %arg2[%c0_2, %c0_3] : memref<8x36xbf16, #tpu.memory_space<vmem>>, vector<8x4xbf16>
    %cst = arith.constant dense<0.000000e+00> : vector<8x768xf32>
    %3 = tpu.matmul %2, %1, %cst {dimension_numbers = #tpu.dot_dimension_numbers<[1], [0], [0], [1], [0, 0, 1, 1], [], []>} : vector<8x4xbf16>, vector<4x768xbf16>, vector<8x768xf32> -> vector<8x768xf32>
    %c0_4 = arith.constant 0 : index
    %c110 = arith.constant 110 : index
    %4 = vector.load %arg1[%c0_4, %c110] : memref<4x1024xbf16, #tpu.memory_space<vmem>>, vector<4x768xbf16>
    %c0_5 = arith.constant 0 : index
    %c4 = arith.constant 4 : index
    %5 = vector.load %arg2[%c0_5, %c4] : memref<8x36xbf16, #tpu.memory_space<vmem>>, vector<8x4xbf16>
    %cst_6 = arith.constant dense<0.000000e+00> : vector<8x768xf32>
    %6 = tpu.matmul %5, %4, %cst_6 {dimension_numbers = #tpu.dot_dimension_numbers<[1], [0], [0], [1], [0, 0, 1, 1], [], []>} : vector<8x4xbf16>, vector<4x768xbf16>, vector<8x768xf32> -> vector<8x768xf32>
    %7 = arith.addf %3, %6 : vector<8x768xf32>
    %c0_7 = arith.constant 0 : index
    %c111 = arith.constant 111 : index
    %8 = vector.load %arg1[%c0_7, %c111] : memref<4x1024xbf16, #tpu.memory_space<vmem>>, vector<4x768xbf16>
    %c0_8 = arith.constant 0 : index
    %c8 = arith.constant 8 : index
    %9 = vector.load %arg2[%c0_8, %c8] : memref<8x36xbf16, #tpu.memory_space<vmem>>, vector<8x4xbf16>
    %cst_9 = arith.constant dense<0.000000e+00> : vector<8x768xf32>
    %10 = tpu.matmul %9, %8, %cst_9 {dimension_numbers = #tpu.dot_dimension_numbers<[1], [0], [0], [1], [0, 0, 1, 1], [], []>} : vector<8x4xbf16>, vector<4x768xbf16>, vector<8x768xf32> -> vector<8x768xf32>
    %11 = arith.addf %7, %10 : vector<8x768xf32>
    %c0_10 = arith.constant 0 : index
    %c127 = arith.constant 127 : index
    %12 = vector.load %arg1[%c0_10, %c127] : memref<4x1024xbf16, #tpu.memory_space<vmem>>, vector<4x768xbf16>
    %c0_11 = arith.constant 0 : index
    %c12 = arith.constant 12 : index
    %13 = vector.load %arg2[%c0_11, %c12] : memref<8x36xbf16, #tpu.memory_space<vmem>>, vector<8x4xbf16>
    %cst_12 = arith.constant dense<0.000000e+00> : vector<8x768xf32>
    %14 = tpu.matmul %13, %12, %cst_12 {dimension_numbers = #tpu.dot_dimension_numbers<[1], [0], [0], [1], [0, 0, 1, 1], [], []>} : vector<8x4xbf16>, vector<4x768xbf16>, vector<8x768xf32> -> vector<8x768xf32>
    %15 = arith.addf %11, %14 : vector<8x768xf32>
    %c0_13 = arith.constant 0 : index
    %c128 = arith.constant 128 : index
    %16 = vector.load %arg1[%c0_13, %c128] : memref<4x1024xbf16, #tpu.memory_space<vmem>>, vector<4x768xbf16>
    %c0_14 = arith.constant 0 : index
    %c16 = arith.constant 16 : index
    %17 = vector.load %arg2[%c0_14, %c16] : memref<8x36xbf16, #tpu.memory_space<vmem>>, vector<8x4xbf16>
    %cst_15 = arith.constant dense<0.000000e+00> : vector<8x768xf32>
    %18 = tpu.matmul %17, %16, %cst_15 {dimension_numbers = #tpu.dot_dimension_numbers<[1], [0], [0], [1], [0, 0, 1, 1], [], []>} : vector<8x4xbf16>, vector<4x768xbf16>, vector<8x768xf32> -> vector<8x768xf32>
    %19 = arith.addf %15, %18 : vector<8x768xf32>
    %c0_16 = arith.constant 0 : index
    %c129 = arith.constant 129 : index
    %20 = vector.load %arg1[%c0_16, %c129] : memref<4x1024xbf16, #tpu.memory_space<vmem>>, vector<4x768xbf16>
    %c0_17 = arith.constant 0 : index
    %c20 = arith.constant 20 : index
    %21 = vector.load %arg2[%c0_17, %c20] : memref<8x36xbf16, #tpu.memory_space<vmem>>, vector<8x4xbf16>
    %cst_18 = arith.constant dense<0.000000e+00> : vector<8x768xf32>
    %22 = tpu.matmul %21, %20, %cst_18 {dimension_numbers = #tpu.dot_dimension_numbers<[1], [0], [0], [1], [0, 0, 1, 1], [], []>} : vector<8x4xbf16>, vector<4x768xbf16>, vector<8x768xf32> -> vector<8x768xf32>
    %23 = arith.addf %19, %22 : vector<8x768xf32>
    %c0_19 = arith.constant 0 : index
    %c145 = arith.constant 145 : index
    %24 = vector.load %arg1[%c0_19, %c145] : memref<4x1024xbf16, #tpu.memory_space<vmem>>, vector<4x768xbf16>
    %c0_20 = arith.constant 0 : index
    %c24 = arith.constant 24 : index
    %25 = vector.load %arg2[%c0_20, %c24] : memref<8x36xbf16, #tpu.memory_space<vmem>>, vector<8x4xbf16>
    %cst_21 = arith.constant dense<0.000000e+00> : vector<8x768xf32>
    %26 = tpu.matmul %25, %24, %cst_21 {dimension_numbers = #tpu.dot_dimension_numbers<[1], [0], [0], [1], [0, 0, 1, 1], [], []>} : vector<8x4xbf16>, vector<4x768xbf16>, vector<8x768xf32> -> vector<8x768xf32>
    %27 = arith.addf %23, %26 : vector<8x768xf32>
    %c0_22 = arith.constant 0 : index
    %c146 = arith.constant 146 : index
    %28 = vector.load %arg1[%c0_22, %c146] : memref<4x1024xbf16, #tpu.memory_space<vmem>>, vector<4x768xbf16>
    %c0_23 = arith.constant 0 : index
    %c28 = arith.constant 28 : index
    %29 = vector.load %arg2[%c0_23, %c28] : memref<8x36xbf16, #tpu.memory_space<vmem>>, vector<8x4xbf16>
    %cst_24 = arith.constant dense<0.000000e+00> : vector<8x768xf32>
    %30 = tpu.matmul %29, %28, %cst_24 {dimension_numbers = #tpu.dot_dimension_numbers<[1], [0], [0], [1], [0, 0, 1, 1], [], []>} : vector<8x4xbf16>, vector<4x768xbf16>, vector<8x768xf32> -> vector<8x768xf32>
    %31 = arith.addf %27, %30 : vector<8x768xf32>
    %c0_25 = arith.constant 0 : index
    %c147 = arith.constant 147 : index
    %32 = vector.load %arg1[%c0_25, %c147] : memref<4x1024xbf16, #tpu.memory_space<vmem>>, vector<4x768xbf16>
    %c0_26 = arith.constant 0 : index
    %c32 = arith.constant 32 : index
    %33 = vector.load %arg2[%c0_26, %c32] : memref<8x36xbf16, #tpu.memory_space<vmem>>, vector<8x4xbf16>
    %cst_27 = arith.constant dense<0.000000e+00> : vector<8x768xf32>
    %34 = tpu.matmul %33, %32, %cst_27 {dimension_numbers = #tpu.dot_dimension_numbers<[1], [0], [0], [1], [0, 0, 1, 1], [], []>} : vector<8x4xbf16>, vector<4x768xbf16>, vector<8x768xf32> -> vector<8x768xf32>
    %35 = arith.addf %31, %34 : vector<8x768xf32>
    %c0_28 = arith.constant 0 : index
    %c0_29 = arith.constant 0 : index
    %36 = vector.load %arg4[%c0_28, %c0_29] : memref<8x3xf32, #tpu.memory_space<vmem>>, vector<8x3xf32>
    %37 = vector.extract_strided_slice %36 {offsets = [0, 0], sizes = [8, 1], strides = [1, 1]} : vector<8x3xf32> to vector<8x1xf32>
    %38 = vector.broadcast %37 : vector<8x1xf32> to vector<8x768xf32>
    %39 = arith.addf %35, %38 : vector<8x768xf32>
    %40 = vector.broadcast %0 : vector<1x768xf32> to vector<8x768xf32>
    %41 = arith.mulf %39, %40 : vector<8x768xf32>
    %cst_30 = arith.constant dense<0.000000e+00> : vector<8xf32>
    %42 = vector.multi_reduction <add>, %41, %cst_30 [1] : vector<8x768xf32> to vector<8xf32>
    %43 = vector.shape_cast %42 : vector<8xf32> to vector<8x1xf32>
    %cst_31 = arith.constant 0.001953125 : f32
    %44 = vector.broadcast %cst_31 : f32 to vector<8x1xf32>
    %45 = arith.mulf %43, %44 : vector<8x1xf32>
    %46 = vector.broadcast %45 : vector<8x1xf32> to vector<8x768xf32>
    %47 = arith.subf %39, %46 : vector<8x768xf32>
    %48 = arith.mulf %47, %47 : vector<8x768xf32>
    %49 = vector.broadcast %0 : vector<1x768xf32> to vector<8x768xf32>
    %50 = arith.mulf %48, %49 : vector<8x768xf32>
    %cst_32 = arith.constant dense<0.000000e+00> : vector<8xf32>
    %51 = vector.multi_reduction <add>, %50, %cst_32 [1] : vector<8x768xf32> to vector<8xf32>
    %52 = vector.shape_cast %51 : vector<8xf32> to vector<8x1xf32>
    %cst_33 = arith.constant 0.001953125 : f32
    %53 = vector.broadcast %cst_33 : f32 to vector<8x1xf32>
    %54 = arith.mulf %52, %53 : vector<8x1xf32>
    %55 = vector.extract_strided_slice %36 {offsets = [0, 1], sizes = [8, 1], strides = [1, 1]} : vector<8x3xf32> to vector<8x1xf32>
    %cst_34 = arith.constant 9.99999974E-6 : f32
    %56 = vector.broadcast %cst_34 : f32 to vector<8x1xf32>
    %57 = arith.addf %54, %56 : vector<8x1xf32>
    %58 = math.rsqrt %57 : vector<8x1xf32>
    %59 = vector.broadcast %58 : vector<8x1xf32> to vector<8x768xf32>
    %60 = arith.mulf %47, %59 : vector<8x768xf32>
    %61 = vector.broadcast %55 : vector<8x1xf32> to vector<8x768xf32>
    %62 = arith.mulf %61, %60 : vector<8x768xf32>
    %63 = vector.extract_strided_slice %36 {offsets = [0, 2], sizes = [8, 1], strides = [1, 1]} : vector<8x3xf32> to vector<8x1xf32>
    %64 = vector.broadcast %63 : vector<8x1xf32> to vector<8x768xf32>
    %65 = arith.addf %62, %64 : vector<8x768xf32>
    %cst_35 = arith.constant 0.000000e+00 : f32
    %66 = vector.broadcast %cst_35 : f32 to vector<8x768xf32>
    %67 = arith.cmpf ogt, %65, %66 : vector<8x768xf32>
    %cst_36 = arith.constant 0.00999999977 : f32
    %68 = vector.broadcast %cst_36 : f32 to vector<8x768xf32>
    %69 = arith.mulf %68, %65 : vector<8x768xf32>
    %70 = arith.select %67, %65, %69 : vector<8x768xi1>, vector<8x768xf32>
    %71 = vector.broadcast %0 : vector<1x768xf32> to vector<8x768xf32>
    %72 = arith.mulf %70, %71 : vector<8x768xf32>
    %cst_37 = arith.constant 0.000000e+00 : bf16
    %73 = vector.broadcast %cst_37 : bf16 to vector<8x128xbf16>
    %c0_38 = arith.constant 0 : index
    %c0_39 = arith.constant 0 : index
    %74 = vector.load %arg8[%c0_38, %c0_39] : memref<8x1024xbf16, #tpu.memory_space<vmem>>, vector<8x128xbf16>
    tpu.vector_store %arg8[%c0_38, %c0_39], %73 {strides = array<i32>} : memref<8x1024xbf16, #tpu.memory_space<vmem>>, vector<8x128xbf16>,
    %cst_40 = arith.constant 0.000000e+00 : bf16
    %75 = vector.broadcast %cst_40 : bf16 to vector<8x128xbf16>
    %c0_41 = arith.constant 0 : index
    %c896 = arith.constant 896 : index
    %76 = vector.load %arg8[%c0_41, %c896] : memref<8x1024xbf16, #tpu.memory_space<vmem>>, vector<8x128xbf16>
    tpu.vector_store %arg8[%c0_41, %c896], %75 {strides = array<i32>} : memref<8x1024xbf16, #tpu.memory_space<vmem>>, vector<8x128xbf16>,
    %77 = arith.truncf %72 : vector<8x768xf32> to vector<8x768xbf16>
    %c0_42 = arith.constant 0 : index
    %c128_43 = arith.constant 128 : index
    %78 = vector.load %arg8[%c0_42, %c128_43] : memref<8x1024xbf16, #tpu.memory_space<vmem>>, vector<8x768xbf16>
    tpu.vector_store %arg8[%c0_42, %c128_43], %77 {strides = array<i32>} : memref<8x1024xbf16, #tpu.memory_space<vmem>>, vector<8x768xbf16>,
    %c0_44 = arith.constant 0 : index
    %c109_45 = arith.constant 109 : index
    %79 = vector.load %arg8[%c0_44, %c109_45] : memref<8x1024xbf16, #tpu.memory_space<vmem>>, vector<8x768xbf16>
    %c0_46 = arith.constant 0 : index
    %c0_47 = arith.constant 0 : index
    %80 = vector.load %arg3[%c0_46, %c0_47] : memref<8x72xbf16, #tpu.memory_space<vmem>>, vector<8x8xbf16>
    %cst_48 = arith.constant dense<0.000000e+00> : vector<8x768xf32>
    %81 = tpu.matmul %80, %79, %cst_48 {dimension_numbers = #tpu.dot_dimension_numbers<[1], [0], [0], [1], [0, 0, 1, 1], [], []>} : vector<8x8xbf16>, vector<8x768xbf16>, vector<8x768xf32> -> vector<8x768xf32>
    %c0_49 = arith.constant 0 : index
    %c110_50 = arith.constant 110 : index
    %82 = vector.load %arg8[%c0_49, %c110_50] : memref<8x1024xbf16, #tpu.memory_space<vmem>>, vector<8x768xbf16>
    %c0_51 = arith.constant 0 : index
    %c8_52 = arith.constant 8 : index
    %83 = vector.load %arg3[%c0_51, %c8_52] : memref<8x72xbf16, #tpu.memory_space<vmem>>, vector<8x8xbf16>
    %cst_53 = arith.constant dense<0.000000e+00> : vector<8x768xf32>
    %84 = tpu.matmul %83, %82, %cst_53 {dimension_numbers = #tpu.dot_dimension_numbers<[1], [0], [0], [1], [0, 0, 1, 1], [], []>} : vector<8x8xbf16>, vector<8x768xbf16>, vector<8x768xf32> -> vector<8x768xf32>
    %85 = arith.addf %81, %84 : vector<8x768xf32>
    %c0_54 = arith.constant 0 : index
    %c111_55 = arith.constant 111 : index
    %86 = vector.load %arg8[%c0_54, %c111_55] : memref<8x1024xbf16, #tpu.memory_space<vmem>>, vector<8x768xbf16>
    %c0_56 = arith.constant 0 : index
    %c16_57 = arith.constant 16 : index
    %87 = vector.load %arg3[%c0_56, %c16_57] : memref<8x72xbf16, #tpu.memory_space<vmem>>, vector<8x8xbf16>
    %cst_58 = arith.constant dense<0.000000e+00> : vector<8x768xf32>
    %88 = tpu.matmul %87, %86, %cst_58 {dimension_numbers = #tpu.dot_dimension_numbers<[1], [0], [0], [1], [0, 0, 1, 1], [], []>} : vector<8x8xbf16>, vector<8x768xbf16>, vector<8x768xf32> -> vector<8x768xf32>
    %89 = arith.addf %85, %88 : vector<8x768xf32>
    %c0_59 = arith.constant 0 : index
    %c127_60 = arith.constant 127 : index
    %90 = vector.load %arg8[%c0_59, %c127_60] : memref<8x1024xbf16, #tpu.memory_space<vmem>>, vector<8x768xbf16>
    %c0_61 = arith.constant 0 : index
    %c24_62 = arith.constant 24 : index
    %91 = vector.load %arg3[%c0_61, %c24_62] : memref<8x72xbf16, #tpu.memory_space<vmem>>, vector<8x8xbf16>
    %cst_63 = arith.constant dense<0.000000e+00> : vector<8x768xf32>
    %92 = tpu.matmul %91, %90, %cst_63 {dimension_numbers = #tpu.dot_dimension_numbers<[1], [0], [0], [1], [0, 0, 1, 1], [], []>} : vector<8x8xbf16>, vector<8x768xbf16>, vector<8x768xf32> -> vector<8x768xf32>
    %93 = arith.addf %89, %92 : vector<8x768xf32>
    %c0_64 = arith.constant 0 : index
    %c128_65 = arith.constant 128 : index
    %94 = vector.load %arg8[%c0_64, %c128_65] : memref<8x1024xbf16, #tpu.memory_space<vmem>>, vector<8x768xbf16>
    %c0_66 = arith.constant 0 : index
    %c32_67 = arith.constant 32 : index
    %95 = vector.load %arg3[%c0_66, %c32_67] : memref<8x72xbf16, #tpu.memory_space<vmem>>, vector<8x8xbf16>
    %cst_68 = arith.constant dense<0.000000e+00> : vector<8x768xf32>
    %96 = tpu.matmul %95, %94, %cst_68 {dimension_numbers = #tpu.dot_dimension_numbers<[1], [0], [0], [1], [0, 0, 1, 1], [], []>} : vector<8x8xbf16>, vector<8x768xbf16>, vector<8x768xf32> -> vector<8x768xf32>
    %97 = arith.addf %93, %96 : vector<8x768xf32>
    %c0_69 = arith.constant 0 : index
    %c129_70 = arith.constant 129 : index
    %98 = vector.load %arg8[%c0_69, %c129_70] : memref<8x1024xbf16, #tpu.memory_space<vmem>>, vector<8x768xbf16>
    %c0_71 = arith.constant 0 : index
    %c40 = arith.constant 40 : index
    %99 = vector.load %arg3[%c0_71, %c40] : memref<8x72xbf16, #tpu.memory_space<vmem>>, vector<8x8xbf16>
    %cst_72 = arith.constant dense<0.000000e+00> : vector<8x768xf32>
    %100 = tpu.matmul %99, %98, %cst_72 {dimension_numbers = #tpu.dot_dimension_numbers<[1], [0], [0], [1], [0, 0, 1, 1], [], []>} : vector<8x8xbf16>, vector<8x768xbf16>, vector<8x768xf32> -> vector<8x768xf32>
    %101 = arith.addf %97, %100 : vector<8x768xf32>
    %c0_73 = arith.constant 0 : index
    %c145_74 = arith.constant 145 : index
    %102 = vector.load %arg8[%c0_73, %c145_74] : memref<8x1024xbf16, #tpu.memory_space<vmem>>, vector<8x768xbf16>
    %c0_75 = arith.constant 0 : index
    %c48 = arith.constant 48 : index
    %103 = vector.load %arg3[%c0_75, %c48] : memref<8x72xbf16, #tpu.memory_space<vmem>>, vector<8x8xbf16>
    %cst_76 = arith.constant dense<0.000000e+00> : vector<8x768xf32>
    %104 = tpu.matmul %103, %102, %cst_76 {dimension_numbers = #tpu.dot_dimension_numbers<[1], [0], [0], [1], [0, 0, 1, 1], [], []>} : vector<8x8xbf16>, vector<8x768xbf16>, vector<8x768xf32> -> vector<8x768xf32>
    %105 = arith.addf %101, %104 : vector<8x768xf32>
    %c0_77 = arith.constant 0 : index
    %c146_78 = arith.constant 146 : index
    %106 = vector.load %arg8[%c0_77, %c146_78] : memref<8x1024xbf16, #tpu.memory_space<vmem>>, vector<8x768xbf16>
    %c0_79 = arith.constant 0 : index
    %c56 = arith.constant 56 : index
    %107 = vector.load %arg3[%c0_79, %c56] : memref<8x72xbf16, #tpu.memory_space<vmem>>, vector<8x8xbf16>
    %cst_80 = arith.constant dense<0.000000e+00> : vector<8x768xf32>
    %108 = tpu.matmul %107, %106, %cst_80 {dimension_numbers = #tpu.dot_dimension_numbers<[1], [0], [0], [1], [0, 0, 1, 1], [], []>} : vector<8x8xbf16>, vector<8x768xbf16>, vector<8x768xf32> -> vector<8x768xf32>
    %109 = arith.addf %105, %108 : vector<8x768xf32>
    %c0_81 = arith.constant 0 : index
    %c147_82 = arith.constant 147 : index
    %110 = vector.load %arg8[%c0_81, %c147_82] : memref<8x1024xbf16, #tpu.memory_space<vmem>>, vector<8x768xbf16>
    %c0_83 = arith.constant 0 : index
    %c64 = arith.constant 64 : index
    %111 = vector.load %arg3[%c0_83, %c64] : memref<8x72xbf16, #tpu.memory_space<vmem>>, vector<8x8xbf16>
    %cst_84 = arith.constant dense<0.000000e+00> : vector<8x768xf32>
    %112 = tpu.matmul %111, %110, %cst_84 {dimension_numbers = #tpu.dot_dimension_numbers<[1], [0], [0], [1], [0, 0, 1, 1], [], []>} : vector<8x8xbf16>, vector<8x768xbf16>, vector<8x768xf32> -> vector<8x768xf32>
    %113 = arith.addf %109, %112 : vector<8x768xf32>
    %c0_85 = arith.constant 0 : index
    %c0_86 = arith.constant 0 : index
    %114 = vector.load %arg5[%c0_85, %c0_86] : memref<8x3xf32, #tpu.memory_space<vmem>>, vector<8x3xf32>
    %115 = vector.extract_strided_slice %114 {offsets = [0, 0], sizes = [8, 1], strides = [1, 1]} : vector<8x3xf32> to vector<8x1xf32>
    %116 = vector.broadcast %115 : vector<8x1xf32> to vector<8x768xf32>
    %117 = arith.addf %113, %116 : vector<8x768xf32>
    %118 = vector.broadcast %0 : vector<1x768xf32> to vector<8x768xf32>
    %119 = arith.mulf %117, %118 : vector<8x768xf32>
    %cst_87 = arith.constant dense<0.000000e+00> : vector<8xf32>
    %120 = vector.multi_reduction <add>, %119, %cst_87 [1] : vector<8x768xf32> to vector<8xf32>
    %121 = vector.shape_cast %120 : vector<8xf32> to vector<8x1xf32>
    %cst_88 = arith.constant 0.001953125 : f32
    %122 = vector.broadcast %cst_88 : f32 to vector<8x1xf32>
    %123 = arith.mulf %121, %122 : vector<8x1xf32>
    %124 = vector.broadcast %123 : vector<8x1xf32> to vector<8x768xf32>
    %125 = arith.subf %117, %124 : vector<8x768xf32>
    %126 = arith.mulf %125, %125 : vector<8x768xf32>
    %127 = vector.broadcast %0 : vector<1x768xf32> to vector<8x768xf32>
    %128 = arith.mulf %126, %127 : vector<8x768xf32>
    %cst_89 = arith.constant dense<0.000000e+00> : vector<8xf32>
    %129 = vector.multi_reduction <add>, %128, %cst_89 [1] : vector<8x768xf32> to vector<8xf32>
    %130 = vector.shape_cast %129 : vector<8xf32> to vector<8x1xf32>
    %cst_90 = arith.constant 0.001953125 : f32
    %131 = vector.broadcast %cst_90 : f32 to vector<8x1xf32>
    %132 = arith.mulf %130, %131 : vector<8x1xf32>
    %133 = vector.extract_strided_slice %114 {offsets = [0, 1], sizes = [8, 1], strides = [1, 1]} : vector<8x3xf32> to vector<8x1xf32>
    %cst_91 = arith.constant 9.99999974E-6 : f32
    %134 = vector.broadcast %cst_91 : f32 to vector<8x1xf32>
    %135 = arith.addf %132, %134 : vector<8x1xf32>
    %136 = math.rsqrt %135 : vector<8x1xf32>
    %137 = vector.broadcast %136 : vector<8x1xf32> to vector<8x768xf32>
    %138 = arith.mulf %125, %137 : vector<8x768xf32>
    %139 = vector.broadcast %133 : vector<8x1xf32> to vector<8x768xf32>
    %140 = arith.mulf %139, %138 : vector<8x768xf32>
    %141 = vector.extract_strided_slice %114 {offsets = [0, 2], sizes = [8, 1], strides = [1, 1]} : vector<8x3xf32> to vector<8x1xf32>
    %142 = vector.broadcast %141 : vector<8x1xf32> to vector<8x768xf32>
    %143 = arith.addf %140, %142 : vector<8x768xf32>
    %cst_92 = arith.constant 0.000000e+00 : f32
    %144 = vector.broadcast %cst_92 : f32 to vector<8x768xf32>
    %145 = arith.cmpf ogt, %143, %144 : vector<8x768xf32>
    %cst_93 = arith.constant 0.00999999977 : f32
    %146 = vector.broadcast %cst_93 : f32 to vector<8x768xf32>
    %147 = arith.mulf %146, %143 : vector<8x768xf32>
    %148 = arith.select %145, %143, %147 : vector<8x768xi1>, vector<8x768xf32>
    %149 = vector.broadcast %0 : vector<1x768xf32> to vector<8x768xf32>
    %150 = arith.mulf %148, %149 : vector<8x768xf32>
    %c0_94 = arith.constant 0 : index
    %c0_95 = arith.constant 0 : index
    %151 = vector.load %arg7[%c0_94, %c0_95] : memref<8x768xf32, #tpu.memory_space<vmem>>, vector<8x768xf32>
    tpu.vector_store %arg7[%c0_94, %c0_95], %150 {strides = array<i32>} : memref<8x768xf32, #tpu.memory_space<vmem>>, vector<8x768xf32>,
    return
  }
  func.func @transform_0(%arg0: i32) -> (i32, i32) {
    %c0_i32 = arith.constant 0 : i32
    %c0_i32_0 = arith.constant 0 : i32
    %c0_i32_1 = arith.constant 0 : i32
    return %c0_i32, %c0_i32_0 : i32, i32
  }
  func.func @transform_1(%arg0: i32) -> (i32, i32) {
    %c0_i32 = arith.constant 0 : i32
    %c0_i32_0 = arith.constant 0 : i32
    %c0_i32_1 = arith.constant 0 : i32
    return %c0_i32, %c0_i32_0 : i32, i32
  }
  func.func @transform_2(%arg0: i32) -> (i32, i32) {
    %c0_i32 = arith.constant 0 : i32
    %c0_i32_0 = arith.constant 0 : i32
    %c0_i32_1 = arith.constant 0 : i32
    return %c0_i32, %c0_i32_0 : i32, i32
  }
  func.func @transform_3(%arg0: i32) -> (i32, i32) {
    %c0_i32 = arith.constant 0 : i32
    %c0_i32_0 = arith.constant 0 : i32
    %c0_i32_1 = arith.constant 0 : i32
    return %c0_i32, %c0_i32_0 : i32, i32
  }
  func.func @transform_4(%arg0: i32) -> (i32, i32) {
    %c0_i32 = arith.constant 0 : i32
    %c0_i32_0 = arith.constant 0 : i32
    %c0_i32_1 = arith.constant 0 : i32
    return %c0_i32, %c0_i32_0 : i32, i32
  }
  func.func @transform_5(%arg0: i32) -> (i32, i32) {
    %c0_i32 = arith.constant 0 : i32
    %c0_i32_0 = arith.constant 0 : i32
    %c0_i32_1 = arith.constant 0 : i32
    return %c0_i32, %c0_i32_0 : i32, i32
  }
  func.func @transform_6(%arg0: i32) -> (i32, i32) {
    %c0_i32 = arith.constant 0 : i32
    %c0_i32_0 = arith.constant 0 : i32
    %c0_i32_1 = arith.constant 0 : i32
    return %c0_i32, %c0_i32_0 : i32, i32
  }
}

</mosaic_0001>

<llo_original>
// kernel: tile.6
$region0: #{tile.6}
  #allocation0 [shape = 's32[1]{0}', space=sflag, size = 0x4, scoped, tag = 'scoped memory for tile.6']
  %s0 = inlined_call_operand.vmem [shape: f32[324], index: 0, kind: input, shape index: {}]
  %s1 = inlined_call_operand.vmem [shape: f32[2,324], index: 1, kind: output, shape index: {}]
  // Predicated region
  $region2: #{tile.6} parent=0 // pred_check
    _
  $region3: #{tile.6} parent=0 // pred_check_branch
    %3 = sbr.rel (0) target = $region5
  $region4: #{tile.6} parent=0 // pred_region
    _
  $region5: #{tile.6} parent=0 // pred_fallthru
    _
  %v4 = vld [vmem:[%s0] ss:$0 sm:$0xff]
  %5 = vst [vmem:[%s1] sm:$0x3] %v4
  %s6 = scalar_lea.vmem %s0, 1
  %v7 = vld [vmem:[%s6] ss:$0 sm:$0xff]
  %s8 = scalar_lea.vmem %s1, 2
  %9 = vst [vmem:[%s8] sm:$0x3] %v7
  %s10 = scalar_lea.vmem %s0, 2
  %v11 = vld [vmem:[%s10] ss:$0 sm:$0xff]
  %s12 = scalar_lea.vmem %s1, 4
  %13 = vst [vmem:[%s12] sm:$0x3] %v11

// kernel: tile.7
$region0: #{tile.7}
  %s0 = inlined_call_operand.vmem [shape: f32[2,324], index: 0, kind: input, shape index: {}]
  %s1 = inlined_call_operand.vmem [shape: f32[648], index: 1, kind: output, shape index: {}]
  $region1: #{tile.7} parent=0
    #allocation0 [shape = 'u8[12288]{0}', space=vmem, size = 0x3000, scoped, tag = 'scoped mem for input reshape']
    %s3 = sshllo.u32 0, 2
    %s4 = smul.addr 2, 2
    %s5 = scalar_lea.vmem %s0, %s4
    %v6 = vld [vmem:[%s5] sm:%s3]
    %s7 = scalar_lea.vmem [#allocation0], 16
    %8 = vst [vmem:[%s7] sm:%s3] %v6
    %s9 = scalar_lea.vmem %s0, 2
    %v10 = vld [vmem:[%s9] sm:%s3]
    %s11 = scalar_lea.vmem [#allocation0], 8
    %12 = vst [vmem:[%s11] sm:%s3] %v10
    %v13 = vld [vmem:[%s0] sm:%s3]
    %14 = vst [vmem:[#allocation0] sm:%s3] %v13
    %s15 = scalar_lea.vmem [#allocation0], 16
    %v16 = vld [vmem:[%s15] sm:$0x1]
    %vm17 = vcmask 556032
    %s18 = scalar_lea.vmem %s1, 2
    %19 = vst.msk [vmem:[%s18] sm:$0x1] %vm17, %v16
    %s20 = smov 3
    %v21 = vld [vmem:[#allocation0] ss:$8 sm:%s20]
    %22 = vst [vmem:[%s1] sm:$0x3] %v21
    %s23 = scalar_lea.vmem [#allocation0], 17
    %v24 = vld [vmem:[%s23] sm:$0x1]
    %s25 = scalar_lea.vmem [#allocation0], 1
    %v26 = vld [vmem:[%s25] ss:$8 sm:$0x7]
    %vm27 = vcmask 490496
    %v28 = vsel %vm27, %v26, %v24
    %29 = vrot.lane.b32.xlu0 %v28, 68
    %v30 = vpop.permute.xlu0 %29
    %vm31 = vcmask 64512
    %s32 = scalar_lea.vmem %s1, 5
    %33 = vst.msk [vmem:[%s32] sm:$0x1] %vm31, %v30
    %vm34 = vcmask 1048096
    %s35 = scalar_lea.vmem %s1, 2
    %36 = vst.msk [vmem:[%s35] sm:$0x7] %vm34, %v30
    %s37 = scalar_lea.vmem [#allocation0], 1
    %s38 = smov 3
    %v39 = vld [vmem:[%s37] ss:$8 sm:%s38]
    %40 = vrot.lane.b32.xlu0 %v39, 68
    %v41 = vpop.permute.xlu0 %40
    %vm42 = vcmask 556032
    %s43 = scalar_lea.vmem %s1, 3
    %44 = vst.msk [vmem:[%s43] sm:$0x3] %vm42, %v41

// kernel: tile.5
$region0: #{tile.5}
  %s0 = inlined_call_operand.vmem [shape: f32[18,18], index: 0, kind: input, shape index: {}]
  %s1 = inlined_call_operand.vmem [shape: f32[324], index: 1, kind: output, shape index: {}]
  $region1: #{tile.5} parent=0
    #allocation0 [shape = 'u8[4096]{0}', space=vmem, size = 0x1000, scoped, tag = 'scoped mem for output reshape']
    %v2 = vld [vmem:[%s0] sm:$0x1]
    %vm3 = vcmask 146432
    %4 = vst.msk [vmem:[#allocation0] sm:$0x1] %vm3, %v2
    %s5 = scalar_lea.vmem %s0, 7
    %v6 = vld [vmem:[%s5] sm:$0x1]
    %s7 = scalar_lea.vmem %s0, 7
    %v8 = vld [vmem:[%s7] sm:$0x1]
    %vm9 = vcmask 15360
    %v10 = vsel %vm9, %v8, %v6
    %11 = vrot.lane.b32.xlu0 %v10, 126
    %v12 = vpop.permute.xlu0 %11
    %vm13 = vcmask 130048
    %s14 = scalar_lea.vmem [#allocation0], 1
    %15 = vst.msk [vmem:[%s14] sm:$0x1] %vm13, %v12
    %vm16 = vcmask 1048560
    %17 = vst.msk [vmem:[#allocation0] sm:$0x1] %vm16, %v12
    %s18 = scalar_lea.vmem %s0, 14
    %v19 = vld [vmem:[%s18] sm:$0x1]
    %s20 = scalar_lea.vmem %s0, 14
    %v21 = vld [vmem:[%s20] sm:$0x1]
    %vm22 = vcmask 31744
    %v23 = vsel %vm22, %v21, %v19
    %24 = vrot.lane.b32.xlu0 %v23, 124
    %v25 = vpop.permute.xlu0 %24
    %vm26 = vcmask 113664
    %s27 = scalar_lea.vmem [#allocation0], 2
    %28 = vst.msk [vmem:[%s27] sm:$0x1] %vm26, %v25
    %vm29 = vcmask 1048544
    %s30 = scalar_lea.vmem [#allocation0], 1
    %31 = vst.msk [vmem:[%s30] sm:$0x1] %vm29, %v25
    %s32 = scalar_lea.vmem %s0, 6
    %v33 = vld [vmem:[%s32] sm:$0x1]
    %34 = vrot.lane.b32.xlu0 %v33, 108
    %v35 = vpop.permute.xlu0 %34
    %vm36 = vcmask 1032032
    %37 = vst.msk [vmem:[#allocation0] sm:$0x1] %vm36, %v35
    %s38 = scalar_lea.vmem %s0, 13
    %v39 = vld [vmem:[%s38] sm:$0x1]
    %40 = vrot.lane.b32.xlu0 %v39, 106
    %v41 = vpop.permute.xlu0 %40
    %vm42 = vcmask 1015632
    %s43 = scalar_lea.vmem [#allocation0], 1
    %44 = vst.msk [vmem:[%s43] sm:$0x1] %vm42, %v41
    %s45 = scalar_lea.vmem %s0, 5
    %v46 = vld [vmem:[%s45] sm:$0x1]
    %47 = vrot.lane.b32.xlu0 %v46, 90
    %v48 = vpop.permute.xlu0 %47
    %vm49 = vcmask 884432
    %50 = vst.msk [vmem:[#allocation0] sm:$0x1] %vm49, %v48
    %s51 = scalar_lea.vmem %s0, 12
    %v52 = vld [vmem:[%s51] sm:$0x1]
    %53 = vrot.lane.b32.xlu0 %v52, 88
    %v54 = vpop.permute.xlu0 %53
    %vm55 = vcmask 868032
    %s56 = scalar_lea.vmem [#allocation0], 1
    %57 = vst.msk [vmem:[%s56] sm:$0x1] %vm55, %v54
    %s58 = scalar_lea.vmem %s0, 4
    %v59 = vld [vmem:[%s58] sm:$0x1]
    %60 = vrot.lane.b32.xlu0 %v59, 72
    %v61 = vpop.permute.xlu0 %60
    %vm62 = vcmask 736832
    %63 = vst.msk [vmem:[#allocation0] sm:$0x1] %vm62, %v61
    %s64 = scalar_lea.vmem %s0, 11
    %v65 = vld [vmem:[%s64] sm:$0x1]
    %66 = vrot.lane.b32.xlu0 %v65, 70
    %v67 = vpop.permute.xlu0 %66
    %vm68 = vcmask 720432
    %s69 = scalar_lea.vmem [#allocation0], 1
    %70 = vst.msk [vmem:[%s69] sm:$0x1] %vm68, %v67
    %s71 = scalar_lea.vmem %s0, 3
    %v72 = vld [vmem:[%s71] sm:$0x1]
    %73 = vrot.lane.b32.xlu0 %v72, 54
    %v74 = vpop.permute.xlu0 %73
    %vm75 = vcmask 589232
    %76 = vst.msk [vmem:[#allocation0] sm:$0x1] %vm75, %v74
    %s77 = scalar_lea.vmem %s0, 10
    %v78 = vld [vmem:[%s77] sm:$0x1]
    %79 = vrot.lane.b32.xlu0 %v78, 52
    %v80 = vpop.permute.xlu0 %79
    %vm81 = vcmask 572832
    %s82 = scalar_lea.vmem [#allocation0], 1
    %83 = vst.msk [vmem:[%s82] sm:$0x1] %vm81, %v80
    %s84 = scalar_lea.vmem %s0, 17
    %v85 = vld [vmem:[%s84] sm:$0x1]
    %86 = vrot.lane.b32.xlu0 %v85, 50
    %v87 = vpop.permute.xlu0 %86
    %vm88 = vcmask 556432
    %s89 = scalar_lea.vmem [#allocation0], 2
    %90 = vst.msk [vmem:[%s89] sm:$0x1] %vm88, %v87
    %s91 = scalar_lea.vmem %s0, 2
    %v92 = vld [vmem:[%s91] sm:$0x1]
    %93 = vrot.lane.b32.xlu0 %v92, 36
    %v94 = vpop.permute.xlu0 %93
    %vm95 = vcmask 441632
    %96 = vst.msk [vmem:[#allocation0] sm:$0x1] %vm95, %v94
    %s97 = scalar_lea.vmem %s0, 9
    %v98 = vld [vmem:[%s97] sm:$0x1]
    %99 = vrot.lane.b32.xlu0 %v98, 34
    %v100 = vpop.permute.xlu0 %99
    %vm101 = vcmask 425232
    %s102 = scalar_lea.vmem [#allocation0], 1
    %103 = vst.msk [vmem:[%s102] sm:$0x1] %vm101, %v100
    %s104 = scalar_lea.vmem %s0, 16
    %v105 = vld [vmem:[%s104] sm:$0x1]
    %106 = vrot.lane.b32.xlu0 %v105, 32
    %v107 = vpop.permute.xlu0 %106
    %vm108 = vcmask 408832
    %s109 = scalar_lea.vmem [#allocation0], 2
    %110 = vst.msk [vmem:[%s109] sm:$0x1] %vm108, %v107
    %s111 = scalar_lea.vmem %s0, 1
    %v112 = vld [vmem:[%s111] sm:$0x1]
    %113 = vrot.lane.b32.xlu0 %v112, 18
    %v114 = vpop.permute.xlu0 %113
    %vm115 = vcmask 294032
    %116 = vst.msk [vmem:[#allocation0] sm:$0x1] %vm115, %v114
    %s117 = scalar_lea.vmem %s0, 8
    %v118 = vld [vmem:[%s117] sm:$0x1]
    %119 = vrot.lane.b32.xlu0 %v118, 16
    %v120 = vpop.permute.xlu0 %119
    %vm121 = vcmask 277632
    %s122 = scalar_lea.vmem [#allocation0], 1
    %123 = vst.msk [vmem:[%s122] sm:$0x1] %vm121, %v120
    %s124 = scalar_lea.vmem %s0, 15
    %v125 = vld [vmem:[%s124] sm:$0x1]
    %126 = vrot.lane.b32.xlu0 %v125, 14
    %v127 = vpop.permute.xlu0 %126
    %vm128 = vcmask 261232
    %s129 = scalar_lea.vmem [#allocation0], 2
    %130 = vst.msk [vmem:[%s129] sm:$0x1] %vm128, %v127
    %s132 = sshllo.u32 0, 4
    %v134 = vld [vmem:[#allocation0] sm:%s132]
    %s135 = sshllo.u32 0, 4
    %136 = vst [vmem:[%s1] sm:%s135] %v134

// kernel: conv_batchnorm_act_x2.1
$region0: #{conv_batchnorm_act_x2.1}
  #allocation0 [shape = 'u32[]', space=smem, size = 0x4, offset = 0x4, fixed_abs, tag = 'smem constant byte address 0x4 - core index']
  #allocation1 [shape = 'u32[144,128]{1,0:T(1,128)}', space=vmem, size = 0x12000, scoped, tag = 'internal scratch']
  #allocation2 [shape = 'bf16[8,1024]{1,0:T(8,128)(2,1)}', space=vmem, size = 0x4000, scoped, tag = 'scratch operand']
  %s0 = inlined_call_operand.vmem [shape: bf16[4,1024], index: 0, kind: input, shape index: {}]
  %s1 = inlined_call_operand.vmem [shape: bf16[8,36], index: 1, kind: input, shape index: {}]
  %s2 = inlined_call_operand.vmem [shape: bf16[8,72], index: 2, kind: input, shape index: {}]
  %s3 = inlined_call_operand.vmem [shape: f32[8,3], index: 3, kind: input, shape index: {}]
  %s4 = inlined_call_operand.vmem [shape: f32[8,3], index: 4, kind: input, shape index: {}]
  %s5 = inlined_call_operand.vmem [shape: f32[1,768], index: 5, kind: input, shape index: {}]
  %s6 = inlined_call_operand.vmem [shape: f32[8,768], index: 6, kind: output, shape index: {}]
  %s7 = sld [smem:[#allocation0]]
  $region34: #{conv_batchnorm_act_x2.1} parent=0
    _
  %s9 = ssub.s32 1, %s7
  %s10 = scalar_select 0, %s9, %s7
  // Predicated region
  $region2: #{conv_batchnorm_act_x2.1} parent=0 // pred_check
    _
  $region3: #{conv_batchnorm_act_x2.1} parent=0 // pred_check_branch
    %12 = sbr.rel (0) target = $region5
  $region4: #{conv_batchnorm_act_x2.1} parent=0 // pred_region
    _
  $region5: #{conv_batchnorm_act_x2.1} parent=0 // pred_fallthru
    _
  // Predicated region
  $region6: #{conv_batchnorm_act_x2.1} parent=0 // pred_check
    _
  $region7: #{conv_batchnorm_act_x2.1} parent=0 // pred_check_branch
    %14 = sbr.rel (0) target = $region9
  $region8: #{conv_batchnorm_act_x2.1} parent=0 // pred_region
    _
  $region9: #{conv_batchnorm_act_x2.1} parent=0 // pred_fallthru
    _
  // Predicated region
  $region10: #{conv_batchnorm_act_x2.1} parent=0 // pred_check
    _
  $region11: #{conv_batchnorm_act_x2.1} parent=0 // pred_check_branch
    %16 = sbr.rel (0) target = $region13
  $region12: #{conv_batchnorm_act_x2.1} parent=0 // pred_region
    _
  $region13: #{conv_batchnorm_act_x2.1} parent=0 // pred_fallthru
    _
  // Predicated region
  $region14: #{conv_batchnorm_act_x2.1} parent=0 // pred_check
    _
  $region15: #{conv_batchnorm_act_x2.1} parent=0 // pred_check_branch
    %18 = sbr.rel (0) target = $region17
  $region16: #{conv_batchnorm_act_x2.1} parent=0 // pred_region
    _
  $region17: #{conv_batchnorm_act_x2.1} parent=0 // pred_fallthru
    _
  // Predicated region
  $region18: #{conv_batchnorm_act_x2.1} parent=0 // pred_check
    _
  $region19: #{conv_batchnorm_act_x2.1} parent=0 // pred_check_branch
    %20 = sbr.rel (0) target = $region21
  $region20: #{conv_batchnorm_act_x2.1} parent=0 // pred_region
    _
  $region21: #{conv_batchnorm_act_x2.1} parent=0 // pred_fallthru
    _
  // Predicated region
  $region22: #{conv_batchnorm_act_x2.1} parent=0 // pred_check
    _
  $region23: #{conv_batchnorm_act_x2.1} parent=0 // pred_check_branch
    %22 = sbr.rel (0) target = $region25
  $region24: #{conv_batchnorm_act_x2.1} parent=0 // pred_region
    _
  $region25: #{conv_batchnorm_act_x2.1} parent=0 // pred_fallthru
    _
  %v24 = vld [vmem:[%s5] sm:$0x3f]
  %v25 = vld [vmem:[%s0] sm:$0xff]
  %v26 = vld [vmem:[%s0 + $0x8] sm:$0x3f]
  %v27 = vld [vmem:[%s1] sm:$0xf]
  %v29 = vunpack.c.l.b16 %v27
  %v30 = vpack.c.b16 %v29, %v29
  %31 = vrot.lane.b32.xlu0 %v30, 124
  %v32 = vpop.permute.xlu0 %31
  %v35 = vcombine.high %v25, %v25
  %v37 = vunpack.c.l.s4 1983009808
  %v38 = vunpack.c.0.s8 %v37
  %v39 = vlaneseq
  %v40 = vshrl.u32 %v39, 7
  %v41 = vsub.s32 %v38, %v40
  %v42 = vrot.slane %v25, %v41
  %v44 = vunpack.c.l.s4 1983009808
  %v45 = vunpack.c.0.s8 %v44
  %v46 = vlaneseq
  %v47 = vshrl.u32 %v46, 7
  %v48 = vsub.s32 %v45, %v47
  %v49 = vrot.slane %v35, %v48
  %v50 = vcombine.high %v42, %v42
  %v51 = vcombine.high %v49, %v49
  %v52 = vcombine.high %v26, %v26
  %v54 = vunpack.c.l.s4 1983009808
  %v55 = vunpack.c.0.s8 %v54
  %v56 = vlaneseq
  %v57 = vshrl.u32 %v56, 7
  %v58 = vsub.s32 %v55, %v57
  %v59 = vrot.slane %v26, %v58
  %v61 = vunpack.c.l.s4 1983009808
  %v62 = vunpack.c.0.s8 %v61
  %v63 = vlaneseq
  %v64 = vshrl.u32 %v63, 7
  %v65 = vsub.s32 %v62, %v64
  %v66 = vrot.slane %v52, %v65
  %v67 = vcombine.high %v59, %v59
  %68 = vrot.lane.b32.xlu0 %v42, 18
  %v69 = vpop.permute.xlu0 %68
  %70 = vrot.lane.b32.xlu0 %v50, 18
  %v71 = vpop.permute.xlu0 %70
  %72 = vrot.lane.b32.xlu0 %v49, 18
  %v73 = vpop.permute.xlu0 %72
  %74 = vrot.lane.b32.xlu0 %v51, 18
  %v75 = vpop.permute.xlu0 %74
  %76 = vrot.lane.b32.xlu0 %v59, 18
  %v77 = vpop.permute.xlu0 %76
  %78 = vrot.lane.b32.xlu0 %v67, 18
  %v79 = vpop.permute.xlu0 %78
  %80 = vrot.lane.b32.xlu0 %v66, 18
  %v81 = vpop.permute.xlu0 %80
  %vm82 = vcmask 146432
  %v83 = vsel %vm82, %v69, %v71
  %v84 = vsel %vm82, %v71, %v73
  %v85 = vsel %vm82, %v73, %v75
  %v86 = vsel %vm82, %v75, %v77
  %v87 = vsel %vm82, %v77, %v79
  %v88 = vsel %vm82, %v79, %v81
  %vm89 = vcmask 31744
  %v91 = vsel %vm89, %v32, 0
  %vm93 = vcmask 1041408
  %v95 = vsel %vm93, %v83, 0
  %v98 = vsel %vm93, %v84, 0
  %v101 = vsel %vm93, %v85, 0
  %v104 = vsel %vm93, %v86, 0
  %v107 = vsel %vm93, %v87, 0
  %v110 = vsel %vm93, %v88, 0
  %112 = vmatprep.subr.bf16.mxu0 %v98
  %113 = vmatpush1.bf16.msra.mxu0 %v95
  %114 = vmatprep.subr.bf16.mxu0 0
  %115 = vmatpush1.bf16.msra.mxu0 0
  %116 = vmatprep.subr.bf16.mxu0 0
  %117 = vmatpush1.bf16.msra.mxu0 0
  %118 = vmatprep.subr.bf16.mxu0 0
  %119 = vmatpush1.bf16.msra.mxu0 0
  %120 = vmatprep.subr.bf16.mxu0 0
  %121 = vmatpush1.bf16.msra.mxu0 0
  %122 = vmatprep.subr.bf16.mxu0 0
  %123 = vmatpush1.bf16.msra.mxu0 0
  %124 = vmatprep.subr.bf16.mxu0 0
  %125 = vmatpush1.bf16.msra.mxu0 0
  %126 = vmatprep.subr.bf16.mxu0 0
  %127 = vmatpush1.bf16.msra.mxu0 0
  %128 = vmatprep.subr.bf16.mxu0 0
  %129 = vmatpush1.bf16.msra.mxu0 0
  %130 = vmatprep.subr.bf16.mxu0 0
  %131 = vmatpush1.bf16.msra.mxu0 0
  %132 = vmatprep.subr.bf16.mxu0 0
  %133 = vmatpush1.bf16.msra.mxu0 0
  %134 = vmatprep.subr.bf16.mxu0 0
  %135 = vmatpush1.bf16.msra.mxu0 0
  %136 = vmatprep.subr.bf16.mxu0 0
  %137 = vmatpush1.bf16.msra.mxu0 0
  %138 = vmatprep.subr.bf16.mxu0 0
  %139 = vmatpush1.bf16.msra.mxu0 0
  %140 = vmatprep.subr.bf16.mxu0 0
  %141 = vmatpush1.bf16.msra.mxu0 0
  %142 = vmatprep.subr.bf16.mxu0 0
  %143 = vmatpush1.bf16.msra.mxu0 0
  %144 = vmatprep.mubr.bf16.mxu0 0
  %145 = vmatmul.mubr.bf16.gmra.mrb[0].mxu0 %v91
  %v146 = vpop.f32.mrb[0].mxu0
  %v147 = vadd.f32 0.0, %v146
  %v148 = vpop.f32.mrb[0].mxu0
  %v149 = vadd.f32 0.0, %v148
  %v150 = vpop.f32.mrb[0].mxu0
  %v151 = vpop.f32.mrb[0].mxu0
  %152 = vdwg.mxu0
  %153 = vmatprep.subr.bf16.mxu0 %v104
  %154 = vmatpush1.bf16.msra.mxu0 %v101
  %155 = vmatprep.subr.bf16.mxu0 0
  %156 = vmatpush1.bf16.msra.mxu0 0
  %157 = vmatprep.subr.bf16.mxu0 0
  %158 = vmatpush1.bf16.msra.mxu0 0
  %159 = vmatprep.subr.bf16.mxu0 0
  %160 = vmatpush1.bf16.msra.mxu0 0
  %161 = vmatprep.subr.bf16.mxu0 0
  %162 = vmatpush1.bf16.msra.mxu0 0
  %163 = vmatprep.subr.bf16.mxu0 0
  %164 = vmatpush1.bf16.msra.mxu0 0
  %165 = vmatprep.subr.bf16.mxu0 0
  %166 = vmatpush1.bf16.msra.mxu0 0
  %167 = vmatprep.subr.bf16.mxu0 0
  %168 = vmatpush1.bf16.msra.mxu0 0
  %169 = vmatprep.subr.bf16.mxu0 0
  %170 = vmatpush1.bf16.msra.mxu0 0
  %171 = vmatprep.subr.bf16.mxu0 0
  %172 = vmatpush1.bf16.msra.mxu0 0
  %173 = vmatprep.subr.bf16.mxu0 0
  %174 = vmatpush1.bf16.msra.mxu0 0
  %175 = vmatprep.subr.bf16.mxu0 0
  %176 = vmatpush1.bf16.msra.mxu0 0
  %177 = vmatprep.subr.bf16.mxu0 0
  %178 = vmatpush1.bf16.msra.mxu0 0
  %179 = vmatprep.subr.bf16.mxu0 0
  %180 = vmatpush1.bf16.msra.mxu0 0
  %181 = vmatprep.subr.bf16.mxu0 0
  %182 = vmatpush1.bf16.msra.mxu0 0
  %183 = vmatprep.subr.bf16.mxu0 0
  %184 = vmatpush1.bf16.msra.mxu0 0
  %185 = vmatprep.mubr.bf16.mxu0 0
  %186 = vmatmul.mubr.bf16.gmra.mrb[0].mxu0 %v91
  %v187 = vpop.f32.mrb[0].mxu0
  %v188 = vadd.f32 0.0, %v187
  %v189 = vpop.f32.mrb[0].mxu0
  %v190 = vadd.f32 0.0, %v189
  %v191 = vpop.f32.mrb[0].mxu0
  %v192 = vpop.f32.mrb[0].mxu0
  %193 = vdwg.mxu0
  %194 = vmatprep.subr.bf16.mxu0 %v110
  %195 = vmatpush1.bf16.msra.mxu0 %v107
  %196 = vmatprep.subr.bf16.mxu0 0
  %197 = vmatpush1.bf16.msra.mxu0 0
  %198 = vmatprep.subr.bf16.mxu0 0
  %199 = vmatpush1.bf16.msra.mxu0 0
  %200 = vmatprep.subr.bf16.mxu0 0
  %201 = vmatpush1.bf16.msra.mxu0 0
  %202 = vmatprep.subr.bf16.mxu0 0
  %203 = vmatpush1.bf16.msra.mxu0 0
  %204 = vmatprep.subr.bf16.mxu0 0
  %205 = vmatpush1.bf16.msra.mxu0 0
  %206 = vmatprep.subr.bf16.mxu0 0
  %207 = vmatpush1.bf16.msra.mxu0 0
  %208 = vmatprep.subr.bf16.mxu0 0
  %209 = vmatpush1.bf16.msra.mxu0 0
  %210 = vmatprep.subr.bf16.mxu0 0
  %211 = vmatpush1.bf16.msra.mxu0 0
  %212 = vmatprep.subr.bf16.mxu0 0
  %213 = vmatpush1.bf16.msra.mxu0 0
  %214 = vmatprep.subr.bf16.mxu0 0
  %215 = vmatpush1.bf16.msra.mxu0 0
  %216 = vmatprep.subr.bf16.mxu0 0
  %217 = vmatpush1.bf16.msra.mxu0 0
  %218 = vmatprep.subr.bf16.mxu0 0
  %219 = vmatpush1.bf16.msra.mxu0 0
  %220 = vmatprep.subr.bf16.mxu0 0
  %221 = vmatpush1.bf16.msra.mxu0 0
  %222 = vmatprep.subr.bf16.mxu0 0
  %223 = vmatpush1.bf16.msra.mxu0 0
  %224 = vmatprep.subr.bf16.mxu0 0
  %225 = vmatpush1.bf16.msra.mxu0 0
  %226 = vmatprep.mubr.bf16.mxu0 0
  %227 = vmatmul.mubr.bf16.gmra.mrb[0].mxu0 %v91
  %v228 = vpop.f32.mrb[0].mxu0
  %v229 = vadd.f32 0.0, %v228
  %v230 = vpop.f32.mrb[0].mxu0
  %v231 = vadd.f32 0.0, %v230
  %v232 = vpop.f32.mrb[0].mxu0
  %v233 = vpop.f32.mrb[0].mxu0
  %234 = vdwg.mxu0
  %235 = vrot.lane.b32.xlu0 %v42, 19
  %v236 = vpop.permute.xlu0 %235
  %237 = vrot.lane.b32.xlu0 %v50, 19
  %v238 = vpop.permute.xlu0 %237
  %239 = vrot.lane.b32.xlu0 %v49, 19
  %v240 = vpop.permute.xlu0 %239
  %241 = vrot.lane.b32.xlu0 %v51, 19
  %v242 = vpop.permute.xlu0 %241
  %243 = vrot.lane.b32.xlu0 %v59, 19
  %v244 = vpop.permute.xlu0 %243
  %245 = vrot.lane.b32.xlu0 %v67, 19
  %v246 = vpop.permute.xlu0 %245
  %247 = vrot.lane.b32.xlu0 %v66, 19
  %v248 = vpop.permute.xlu0 %247
  %vm249 = vcmask 154624
  %v250 = vsel %vm249, %v236, %v238
  %v251 = vsel %vm249, %v238, %v240
  %v252 = vsel %vm249, %v240, %v242
  %v253 = vsel %vm249, %v242, %v244
  %v254 = vsel %vm249, %v244, %v246
  %v255 = vsel %vm249, %v246, %v248
  %v257 = vsel %vm89, %v27, 0
  %v260 = vsel %vm93, %v250, 0
  %v263 = vsel %vm93, %v251, 0
  %v266 = vsel %vm93, %v252, 0
  %v269 = vsel %vm93, %v253, 0
  %v272 = vsel %vm93, %v254, 0
  %v275 = vsel %vm93, %v255, 0
  %277 = vmatprep.subr.bf16.mxu0 %v263
  %278 = vmatpush1.bf16.msra.mxu0 %v260
  %279 = vmatprep.subr.bf16.mxu0 0
  %280 = vmatpush1.bf16.msra.mxu0 0
  %281 = vmatprep.subr.bf16.mxu0 0
  %282 = vmatpush1.bf16.msra.mxu0 0
  %283 = vmatprep.subr.bf16.mxu0 0
  %284 = vmatpush1.bf16.msra.mxu0 0
  %285 = vmatprep.subr.bf16.mxu0 0
  %286 = vmatpush1.bf16.msra.mxu0 0
  %287 = vmatprep.subr.bf16.mxu0 0
  %288 = vmatpush1.bf16.msra.mxu0 0
  %289 = vmatprep.subr.bf16.mxu0 0
  %290 = vmatpush1.bf16.msra.mxu0 0
  %291 = vmatprep.subr.bf16.mxu0 0
  %292 = vmatpush1.bf16.msra.mxu0 0
  %293 = vmatprep.subr.bf16.mxu0 0
  %294 = vmatpush1.bf16.msra.mxu0 0
  %295 = vmatprep.subr.bf16.mxu0 0
  %296 = vmatpush1.bf16.msra.mxu0 0
  %297 = vmatprep.subr.bf16.mxu0 0
  %298 = vmatpush1.bf16.msra.mxu0 0
  %299 = vmatprep.subr.bf16.mxu0 0
  %300 = vmatpush1.bf16.msra.mxu0 0
  %301 = vmatprep.subr.bf16.mxu0 0
  %302 = vmatpush1.bf16.msra.mxu0 0
  %303 = vmatprep.subr.bf16.mxu0 0
  %304 = vmatpush1.bf16.msra.mxu0 0
  %305 = vmatprep.subr.bf16.mxu0 0
  %306 = vmatpush1.bf16.msra.mxu0 0
  %307 = vmatprep.subr.bf16.mxu0 0
  %308 = vmatpush1.bf16.msra.mxu0 0
  %309 = vmatprep.mubr.bf16.mxu0 0
  %310 = vmatmul.mubr.bf16.gmra.mrb[0].mxu0 %v257
  %v311 = vpop.f32.mrb[0].mxu0
  %v312 = vadd.f32 %v147, %v311
  %v313 = vpop.f32.mrb[0].mxu0
  %v314 = vadd.f32 %v149, %v313
  %v315 = vpop.f32.mrb[0].mxu0
  %v316 = vpop.f32.mrb[0].mxu0
  %317 = vdwg.mxu0
  %318 = vmatprep.subr.bf16.mxu0 %v269
  %319 = vmatpush1.bf16.msra.mxu0 %v266
  %320 = vmatprep.subr.bf16.mxu0 0
  %321 = vmatpush1.bf16.msra.mxu0 0
  %322 = vmatprep.subr.bf16.mxu0 0
  %323 = vmatpush1.bf16.msra.mxu0 0
  %324 = vmatprep.subr.bf16.mxu0 0
  %325 = vmatpush1.bf16.msra.mxu0 0
  %326 = vmatprep.subr.bf16.mxu0 0
  %327 = vmatpush1.bf16.msra.mxu0 0
  %328 = vmatprep.subr.bf16.mxu0 0
  %329 = vmatpush1.bf16.msra.mxu0 0
  %330 = vmatprep.subr.bf16.mxu0 0
  %331 = vmatpush1.bf16.msra.mxu0 0
  %332 = vmatprep.subr.bf16.mxu0 0
  %333 = vmatpush1.bf16.msra.mxu0 0
  %334 = vmatprep.subr.bf16.mxu0 0
  %335 = vmatpush1.bf16.msra.mxu0 0
  %336 = vmatprep.subr.bf16.mxu0 0
  %337 = vmatpush1.bf16.msra.mxu0 0
  %338 = vmatprep.subr.bf16.mxu0 0
  %339 = vmatpush1.bf16.msra.mxu0 0
  %340 = vmatprep.subr.bf16.mxu0 0
  %341 = vmatpush1.bf16.msra.mxu0 0
  %342 = vmatprep.subr.bf16.mxu0 0
  %343 = vmatpush1.bf16.msra.mxu0 0
  %344 = vmatprep.subr.bf16.mxu0 0
  %345 = vmatpush1.bf16.msra.mxu0 0
  %346 = vmatprep.subr.bf16.mxu0 0
  %347 = vmatpush1.bf16.msra.mxu0 0
  %348 = vmatprep.subr.bf16.mxu0 0
  %349 = vmatpush1.bf16.msra.mxu0 0
  %350 = vmatprep.mubr.bf16.mxu0 0
  %351 = vmatmul.mubr.bf16.gmra.mrb[0].mxu0 %v257
  %v352 = vpop.f32.mrb[0].mxu0
  %v353 = vadd.f32 %v188, %v352
  %v354 = vpop.f32.mrb[0].mxu0
  %v355 = vadd.f32 %v190, %v354
  %v356 = vpop.f32.mrb[0].mxu0
  %v357 = vpop.f32.mrb[0].mxu0
  %358 = vdwg.mxu0
  %359 = vmatprep.subr.bf16.mxu0 %v275
  %360 = vmatpush1.bf16.msra.mxu0 %v272
  %361 = vmatprep.subr.bf16.mxu0 0
  %362 = vmatpush1.bf16.msra.mxu0 0
  %363 = vmatprep.subr.bf16.mxu0 0
  %364 = vmatpush1.bf16.msra.mxu0 0
  %365 = vmatprep.subr.bf16.mxu0 0
  %366 = vmatpush1.bf16.msra.mxu0 0
  %367 = vmatprep.subr.bf16.mxu0 0
  %368 = vmatpush1.bf16.msra.mxu0 0
  %369 = vmatprep.subr.bf16.mxu0 0
  %370 = vmatpush1.bf16.msra.mxu0 0
  %371 = vmatprep.subr.bf16.mxu0 0
  %372 = vmatpush1.bf16.msra.mxu0 0
  %373 = vmatprep.subr.bf16.mxu0 0
  %374 = vmatpush1.bf16.msra.mxu0 0
  %375 = vmatprep.subr.bf16.mxu0 0
  %376 = vmatpush1.bf16.msra.mxu0 0
  %377 = vmatprep.subr.bf16.mxu0 0
  %378 = vmatpush1.bf16.msra.mxu0 0
  %379 = vmatprep.subr.bf16.mxu0 0
  %380 = vmatpush1.bf16.msra.mxu0 0
  %381 = vmatprep.subr.bf16.mxu0 0
  %382 = vmatpush1.bf16.msra.mxu0 0
  %383 = vmatprep.subr.bf16.mxu0 0
  %384 = vmatpush1.bf16.msra.mxu0 0
  %385 = vmatprep.subr.bf16.mxu0 0
  %386 = vmatpush1.bf16.msra.mxu0 0
  %387 = vmatprep.subr.bf16.mxu0 0
  %388 = vmatpush1.bf16.msra.mxu0 0
  %389 = vmatprep.subr.bf16.mxu0 0
  %390 = vmatpush1.bf16.msra.mxu0 0
  %391 = vmatprep.mubr.bf16.mxu0 0
  %392 = vmatmul.mubr.bf16.gmra.mrb[0].mxu0 %v257
  %v393 = vpop.f32.mrb[0].mxu0
  %v394 = vadd.f32 %v229, %v393
  %v395 = vpop.f32.mrb[0].mxu0
  %v396 = vadd.f32 %v231, %v395
  %v397 = vpop.f32.mrb[0].mxu0
  %v398 = vpop.f32.mrb[0].mxu0
  %399 = vdwg.mxu0
  %v400 = vld [vmem:[%s0] sm:$0xff]
  %v401 = vld [vmem:[%s0 + $0x8] sm:$0x3f]
  %v402 = vld [vmem:[%s1] sm:$0xf]
  %v404 = vunpack.c.l.b16 %v402
  %v405 = vpack.c.b16 %v404, %v404
  %406 = vrot.lane.b32.xlu0 %v405, 120
  %v407 = vpop.permute.xlu0 %406
  %v410 = vcombine.high %v400, %v400
  %v412 = vunpack.c.l.s4 1983009808
  %v413 = vunpack.c.0.s8 %v412
  %v414 = vlaneseq
  %v415 = vshrl.u32 %v414, 7
  %v416 = vsub.s32 %v413, %v415
  %v417 = vrot.slane %v400, %v416
  %v419 = vunpack.c.l.s4 1983009808
  %v420 = vunpack.c.0.s8 %v419
  %v421 = vlaneseq
  %v422 = vshrl.u32 %v421, 7
  %v423 = vsub.s32 %v420, %v422
  %v424 = vrot.slane %v410, %v423
  %v425 = vcombine.high %v417, %v417
  %v426 = vcombine.high %v424, %v424
  %v427 = vcombine.high %v401, %v401
  %v429 = vunpack.c.l.s4 1983009808
  %v430 = vunpack.c.0.s8 %v429
  %v431 = vlaneseq
  %v432 = vshrl.u32 %v431, 7
  %v433 = vsub.s32 %v430, %v432
  %v434 = vrot.slane %v401, %v433
  %v436 = vunpack.c.l.s4 1983009808
  %v437 = vunpack.c.0.s8 %v436
  %v438 = vlaneseq
  %v439 = vshrl.u32 %v438, 7
  %v440 = vsub.s32 %v437, %v439
  %v441 = vrot.slane %v427, %v440
  %v442 = vcombine.high %v434, %v434
  %443 = vrot.lane.b32.xlu0 %v417, 17
  %v444 = vpop.permute.xlu0 %443
  %445 = vrot.lane.b32.xlu0 %v425, 17
  %v446 = vpop.permute.xlu0 %445
  %447 = vrot.lane.b32.xlu0 %v424, 17
  %v448 = vpop.permute.xlu0 %447
  %449 = vrot.lane.b32.xlu0 %v426, 17
  %v450 = vpop.permute.xlu0 %449
  %451 = vrot.lane.b32.xlu0 %v434, 17
  %v452 = vpop.permute.xlu0 %451
  %453 = vrot.lane.b32.xlu0 %v442, 17
  %v454 = vpop.permute.xlu0 %453
  %455 = vrot.lane.b32.xlu0 %v441, 17
  %v456 = vpop.permute.xlu0 %455
  %vm457 = vcmask 138240
  %v458 = vsel %vm457, %v444, %v446
  %v459 = vsel %vm457, %v446, %v448
  %v460 = vsel %vm457, %v448, %v450
  %v461 = vsel %vm457, %v450, %v452
  %v462 = vsel %vm457, %v452, %v454
  %v463 = vsel %vm457, %v454, %v456
  %v465 = vsel %vm89, %v407, 0
  %v468 = vsel %vm93, %v458, 0
  %v471 = vsel %vm93, %v459, 0
  %v474 = vsel %vm93, %v460, 0
  %v477 = vsel %vm93, %v461, 0
  %v480 = vsel %vm93, %v462, 0
  %v483 = vsel %vm93, %v463, 0
  %485 = vmatprep.subr.bf16.mxu0 %v471
  %486 = vmatpush1.bf16.msra.mxu0 %v468
  %487 = vmatprep.subr.bf16.mxu0 0
  %488 = vmatpush1.bf16.msra.mxu0 0
  %489 = vmatprep.subr.bf16.mxu0 0
  %490 = vmatpush1.bf16.msra.mxu0 0
  %491 = vmatprep.subr.bf16.mxu0 0
  %492 = vmatpush1.bf16.msra.mxu0 0
  %493 = vmatprep.subr.bf16.mxu0 0
  %494 = vmatpush1.bf16.msra.mxu0 0
  %495 = vmatprep.subr.bf16.mxu0 0
  %496 = vmatpush1.bf16.msra.mxu0 0
  %497 = vmatprep.subr.bf16.mxu0 0
  %498 = vmatpush1.bf16.msra.mxu0 0
  %499 = vmatprep.subr.bf16.mxu0 0
  %500 = vmatpush1.bf16.msra.mxu0 0
  %501 = vmatprep.subr.bf16.mxu0 0
  %502 = vmatpush1.bf16.msra.mxu0 0
  %503 = vmatprep.subr.bf16.mxu0 0
  %504 = vmatpush1.bf16.msra.mxu0 0
  %505 = vmatprep.subr.bf16.mxu0 0
  %506 = vmatpush1.bf16.msra.mxu0 0
  %507 = vmatprep.subr.bf16.mxu0 0
  %508 = vmatpush1.bf16.msra.mxu0 0
  %509 = vmatprep.subr.bf16.mxu0 0
  %510 = vmatpush1.bf16.msra.mxu0 0
  %511 = vmatprep.subr.bf16.mxu0 0
  %512 = vmatpush1.bf16.msra.mxu0 0
  %513 = vmatprep.subr.bf16.mxu0 0
  %514 = vmatpush1.bf16.msra.mxu0 0
  %515 = vmatprep.subr.bf16.mxu0 0
  %516 = vmatpush1.bf16.msra.mxu0 0
  %517 = vmatprep.mubr.bf16.mxu0 0
  %518 = vmatmul.mubr.bf16.gmra.mrb[0].mxu0 %v465
  %v519 = vpop.f32.mrb[0].mxu0
  %v520 = vadd.f32 0.0, %v519
  %v521 = vpop.f32.mrb[0].mxu0
  %v522 = vadd.f32 0.0, %v521
  %v523 = vpop.f32.mrb[0].mxu0
  %v524 = vpop.f32.mrb[0].mxu0
  %525 = vdwg.mxu0
  %526 = vmatprep.subr.bf16.mxu0 %v477
  %527 = vmatpush1.bf16.msra.mxu0 %v474
  %528 = vmatprep.subr.bf16.mxu0 0
  %529 = vmatpush1.bf16.msra.mxu0 0
  %530 = vmatprep.subr.bf16.mxu0 0
  %531 = vmatpush1.bf16.msra.mxu0 0
  %532 = vmatprep.subr.bf16.mxu0 0
  %533 = vmatpush1.bf16.msra.mxu0 0
  %534 = vmatprep.subr.bf16.mxu0 0
  %535 = vmatpush1.bf16.msra.mxu0 0
  %536 = vmatprep.subr.bf16.mxu0 0
  %537 = vmatpush1.bf16.msra.mxu0 0
  %538 = vmatprep.subr.bf16.mxu0 0
  %539 = vmatpush1.bf16.msra.mxu0 0
  %540 = vmatprep.subr.bf16.mxu0 0
  %541 = vmatpush1.bf16.msra.mxu0 0
  %542 = vmatprep.subr.bf16.mxu0 0
  %543 = vmatpush1.bf16.msra.mxu0 0
  %544 = vmatprep.subr.bf16.mxu0 0
  %545 = vmatpush1.bf16.msra.mxu0 0
  %546 = vmatprep.subr.bf16.mxu0 0
  %547 = vmatpush1.bf16.msra.mxu0 0
  %548 = vmatprep.subr.bf16.mxu0 0
  %549 = vmatpush1.bf16.msra.mxu0 0
  %550 = vmatprep.subr.bf16.mxu0 0
  %551 = vmatpush1.bf16.msra.mxu0 0
  %552 = vmatprep.subr.bf16.mxu0 0
  %553 = vmatpush1.bf16.msra.mxu0 0
  %554 = vmatprep.subr.bf16.mxu0 0
  %555 = vmatpush1.bf16.msra.mxu0 0
  %556 = vmatprep.subr.bf16.mxu0 0
  %557 = vmatpush1.bf16.msra.mxu0 0
  %558 = vmatprep.mubr.bf16.mxu0 0
  %559 = vmatmul.mubr.bf16.gmra.mrb[0].mxu0 %v465
  %v560 = vpop.f32.mrb[0].mxu0
  %v561 = vadd.f32 0.0, %v560
  %v562 = vpop.f32.mrb[0].mxu0
  %v563 = vadd.f32 0.0, %v562
  %v564 = vpop.f32.mrb[0].mxu0
  %v565 = vpop.f32.mrb[0].mxu0
  %566 = vdwg.mxu0
  %567 = vmatprep.subr.bf16.mxu0 %v483
  %568 = vmatpush1.bf16.msra.mxu0 %v480
  %569 = vmatprep.subr.bf16.mxu0 0
  %570 = vmatpush1.bf16.msra.mxu0 0
  %571 = vmatprep.subr.bf16.mxu0 0
  %572 = vmatpush1.bf16.msra.mxu0 0
  %573 = vmatprep.subr.bf16.mxu0 0
  %574 = vmatpush1.bf16.msra.mxu0 0
  %575 = vmatprep.subr.bf16.mxu0 0
  %576 = vmatpush1.bf16.msra.mxu0 0
  %577 = vmatprep.subr.bf16.mxu0 0
  %578 = vmatpush1.bf16.msra.mxu0 0
  %579 = vmatprep.subr.bf16.mxu0 0
  %580 = vmatpush1.bf16.msra.mxu0 0
  %581 = vmatprep.subr.bf16.mxu0 0
  %582 = vmatpush1.bf16.msra.mxu0 0
  %583 = vmatprep.subr.bf16.mxu0 0
  %584 = vmatpush1.bf16.msra.mxu0 0
  %585 = vmatprep.subr.bf16.mxu0 0
  %586 = vmatpush1.bf16.msra.mxu0 0
  %587 = vmatprep.subr.bf16.mxu0 0
  %588 = vmatpush1.bf16.msra.mxu0 0
  %589 = vmatprep.subr.bf16.mxu0 0
  %590 = vmatpush1.bf16.msra.mxu0 0
  %591 = vmatprep.subr.bf16.mxu0 0
  %592 = vmatpush1.bf16.msra.mxu0 0
  %593 = vmatprep.subr.bf16.mxu0 0
  %594 = vmatpush1.bf16.msra.mxu0 0
  %595 = vmatprep.subr.bf16.mxu0 0
  %596 = vmatpush1.bf16.msra.mxu0 0
  %597 = vmatprep.subr.bf16.mxu0 0
  %598 = vmatpush1.bf16.msra.mxu0 0
  %599 = vmatprep.mubr.bf16.mxu0 0
  %600 = vmatmul.mubr.bf16.gmra.mrb[0].mxu0 %v465
  %v601 = vpop.f32.mrb[0].mxu0
  %v602 = vadd.f32 0.0, %v601
  %v603 = vpop.f32.mrb[0].mxu0
  %v604 = vadd.f32 0.0, %v603
  %v605 = vpop.f32.mrb[0].mxu0
  %v606 = vpop.f32.mrb[0].mxu0
  %607 = vdwg.mxu0
  %v608 = vadd.f32 %v312, %v520
  %v609 = vadd.f32 %v314, %v522
  %v610 = vadd.f32 %v353, %v561
  %v611 = vadd.f32 %v355, %v563
  %v612 = vadd.f32 %v394, %v602
  %v613 = vadd.f32 %v396, %v604
  %v614 = vld [vmem:[%s0] sm:$0xff]
  %v615 = vld [vmem:[%s0 + $0x8] sm:$0x3f]
  %v616 = vld [vmem:[%s1] sm:$0xf]
  %v618 = vunpack.c.l.b16 %v616
  %v619 = vpack.c.b16 %v618, %v618
  %620 = vrot.lane.b32.xlu0 %v619, 116
  %v621 = vpop.permute.xlu0 %620
  %v624 = vcombine.high %v614, %v614
  %v626 = vunpack.c.l.s4 1983009808
  %v627 = vunpack.c.0.s8 %v626
  %v628 = vlaneseq
  %v629 = vshrl.u32 %v628, 7
  %v630 = vsub.s32 %v627, %v629
  %v631 = vrot.slane %v614, %v630
  %v633 = vunpack.c.l.s4 1983009808
  %v634 = vunpack.c.0.s8 %v633
  %v635 = vlaneseq
  %v636 = vshrl.u32 %v635, 7
  %v637 = vsub.s32 %v634, %v636
  %v638 = vrot.slane %v624, %v637
  %v639 = vcombine.high %v631, %v631
  %v640 = vcombine.high %v638, %v638
  %v641 = vcombine.high %v615, %v615
  %v643 = vunpack.c.l.s4 1983009808
  %v644 = vunpack.c.0.s8 %v643
  %v645 = vlaneseq
  %v646 = vshrl.u32 %v645, 7
  %v647 = vsub.s32 %v644, %v646
  %v648 = vrot.slane %v615, %v647
  %v650 = vunpack.c.l.s4 1983009808
  %v651 = vunpack.c.0.s8 %v650
  %v652 = vlaneseq
  %v653 = vshrl.u32 %v652, 7
  %v654 = vsub.s32 %v651, %v653
  %v655 = vrot.slane %v641, %v654
  %v656 = vcombine.high %v648, %v648
  %657 = vrot.lane.b32.xlu0 %v631, 1
  %v658 = vpop.permute.xlu0 %657
  %659 = vrot.lane.b32.xlu0 %v639, 1
  %v660 = vpop.permute.xlu0 %659
  %661 = vrot.lane.b32.xlu0 %v638, 1
  %v662 = vpop.permute.xlu0 %661
  %663 = vrot.lane.b32.xlu0 %v640, 1
  %v664 = vpop.permute.xlu0 %663
  %665 = vrot.lane.b32.xlu0 %v648, 1
  %v666 = vpop.permute.xlu0 %665
  %667 = vrot.lane.b32.xlu0 %v656, 1
  %v668 = vpop.permute.xlu0 %667
  %669 = vrot.lane.b32.xlu0 %v655, 1
  %v670 = vpop.permute.xlu0 %669
  %vm671 = vcmask 7168
  %v672 = vsel %vm671, %v658, %v660
  %v673 = vsel %vm671, %v660, %v662
  %v674 = vsel %vm671, %v662, %v664
  %v675 = vsel %vm671, %v664, %v666
  %v676 = vsel %vm671, %v666, %v668
  %v677 = vsel %vm671, %v668, %v670
  %v679 = vsel %vm89, %v621, 0
  %v682 = vsel %vm93, %v672, 0
  %v685 = vsel %vm93, %v673, 0
  %v688 = vsel %vm93, %v674, 0
  %v691 = vsel %vm93, %v675, 0
  %v694 = vsel %vm93, %v676, 0
  %v697 = vsel %vm93, %v677, 0
  %699 = vmatprep.subr.bf16.mxu0 %v685
  %700 = vmatpush1.bf16.msra.mxu0 %v682
  %701 = vmatprep.subr.bf16.mxu0 0
  %702 = vmatpush1.bf16.msra.mxu0 0
  %703 = vmatprep.subr.bf16.mxu0 0
  %704 = vmatpush1.bf16.msra.mxu0 0
  %705 = vmatprep.subr.bf16.mxu0 0
  %706 = vmatpush1.bf16.msra.mxu0 0
  %707 = vmatprep.subr.bf16.mxu0 0
  %708 = vmatpush1.bf16.msra.mxu0 0
  %709 = vmatprep.subr.bf16.mxu0 0
  %710 = vmatpush1.bf16.msra.mxu0 0
  %711 = vmatprep.subr.bf16.mxu0 0
  %712 = vmatpush1.bf16.msra.mxu0 0
  %713 = vmatprep.subr.bf16.mxu0 0
  %714 = vmatpush1.bf16.msra.mxu0 0
  %715 = vmatprep.subr.bf16.mxu0 0
  %716 = vmatpush1.bf16.msra.mxu0 0
  %717 = vmatprep.subr.bf16.mxu0 0
  %718 = vmatpush1.bf16.msra.mxu0 0
  %719 = vmatprep.subr.bf16.mxu0 0
  %720 = vmatpush1.bf16.msra.mxu0 0
  %721 = vmatprep.subr.bf16.mxu0 0
  %722 = vmatpush1.bf16.msra.mxu0 0
  %723 = vmatprep.subr.bf16.mxu0 0
  %724 = vmatpush1.bf16.msra.mxu0 0
  %725 = vmatprep.subr.bf16.mxu0 0
  %726 = vmatpush1.bf16.msra.mxu0 0
  %727 = vmatprep.subr.bf16.mxu0 0
  %728 = vmatpush1.bf16.msra.mxu0 0
  %729 = vmatprep.subr.bf16.mxu0 0
  %730 = vmatpush1.bf16.msra.mxu0 0
  %731 = vmatprep.mubr.bf16.mxu0 0
  %732 = vmatmul.mubr.bf16.gmra.mrb[0].mxu0 %v679
  %v733 = vpop.f32.mrb[0].mxu0
  %v734 = vadd.f32 0.0, %v733
  %v735 = vpop.f32.mrb[0].mxu0
  %v736 = vadd.f32 0.0, %v735
  %v737 = vpop.f32.mrb[0].mxu0
  %v738 = vpop.f32.mrb[0].mxu0
  %739 = vdwg.mxu0
  %740 = vmatprep.subr.bf16.mxu0 %v691
  %741 = vmatpush1.bf16.msra.mxu0 %v688
  %742 = vmatprep.subr.bf16.mxu0 0
  %743 = vmatpush1.bf16.msra.mxu0 0
  %744 = vmatprep.subr.bf16.mxu0 0
  %745 = vmatpush1.bf16.msra.mxu0 0
  %746 = vmatprep.subr.bf16.mxu0 0
  %747 = vmatpush1.bf16.msra.mxu0 0
  %748 = vmatprep.subr.bf16.mxu0 0
  %749 = vmatpush1.bf16.msra.mxu0 0
  %750 = vmatprep.subr.bf16.mxu0 0
  %751 = vmatpush1.bf16.msra.mxu0 0
  %752 = vmatprep.subr.bf16.mxu0 0
  %753 = vmatpush1.bf16.msra.mxu0 0
  %754 = vmatprep.subr.bf16.mxu0 0
  %755 = vmatpush1.bf16.msra.mxu0 0
  %756 = vmatprep.subr.bf16.mxu0 0
  %757 = vmatpush1.bf16.msra.mxu0 0
  %758 = vmatprep.subr.bf16.mxu0 0
  %759 = vmatpush1.bf16.msra.mxu0 0
  %760 = vmatprep.subr.bf16.mxu0 0
  %761 = vmatpush1.bf16.msra.mxu0 0
  %762 = vmatprep.subr.bf16.mxu0 0
  %763 = vmatpush1.bf16.msra.mxu0 0
  %764 = vmatprep.subr.bf16.mxu0 0
  %765 = vmatpush1.bf16.msra.mxu0 0
  %766 = vmatprep.subr.bf16.mxu0 0
  %767 = vmatpush1.bf16.msra.mxu0 0
  %768 = vmatprep.subr.bf16.mxu0 0
  %769 = vmatpush1.bf16.msra.mxu0 0
  %770 = vmatprep.subr.bf16.mxu0 0
  %771 = vmatpush1.bf16.msra.mxu0 0
  %772 = vmatprep.mubr.bf16.mxu0 0
  %773 = vmatmul.mubr.bf16.gmra.mrb[0].mxu0 %v679
  %v774 = vpop.f32.mrb[0].mxu0
  %v775 = vadd.f32 0.0, %v774
  %v776 = vpop.f32.mrb[0].mxu0
  %v777 = vadd.f32 0.0, %v776
  %v778 = vpop.f32.mrb[0].mxu0
  %v779 = vpop.f32.mrb[0].mxu0
  %780 = vdwg.mxu0
  %781 = vmatprep.subr.bf16.mxu0 %v697
  %782 = vmatpush1.bf16.msra.mxu0 %v694
  %783 = vmatprep.subr.bf16.mxu0 0
  %784 = vmatpush1.bf16.msra.mxu0 0
  %785 = vmatprep.subr.bf16.mxu0 0
  %786 = vmatpush1.bf16.msra.mxu0 0
  %787 = vmatprep.subr.bf16.mxu0 0
  %788 = vmatpush1.bf16.msra.mxu0 0
  %789 = vmatprep.subr.bf16.mxu0 0
  %790 = vmatpush1.bf16.msra.mxu0 0
  %791 = vmatprep.subr.bf16.mxu0 0
  %792 = vmatpush1.bf16.msra.mxu0 0
  %793 = vmatprep.subr.bf16.mxu0 0
  %794 = vmatpush1.bf16.msra.mxu0 0
  %795 = vmatprep.subr.bf16.mxu0 0
  %796 = vmatpush1.bf16.msra.mxu0 0
  %797 = vmatprep.subr.bf16.mxu0 0
  %798 = vmatpush1.bf16.msra.mxu0 0
  %799 = vmatprep.subr.bf16.mxu0 0
  %800 = vmatpush1.bf16.msra.mxu0 0
  %801 = vmatprep.subr.bf16.mxu0 0
  %802 = vmatpush1.bf16.msra.mxu0 0
  %803 = vmatprep.subr.bf16.mxu0 0
  %804 = vmatpush1.bf16.msra.mxu0 0
  %805 = vmatprep.subr.bf16.mxu0 0
  %806 = vmatpush1.bf16.msra.mxu0 0
  %807 = vmatprep.subr.bf16.mxu0 0
  %808 = vmatpush1.bf16.msra.mxu0 0
  %809 = vmatprep.subr.bf16.mxu0 0
  %810 = vmatpush1.bf16.msra.mxu0 0
  %811 = vmatprep.subr.bf16.mxu0 0
  %812 = vmatpush1.bf16.msra.mxu0 0
  %813 = vmatprep.mubr.bf16.mxu0 0
  %814 = vmatmul.mubr.bf16.gmra.mrb[0].mxu0 %v679
  %v815 = vpop.f32.mrb[0].mxu0
  %v816 = vadd.f32 0.0, %v815
  %v817 = vpop.f32.mrb[0].mxu0
  %v818 = vadd.f32 0.0, %v817
  %v819 = vpop.f32.mrb[0].mxu0
  %v820 = vpop.f32.mrb[0].mxu0
  %821 = vdwg.mxu0
  %v822 = vadd.f32 %v608, %v734
  %v823 = vadd.f32 %v609, %v736
  %v824 = vadd.f32 %v610, %v775
  %v825 = vadd.f32 %v611, %v777
  %v826 = vadd.f32 %v612, %v816
  %v827 = vadd.f32 %v613, %v818
  %v828 = vld [vmem:[%s0 + $0x2] sm:$0xff]
  %v829 = vld [vmem:[%s0 + $0xa] sm:$0xf]
  %v830 = vld [vmem:[%s1] sm:$0xf]
  %v832 = vunpack.c.l.b16 %v830
  %v833 = vpack.c.b16 %v832, %v832
  %834 = vrot.lane.b32.xlu0 %v833, 112
  %v835 = vpop.permute.xlu0 %834
  %v838 = vcombine.high %v828, %v828
  %v840 = vunpack.c.l.s4 1983009808
  %v841 = vunpack.c.0.s8 %v840
  %v842 = vlaneseq
  %v843 = vshrl.u32 %v842, 7
  %v844 = vsub.s32 %v841, %v843
  %v845 = vrot.slane %v828, %v844
  %v847 = vunpack.c.l.s4 1983009808
  %v848 = vunpack.c.0.s8 %v847
  %v849 = vlaneseq
  %v850 = vshrl.u32 %v849, 7
  %v851 = vsub.s32 %v848, %v850
  %v852 = vrot.slane %v838, %v851
  %v853 = vcombine.high %v845, %v845
  %v854 = vcombine.high %v852, %v852
  %v856 = vunpack.c.l.s4 1983009808
  %v857 = vunpack.c.0.s8 %v856
  %v858 = vlaneseq
  %v859 = vshrl.u32 %v858, 7
  %v860 = vsub.s32 %v857, %v859
  %v861 = vrot.slane %v829, %v860
  %v862 = vcombine.high %v861, %v861
  %v864 = vsel %vm89, %v835, 0
  %v867 = vsel %vm93, %v845, 0
  %v870 = vsel %vm93, %v853, 0
  %v873 = vsel %vm93, %v852, 0
  %v876 = vsel %vm93, %v854, 0
  %v879 = vsel %vm93, %v861, 0
  %v882 = vsel %vm93, %v862, 0
  %884 = vmatprep.subr.bf16.mxu0 %v870
  %885 = vmatpush1.bf16.msra.mxu0 %v867
  %886 = vmatprep.subr.bf16.mxu0 0
  %887 = vmatpush1.bf16.msra.mxu0 0
  %888 = vmatprep.subr.bf16.mxu0 0
  %889 = vmatpush1.bf16.msra.mxu0 0
  %890 = vmatprep.subr.bf16.mxu0 0
  %891 = vmatpush1.bf16.msra.mxu0 0
  %892 = vmatprep.subr.bf16.mxu0 0
  %893 = vmatpush1.bf16.msra.mxu0 0
  %894 = vmatprep.subr.bf16.mxu0 0
  %895 = vmatpush1.bf16.msra.mxu0 0
  %896 = vmatprep.subr.bf16.mxu0 0
  %897 = vmatpush1.bf16.msra.mxu0 0
  %898 = vmatprep.subr.bf16.mxu0 0
  %899 = vmatpush1.bf16.msra.mxu0 0
  %900 = vmatprep.subr.bf16.mxu0 0
  %901 = vmatpush1.bf16.msra.mxu0 0
  %902 = vmatprep.subr.bf16.mxu0 0
  %903 = vmatpush1.bf16.msra.mxu0 0
  %904 = vmatprep.subr.bf16.mxu0 0
  %905 = vmatpush1.bf16.msra.mxu0 0
  %906 = vmatprep.subr.bf16.mxu0 0
  %907 = vmatpush1.bf16.msra.mxu0 0
  %908 = vmatprep.subr.bf16.mxu0 0
  %909 = vmatpush1.bf16.msra.mxu0 0
  %910 = vmatprep.subr.bf16.mxu0 0
  %911 = vmatpush1.bf16.msra.mxu0 0
  %912 = vmatprep.subr.bf16.mxu0 0
  %913 = vmatpush1.bf16.msra.mxu0 0
  %914 = vmatprep.subr.bf16.mxu0 0
  %915 = vmatpush1.bf16.msra.mxu0 0
  %916 = vmatprep.mubr.bf16.mxu0 0
  %917 = vmatmul.mubr.bf16.gmra.mrb[0].mxu0 %v864
  %v918 = vpop.f32.mrb[0].mxu0
  %v919 = vadd.f32 0.0, %v918
  %v920 = vpop.f32.mrb[0].mxu0
  %v921 = vadd.f32 0.0, %v920
  %v922 = vpop.f32.mrb[0].mxu0
  %v923 = vpop.f32.mrb[0].mxu0
  %924 = vdwg.mxu0
  %925 = vmatprep.subr.bf16.mxu0 %v876
  %926 = vmatpush1.bf16.msra.mxu0 %v873
  %927 = vmatprep.subr.bf16.mxu0 0
  %928 = vmatpush1.bf16.msra.mxu0 0
  %929 = vmatprep.subr.bf16.mxu0 0
  %930 = vmatpush1.bf16.msra.mxu0 0
  %931 = vmatprep.subr.bf16.mxu0 0
  %932 = vmatpush1.bf16.msra.mxu0 0
  %933 = vmatprep.subr.bf16.mxu0 0
  %934 = vmatpush1.bf16.msra.mxu0 0
  %935 = vmatprep.subr.bf16.mxu0 0
  %936 = vmatpush1.bf16.msra.mxu0 0
  %937 = vmatprep.subr.bf16.mxu0 0
  %938 = vmatpush1.bf16.msra.mxu0 0
  %939 = vmatprep.subr.bf16.mxu0 0
  %940 = vmatpush1.bf16.msra.mxu0 0
  %941 = vmatprep.subr.bf16.mxu0 0
  %942 = vmatpush1.bf16.msra.mxu0 0
  %943 = vmatprep.subr.bf16.mxu0 0
  %944 = vmatpush1.bf16.msra.mxu0 0
  %945 = vmatprep.subr.bf16.mxu0 0
  %946 = vmatpush1.bf16.msra.mxu0 0
  %947 = vmatprep.subr.bf16.mxu0 0
  %948 = vmatpush1.bf16.msra.mxu0 0
  %949 = vmatprep.subr.bf16.mxu0 0
  %950 = vmatpush1.bf16.msra.mxu0 0
  %951 = vmatprep.subr.bf16.mxu0 0
  %952 = vmatpush1.bf16.msra.mxu0 0
  %953 = vmatprep.subr.bf16.mxu0 0
  %954 = vmatpush1.bf16.msra.mxu0 0
  %955 = vmatprep.subr.bf16.mxu0 0
  %956 = vmatpush1.bf16.msra.mxu0 0
  %957 = vmatprep.mubr.bf16.mxu0 0
  %958 = vmatmul.mubr.bf16.gmra.mrb[0].mxu0 %v864
  %v959 = vpop.f32.mrb[0].mxu0
  %v960 = vadd.f32 0.0, %v959
  %v961 = vpop.f32.mrb[0].mxu0
  %v962 = vadd.f32 0.0, %v961
  %v963 = vpop.f32.mrb[0].mxu0
  %v964 = vpop.f32.mrb[0].mxu0
  %965 = vdwg.mxu0
  %966 = vmatprep.subr.bf16.mxu0 %v882
  %967 = vmatpush1.bf16.msra.mxu0 %v879
  %968 = vmatprep.subr.bf16.mxu0 0
  %969 = vmatpush1.bf16.msra.mxu0 0
  %970 = vmatprep.subr.bf16.mxu0 0
  %971 = vmatpush1.bf16.msra.mxu0 0
  %972 = vmatprep.subr.bf16.mxu0 0
  %973 = vmatpush1.bf16.msra.mxu0 0
  %974 = vmatprep.subr.bf16.mxu0 0
  %975 = vmatpush1.bf16.msra.mxu0 0
  %976 = vmatprep.subr.bf16.mxu0 0
  %977 = vmatpush1.bf16.msra.mxu0 0
  %978 = vmatprep.subr.bf16.mxu0 0
  %979 = vmatpush1.bf16.msra.mxu0 0
  %980 = vmatprep.subr.bf16.mxu0 0
  %981 = vmatpush1.bf16.msra.mxu0 0
  %982 = vmatprep.subr.bf16.mxu0 0
  %983 = vmatpush1.bf16.msra.mxu0 0
  %984 = vmatprep.subr.bf16.mxu0 0
  %985 = vmatpush1.bf16.msra.mxu0 0
  %986 = vmatprep.subr.bf16.mxu0 0
  %987 = vmatpush1.bf16.msra.mxu0 0
  %988 = vmatprep.subr.bf16.mxu0 0
  %989 = vmatpush1.bf16.msra.mxu0 0
  %990 = vmatprep.subr.bf16.mxu0 0
  %991 = vmatpush1.bf16.msra.mxu0 0
  %992 = vmatprep.subr.bf16.mxu0 0
  %993 = vmatpush1.bf16.msra.mxu0 0
  %994 = vmatprep.subr.bf16.mxu0 0
  %995 = vmatpush1.bf16.msra.mxu0 0
  %996 = vmatprep.subr.bf16.mxu0 0
  %997 = vmatpush1.bf16.msra.mxu0 0
  %998 = vmatprep.mubr.bf16.mxu0 0
  %999 = vmatmul.mubr.bf16.gmra.mrb[0].mxu0 %v864
  %v1000 = vpop.f32.mrb[0].mxu0
  %v1001 = vadd.f32 0.0, %v1000
  %v1002 = vpop.f32.mrb[0].mxu0
  %v1003 = vadd.f32 0.0, %v1002
  %v1004 = vpop.f32.mrb[0].mxu0
  %v1005 = vpop.f32.mrb[0].mxu0
  %1006 = vdwg.mxu0
  %v1007 = vadd.f32 %v822, %v919
  %v1008 = vadd.f32 %v823, %v921
  %v1009 = vadd.f32 %v824, %v960
  %v1010 = vadd.f32 %v825, %v962
  %v1011 = vadd.f32 %v826, %v1001
  %v1012 = vadd.f32 %v827, %v1003
  %v1013 = vld [vmem:[%s0 + $0x2] sm:$0xff]
  %v1014 = vld [vmem:[%s0 + $0xa] sm:$0x3f]
  %v1015 = vld [vmem:[%s1] sm:$0xf]
  %v1017 = vunpack.c.l.b16 %v1015
  %v1018 = vpack.c.b16 %v1017, %v1017
  %1019 = vrot.lane.b32.xlu0 %v1018, 108
  %v1020 = vpop.permute.xlu0 %1019
  %v1023 = vcombine.high %v1013, %v1013
  %v1025 = vunpack.c.l.s4 1983009808
  %v1026 = vunpack.c.0.s8 %v1025
  %v1027 = vlaneseq
  %v1028 = vshrl.u32 %v1027, 7
  %v1029 = vsub.s32 %v1026, %v1028
  %v1030 = vrot.slane %v1013, %v1029
  %v1032 = vunpack.c.l.s4 1983009808
  %v1033 = vunpack.c.0.s8 %v1032
  %v1034 = vlaneseq
  %v1035 = vshrl.u32 %v1034, 7
  %v1036 = vsub.s32 %v1033, %v1035
  %v1037 = vrot.slane %v1023, %v1036
  %v1038 = vcombine.high %v1030, %v1030
  %v1039 = vcombine.high %v1037, %v1037
  %v1040 = vcombine.high %v1014, %v1014
  %v1042 = vunpack.c.l.s4 1983009808
  %v1043 = vunpack.c.0.s8 %v1042
  %v1044 = vlaneseq
  %v1045 = vshrl.u32 %v1044, 7
  %v1046 = vsub.s32 %v1043, %v1045
  %v1047 = vrot.slane %v1014, %v1046
  %v1049 = vunpack.c.l.s4 1983009808
  %v1050 = vunpack.c.0.s8 %v1049
  %v1051 = vlaneseq
  %v1052 = vshrl.u32 %v1051, 7
  %v1053 = vsub.s32 %v1050, %v1052
  %v1054 = vrot.slane %v1040, %v1053
  %v1055 = vcombine.high %v1047, %v1047
  %1056 = vrot.lane.b32.xlu0 %v1030, 127
  %v1057 = vpop.permute.xlu0 %1056
  %1058 = vrot.lane.b32.xlu0 %v1038, 127
  %v1059 = vpop.permute.xlu0 %1058
  %1060 = vrot.lane.b32.xlu0 %v1037, 127
  %v1061 = vpop.permute.xlu0 %1060
  %1062 = vrot.lane.b32.xlu0 %v1039, 127
  %v1063 = vpop.permute.xlu0 %1062
  %1064 = vrot.lane.b32.xlu0 %v1047, 127
  %v1065 = vpop.permute.xlu0 %1064
  %1066 = vrot.lane.b32.xlu0 %v1055, 127
  %v1067 = vpop.permute.xlu0 %1066
  %1068 = vrot.lane.b32.xlu0 %v1054, 127
  %v1069 = vpop.permute.xlu0 %1068
  %vm1070 = vcmask 1039360
  %v1071 = vsel %vm1070, %v1057, %v1059
  %v1072 = vsel %vm1070, %v1059, %v1061
  %v1073 = vsel %vm1070, %v1061, %v1063
  %v1074 = vsel %vm1070, %v1063, %v1065
  %v1075 = vsel %vm1070, %v1065, %v1067
  %v1076 = vsel %vm1070, %v1067, %v1069
  %v1078 = vsel %vm89, %v1020, 0
  %v1081 = vsel %vm93, %v1071, 0
  %v1084 = vsel %vm93, %v1072, 0
  %v1087 = vsel %vm93, %v1073, 0
  %v1090 = vsel %vm93, %v1074, 0
  %v1093 = vsel %vm93, %v1075, 0
  %v1096 = vsel %vm93, %v1076, 0
  %1098 = vmatprep.subr.bf16.mxu0 %v1084
  %1099 = vmatpush1.bf16.msra.mxu0 %v1081
  %1100 = vmatprep.subr.bf16.mxu0 0
  %1101 = vmatpush1.bf16.msra.mxu0 0
  %1102 = vmatprep.subr.bf16.mxu0 0
  %1103 = vmatpush1.bf16.msra.mxu0 0
  %1104 = vmatprep.subr.bf16.mxu0 0
  %1105 = vmatpush1.bf16.msra.mxu0 0
  %1106 = vmatprep.subr.bf16.mxu0 0
  %1107 = vmatpush1.bf16.msra.mxu0 0
  %1108 = vmatprep.subr.bf16.mxu0 0
  %1109 = vmatpush1.bf16.msra.mxu0 0
  %1110 = vmatprep.subr.bf16.mxu0 0
  %1111 = vmatpush1.bf16.msra.mxu0 0
  %1112 = vmatprep.subr.bf16.mxu0 0
  %1113 = vmatpush1.bf16.msra.mxu0 0
  %1114 = vmatprep.subr.bf16.mxu0 0
  %1115 = vmatpush1.bf16.msra.mxu0 0
  %1116 = vmatprep.subr.bf16.mxu0 0
  %1117 = vmatpush1.bf16.msra.mxu0 0
  %1118 = vmatprep.subr.bf16.mxu0 0
  %1119 = vmatpush1.bf16.msra.mxu0 0
  %1120 = vmatprep.subr.bf16.mxu0 0
  %1121 = vmatpush1.bf16.msra.mxu0 0
  %1122 = vmatprep.subr.bf16.mxu0 0
  %1123 = vmatpush1.bf16.msra.mxu0 0
  %1124 = vmatprep.subr.bf16.mxu0 0
  %1125 = vmatpush1.bf16.msra.mxu0 0
  %1126 = vmatprep.subr.bf16.mxu0 0
  %1127 = vmatpush1.bf16.msra.mxu0 0
  %1128 = vmatprep.subr.bf16.mxu0 0
  %1129 = vmatpush1.bf16.msra.mxu0 0
  %1130 = vmatprep.mubr.bf16.mxu0 0
  %1131 = vmatmul.mubr.bf16.gmra.mrb[0].mxu0 %v1078
  %v1132 = vpop.f32.mrb[0].mxu0
  %v1133 = vadd.f32 0.0, %v1132
  %v1134 = vpop.f32.mrb[0].mxu0
  %v1135 = vadd.f32 0.0, %v1134
  %v1136 = vpop.f32.mrb[0].mxu0
  %v1137 = vpop.f32.mrb[0].mxu0
  %1138 = vdwg.mxu0
  %1139 = vmatprep.subr.bf16.mxu0 %v1090
  %1140 = vmatpush1.bf16.msra.mxu0 %v1087
  %1141 = vmatprep.subr.bf16.mxu0 0
  %1142 = vmatpush1.bf16.msra.mxu0 0
  %1143 = vmatprep.subr.bf16.mxu0 0
  %1144 = vmatpush1.bf16.msra.mxu0 0
  %1145 = vmatprep.subr.bf16.mxu0 0
  %1146 = vmatpush1.bf16.msra.mxu0 0
  %1147 = vmatprep.subr.bf16.mxu0 0
  %1148 = vmatpush1.bf16.msra.mxu0 0
  %1149 = vmatprep.subr.bf16.mxu0 0
  %1150 = vmatpush1.bf16.msra.mxu0 0
  %1151 = vmatprep.subr.bf16.mxu0 0
  %1152 = vmatpush1.bf16.msra.mxu0 0
  %1153 = vmatprep.subr.bf16.mxu0 0
  %1154 = vmatpush1.bf16.msra.mxu0 0
  %1155 = vmatprep.subr.bf16.mxu0 0
  %1156 = vmatpush1.bf16.msra.mxu0 0
  %1157 = vmatprep.subr.bf16.mxu0 0
  %1158 = vmatpush1.bf16.msra.mxu0 0
  %1159 = vmatprep.subr.bf16.mxu0 0
  %1160 = vmatpush1.bf16.msra.mxu0 0
  %1161 = vmatprep.subr.bf16.mxu0 0
  %1162 = vmatpush1.bf16.msra.mxu0 0
  %1163 = vmatprep.subr.bf16.mxu0 0
  %1164 = vmatpush1.bf16.msra.mxu0 0
  %1165 = vmatprep.subr.bf16.mxu0 0
  %1166 = vmatpush1.bf16.msra.mxu0 0
  %1167 = vmatprep.subr.bf16.mxu0 0
  %1168 = vmatpush1.bf16.msra.mxu0 0
  %1169 = vmatprep.subr.bf16.mxu0 0
  %1170 = vmatpush1.bf16.msra.mxu0 0
  %1171 = vmatprep.mubr.bf16.mxu0 0
  %1172 = vmatmul.mubr.bf16.gmra.mrb[0].mxu0 %v1078
  %v1173 = vpop.f32.mrb[0].mxu0
  %v1174 = vadd.f32 0.0, %v1173
  %v1175 = vpop.f32.mrb[0].mxu0
  %v1176 = vadd.f32 0.0, %v1175
  %v1177 = vpop.f32.mrb[0].mxu0
  %v1178 = vpop.f32.mrb[0].mxu0
  %1179 = vdwg.mxu0
  %1180 = vmatprep.subr.bf16.mxu0 %v1096
  %1181 = vmatpush1.bf16.msra.mxu0 %v1093
  %1182 = vmatprep.subr.bf16.mxu0 0
  %1183 = vmatpush1.bf16.msra.mxu0 0
  %1184 = vmatprep.subr.bf16.mxu0 0
  %1185 = vmatpush1.bf16.msra.mxu0 0
  %1186 = vmatprep.subr.bf16.mxu0 0
  %1187 = vmatpush1.bf16.msra.mxu0 0
  %1188 = vmatprep.subr.bf16.mxu0 0
  %1189 = vmatpush1.bf16.msra.mxu0 0
  %1190 = vmatprep.subr.bf16.mxu0 0
  %1191 = vmatpush1.bf16.msra.mxu0 0
  %1192 = vmatprep.subr.bf16.mxu0 0
  %1193 = vmatpush1.bf16.msra.mxu0 0
  %1194 = vmatprep.subr.bf16.mxu0 0
  %1195 = vmatpush1.bf16.msra.mxu0 0
  %1196 = vmatprep.subr.bf16.mxu0 0
  %1197 = vmatpush1.bf16.msra.mxu0 0
  %1198 = vmatprep.subr.bf16.mxu0 0
  %1199 = vmatpush1.bf16.msra.mxu0 0
  %1200 = vmatprep.subr.bf16.mxu0 0
  %1201 = vmatpush1.bf16.msra.mxu0 0
  %1202 = vmatprep.subr.bf16.mxu0 0
  %1203 = vmatpush1.bf16.msra.mxu0 0
  %1204 = vmatprep.subr.bf16.mxu0 0
  %1205 = vmatpush1.bf16.msra.mxu0 0
  %1206 = vmatprep.subr.bf16.mxu0 0
  %1207 = vmatpush1.bf16.msra.mxu0 0
  %1208 = vmatprep.subr.bf16.mxu0 0
  %1209 = vmatpush1.bf16.msra.mxu0 0
  %1210 = vmatprep.subr.bf16.mxu0 0
  %1211 = vmatpush1.bf16.msra.mxu0 0
  %1212 = vmatprep.mubr.bf16.mxu0 0
  %1213 = vmatmul.mubr.bf16.gmra.mrb[0].mxu0 %v1078
  %v1214 = vpop.f32.mrb[0].mxu0
  %v1215 = vadd.f32 0.0, %v1214
  %v1216 = vpop.f32.mrb[0].mxu0
  %v1217 = vadd.f32 0.0, %v1216
  %v1218 = vpop.f32.mrb[0].mxu0
  %v1219 = vpop.f32.mrb[0].mxu0
  %1220 = vdwg.mxu0
  %v1221 = vadd.f32 %v1007, %v1133
  %v1222 = vadd.f32 %v1008, %v1135
  %v1223 = vadd.f32 %v1009, %v1174
  %v1224 = vadd.f32 %v1010, %v1176
  %v1225 = vadd.f32 %v1011, %v1215
  %v1226 = vadd.f32 %v1012, %v1217
  %v1227 = vld [vmem:[%s0 + $0x2] sm:$0xff]
  %v1228 = vld [vmem:[%s0 + $0xa] sm:$0x3f]
  %v1229 = vld [vmem:[%s1] sm:$0xf]
  %v1231 = vunpack.c.l.b16 %v1229
  %v1232 = vpack.c.b16 %v1231, %v1231
  %1233 = vrot.lane.b32.xlu0 %v1232, 104
  %v1234 = vpop.permute.xlu0 %1233
  %v1237 = vcombine.high %v1227, %v1227
  %v1239 = vunpack.c.l.s4 1983009808
  %v1240 = vunpack.c.0.s8 %v1239
  %v1241 = vlaneseq
  %v1242 = vshrl.u32 %v1241, 7
  %v1243 = vsub.s32 %v1240, %v1242
  %v1244 = vrot.slane %v1227, %v1243
  %v1246 = vunpack.c.l.s4 1983009808
  %v1247 = vunpack.c.0.s8 %v1246
  %v1248 = vlaneseq
  %v1249 = vshrl.u32 %v1248, 7
  %v1250 = vsub.s32 %v1247, %v1249
  %v1251 = vrot.slane %v1237, %v1250
  %v1252 = vcombine.high %v1244, %v1244
  %v1253 = vcombine.high %v1251, %v1251
  %v1254 = vcombine.high %v1228, %v1228
  %v1256 = vunpack.c.l.s4 1983009808
  %v1257 = vunpack.c.0.s8 %v1256
  %v1258 = vlaneseq
  %v1259 = vshrl.u32 %v1258, 7
  %v1260 = vsub.s32 %v1257, %v1259
  %v1261 = vrot.slane %v1228, %v1260
  %v1263 = vunpack.c.l.s4 1983009808
  %v1264 = vunpack.c.0.s8 %v1263
  %v1265 = vlaneseq
  %v1266 = vshrl.u32 %v1265, 7
  %v1267 = vsub.s32 %v1264, %v1266
  %v1268 = vrot.slane %v1254, %v1267
  %v1269 = vcombine.high %v1261, %v1261
  %1270 = vrot.lane.b32.xlu0 %v1244, 111
  %v1271 = vpop.permute.xlu0 %1270
  %1272 = vrot.lane.b32.xlu0 %v1252, 111
  %v1273 = vpop.permute.xlu0 %1272
  %1274 = vrot.lane.b32.xlu0 %v1251, 111
  %v1275 = vpop.permute.xlu0 %1274
  %1276 = vrot.lane.b32.xlu0 %v1253, 111
  %v1277 = vpop.permute.xlu0 %1276
  %1278 = vrot.lane.b32.xlu0 %v1261, 111
  %v1279 = vpop.permute.xlu0 %1278
  %1280 = vrot.lane.b32.xlu0 %v1269, 111
  %v1281 = vpop.permute.xlu0 %1280
  %1282 = vrot.lane.b32.xlu0 %v1268, 111
  %v1283 = vpop.permute.xlu0 %1282
  %vm1284 = vcmask 908288
  %v1285 = vsel %vm1284, %v1271, %v1273
  %v1286 = vsel %vm1284, %v1273, %v1275
  %v1287 = vsel %vm1284, %v1275, %v1277
  %v1288 = vsel %vm1284, %v1277, %v1279
  %v1289 = vsel %vm1284, %v1279, %v1281
  %v1290 = vsel %vm1284, %v1281, %v1283
  %v1292 = vsel %vm89, %v1234, 0
  %v1295 = vsel %vm93, %v1285, 0
  %v1298 = vsel %vm93, %v1286, 0
  %v1301 = vsel %vm93, %v1287, 0
  %v1304 = vsel %vm93, %v1288, 0
  %v1307 = vsel %vm93, %v1289, 0
  %v1310 = vsel %vm93, %v1290, 0
  %1312 = vmatprep.subr.bf16.mxu0 %v1298
  %1313 = vmatpush1.bf16.msra.mxu0 %v1295
  %1314 = vmatprep.subr.bf16.mxu0 0
  %1315 = vmatpush1.bf16.msra.mxu0 0
  %1316 = vmatprep.subr.bf16.mxu0 0
  %1317 = vmatpush1.bf16.msra.mxu0 0
  %1318 = vmatprep.subr.bf16.mxu0 0
  %1319 = vmatpush1.bf16.msra.mxu0 0
  %1320 = vmatprep.subr.bf16.mxu0 0
  %1321 = vmatpush1.bf16.msra.mxu0 0
  %1322 = vmatprep.subr.bf16.mxu0 0
  %1323 = vmatpush1.bf16.msra.mxu0 0
  %1324 = vmatprep.subr.bf16.mxu0 0
  %1325 = vmatpush1.bf16.msra.mxu0 0
  %1326 = vmatprep.subr.bf16.mxu0 0
  %1327 = vmatpush1.bf16.msra.mxu0 0
  %1328 = vmatprep.subr.bf16.mxu0 0
  %1329 = vmatpush1.bf16.msra.mxu0 0
  %1330 = vmatprep.subr.bf16.mxu0 0
  %1331 = vmatpush1.bf16.msra.mxu0 0
  %1332 = vmatprep.subr.bf16.mxu0 0
  %1333 = vmatpush1.bf16.msra.mxu0 0
  %1334 = vmatprep.subr.bf16.mxu0 0
  %1335 = vmatpush1.bf16.msra.mxu0 0
  %1336 = vmatprep.subr.bf16.mxu0 0
  %1337 = vmatpush1.bf16.msra.mxu0 0
  %1338 = vmatprep.subr.bf16.mxu0 0
  %1339 = vmatpush1.bf16.msra.mxu0 0
  %1340 = vmatprep.subr.bf16.mxu0 0
  %1341 = vmatpush1.bf16.msra.mxu0 0
  %1342 = vmatprep.subr.bf16.mxu0 0
  %1343 = vmatpush1.bf16.msra.mxu0 0
  %1344 = vmatprep.mubr.bf16.mxu0 0
  %1345 = vmatmul.mubr.bf16.gmra.mrb[0].mxu0 %v1292
  %v1346 = vpop.f32.mrb[0].mxu0
  %v1347 = vadd.f32 0.0, %v1346
  %v1348 = vpop.f32.mrb[0].mxu0
  %v1349 = vadd.f32 0.0, %v1348
  %v1350 = vpop.f32.mrb[0].mxu0
  %v1351 = vpop.f32.mrb[0].mxu0
  %1352 = vdwg.mxu0
  %1353 = vmatprep.subr.bf16.mxu0 %v1304
  %1354 = vmatpush1.bf16.msra.mxu0 %v1301
  %1355 = vmatprep.subr.bf16.mxu0 0
  %1356 = vmatpush1.bf16.msra.mxu0 0
  %1357 = vmatprep.subr.bf16.mxu0 0
  %1358 = vmatpush1.bf16.msra.mxu0 0
  %1359 = vmatprep.subr.bf16.mxu0 0
  %1360 = vmatpush1.bf16.msra.mxu0 0
  %1361 = vmatprep.subr.bf16.mxu0 0
  %1362 = vmatpush1.bf16.msra.mxu0 0
  %1363 = vmatprep.subr.bf16.mxu0 0
  %1364 = vmatpush1.bf16.msra.mxu0 0
  %1365 = vmatprep.subr.bf16.mxu0 0
  %1366 = vmatpush1.bf16.msra.mxu0 0
  %1367 = vmatprep.subr.bf16.mxu0 0
  %1368 = vmatpush1.bf16.msra.mxu0 0
  %1369 = vmatprep.subr.bf16.mxu0 0
  %1370 = vmatpush1.bf16.msra.mxu0 0
  %1371 = vmatprep.subr.bf16.mxu0 0
  %1372 = vmatpush1.bf16.msra.mxu0 0
  %1373 = vmatprep.subr.bf16.mxu0 0
  %1374 = vmatpush1.bf16.msra.mxu0 0
  %1375 = vmatprep.subr.bf16.mxu0 0
  %1376 = vmatpush1.bf16.msra.mxu0 0
  %1377 = vmatprep.subr.bf16.mxu0 0
  %1378 = vmatpush1.bf16.msra.mxu0 0
  %1379 = vmatprep.subr.bf16.mxu0 0
  %1380 = vmatpush1.bf16.msra.mxu0 0
  %1381 = vmatprep.subr.bf16.mxu0 0
  %1382 = vmatpush1.bf16.msra.mxu0 0
  %1383 = vmatprep.subr.bf16.mxu0 0
  %1384 = vmatpush1.bf16.msra.mxu0 0
  %1385 = vmatprep.mubr.bf16.mxu0 0
  %1386 = vmatmul.mubr.bf16.gmra.mrb[0].mxu0 %v1292
  %v1387 = vpop.f32.mrb[0].mxu0
  %v1388 = vadd.f32 0.0, %v1387
  %v1389 = vpop.f32.mrb[0].mxu0
  %v1390 = vadd.f32 0.0, %v1389
  %v1391 = vpop.f32.mrb[0].mxu0
  %v1392 = vpop.f32.mrb[0].mxu0
  %1393 = vdwg.mxu0
  %1394 = vmatprep.subr.bf16.mxu0 %v1310
  %1395 = vmatpush1.bf16.msra.mxu0 %v1307
  %1396 = vmatprep.subr.bf16.mxu0 0
  %1397 = vmatpush1.bf16.msra.mxu0 0
  %1398 = vmatprep.subr.bf16.mxu0 0
  %1399 = vmatpush1.bf16.msra.mxu0 0
  %1400 = vmatprep.subr.bf16.mxu0 0
  %1401 = vmatpush1.bf16.msra.mxu0 0
  %1402 = vmatprep.subr.bf16.mxu0 0
  %1403 = vmatpush1.bf16.msra.mxu0 0
  %1404 = vmatprep.subr.bf16.mxu0 0
  %1405 = vmatpush1.bf16.msra.mxu0 0
  %1406 = vmatprep.subr.bf16.mxu0 0
  %1407 = vmatpush1.bf16.msra.mxu0 0
  %1408 = vmatprep.subr.bf16.mxu0 0
  %1409 = vmatpush1.bf16.msra.mxu0 0
  %1410 = vmatprep.subr.bf16.mxu0 0
  %1411 = vmatpush1.bf16.msra.mxu0 0
  %1412 = vmatprep.subr.bf16.mxu0 0
  %1413 = vmatpush1.bf16.msra.mxu0 0
  %1414 = vmatprep.subr.bf16.mxu0 0
  %1415 = vmatpush1.bf16.msra.mxu0 0
  %1416 = vmatprep.subr.bf16.mxu0 0
  %1417 = vmatpush1.bf16.msra.mxu0 0
  %1418 = vmatprep.subr.bf16.mxu0 0
  %1419 = vmatpush1.bf16.msra.mxu0 0
  %1420 = vmatprep.subr.bf16.mxu0 0
  %1421 = vmatpush1.bf16.msra.mxu0 0
  %1422 = vmatprep.subr.bf16.mxu0 0
  %1423 = vmatpush1.bf16.msra.mxu0 0
  %1424 = vmatprep.subr.bf16.mxu0 0
  %1425 = vmatpush1.bf16.msra.mxu0 0
  %1426 = vmatprep.mubr.bf16.mxu0 0
  %1427 = vmatmul.mubr.bf16.gmra.mrb[0].mxu0 %v1292
  %v1428 = vpop.f32.mrb[0].mxu0
  %v1429 = vadd.f32 0.0, %v1428
  %v1430 = vpop.f32.mrb[0].mxu0
  %v1431 = vadd.f32 0.0, %v1430
  %v1432 = vpop.f32.mrb[0].mxu0
  %v1433 = vpop.f32.mrb[0].mxu0
  %1434 = vdwg.mxu0
  %v1435 = vadd.f32 %v1221, %v1347
  %v1436 = vadd.f32 %v1222, %v1349
  %v1437 = vadd.f32 %v1223, %v1388
  %v1438 = vadd.f32 %v1224, %v1390
  %v1439 = vadd.f32 %v1225, %v1429
  %v1440 = vadd.f32 %v1226, %v1431
  %v1441 = vld [vmem:[%s0 + $0x2] sm:$0xff]
  %v1442 = vld [vmem:[%s0 + $0xa] sm:$0x3f]
  %v1443 = vld [vmem:[%s1] sm:$0xf]
  %v1445 = vunpack.c.l.b16 %v1443
  %v1446 = vpack.c.b16 %v1445, %v1445
  %1447 = vrot.lane.b32.xlu0 %v1446, 100
  %v1448 = vpop.permute.xlu0 %1447
  %v1451 = vcombine.high %v1441, %v1441
  %v1453 = vunpack.c.l.s4 1983009808
  %v1454 = vunpack.c.0.s8 %v1453
  %v1455 = vlaneseq
  %v1456 = vshrl.u32 %v1455, 7
  %v1457 = vsub.s32 %v1454, %v1456
  %v1458 = vrot.slane %v1441, %v1457
  %v1460 = vunpack.c.l.s4 1983009808
  %v1461 = vunpack.c.0.s8 %v1460
  %v1462 = vlaneseq
  %v1463 = vshrl.u32 %v1462, 7
  %v1464 = vsub.s32 %v1461, %v1463
  %v1465 = vrot.slane %v1451, %v1464
  %v1466 = vcombine.high %v1458, %v1458
  %v1467 = vcombine.high %v1465, %v1465
  %v1468 = vcombine.high %v1442, %v1442
  %v1470 = vunpack.c.l.s4 1983009808
  %v1471 = vunpack.c.0.s8 %v1470
  %v1472 = vlaneseq
  %v1473 = vshrl.u32 %v1472, 7
  %v1474 = vsub.s32 %v1471, %v1473
  %v1475 = vrot.slane %v1442, %v1474
  %v1477 = vunpack.c.l.s4 1983009808
  %v1478 = vunpack.c.0.s8 %v1477
  %v1479 = vlaneseq
  %v1480 = vshrl.u32 %v1479, 7
  %v1481 = vsub.s32 %v1478, %v1480
  %v1482 = vrot.slane %v1468, %v1481
  %v1483 = vcombine.high %v1475, %v1475
  %1484 = vrot.lane.b32.xlu0 %v1458, 110
  %v1485 = vpop.permute.xlu0 %1484
  %1486 = vrot.lane.b32.xlu0 %v1466, 110
  %v1487 = vpop.permute.xlu0 %1486
  %1488 = vrot.lane.b32.xlu0 %v1465, 110
  %v1489 = vpop.permute.xlu0 %1488
  %1490 = vrot.lane.b32.xlu0 %v1467, 110
  %v1491 = vpop.permute.xlu0 %1490
  %1492 = vrot.lane.b32.xlu0 %v1475, 110
  %v1493 = vpop.permute.xlu0 %1492
  %1494 = vrot.lane.b32.xlu0 %v1483, 110
  %v1495 = vpop.permute.xlu0 %1494
  %1496 = vrot.lane.b32.xlu0 %v1482, 110
  %v1497 = vpop.permute.xlu0 %1496
  %vm1498 = vcmask 900096
  %v1499 = vsel %vm1498, %v1485, %v1487
  %v1500 = vsel %vm1498, %v1487, %v1489
  %v1501 = vsel %vm1498, %v1489, %v1491
  %v1502 = vsel %vm1498, %v1491, %v1493
  %v1503 = vsel %vm1498, %v1493, %v1495
  %v1504 = vsel %vm1498, %v1495, %v1497
  %v1506 = vsel %vm89, %v1448, 0
  %v1509 = vsel %vm93, %v1499, 0
  %v1512 = vsel %vm93, %v1500, 0
  %v1515 = vsel %vm93, %v1501, 0
  %v1518 = vsel %vm93, %v1502, 0
  %v1521 = vsel %vm93, %v1503, 0
  %v1524 = vsel %vm93, %v1504, 0
  %1526 = vmatprep.subr.bf16.mxu0 %v1512
  %1527 = vmatpush1.bf16.msra.mxu0 %v1509
  %1528 = vmatprep.subr.bf16.mxu0 0
  %1529 = vmatpush1.bf16.msra.mxu0 0
  %1530 = vmatprep.subr.bf16.mxu0 0
  %1531 = vmatpush1.bf16.msra.mxu0 0
  %1532 = vmatprep.subr.bf16.mxu0 0
  %1533 = vmatpush1.bf16.msra.mxu0 0
  %1534 = vmatprep.subr.bf16.mxu0 0
  %1535 = vmatpush1.bf16.msra.mxu0 0
  %1536 = vmatprep.subr.bf16.mxu0 0
  %1537 = vmatpush1.bf16.msra.mxu0 0
  %1538 = vmatprep.subr.bf16.mxu0 0
  %1539 = vmatpush1.bf16.msra.mxu0 0
  %1540 = vmatprep.subr.bf16.mxu0 0
  %1541 = vmatpush1.bf16.msra.mxu0 0
  %1542 = vmatprep.subr.bf16.mxu0 0
  %1543 = vmatpush1.bf16.msra.mxu0 0
  %1544 = vmatprep.subr.bf16.mxu0 0
  %1545 = vmatpush1.bf16.msra.mxu0 0
  %1546 = vmatprep.subr.bf16.mxu0 0
  %1547 = vmatpush1.bf16.msra.mxu0 0
  %1548 = vmatprep.subr.bf16.mxu0 0
  %1549 = vmatpush1.bf16.msra.mxu0 0
  %1550 = vmatprep.subr.bf16.mxu0 0
  %1551 = vmatpush1.bf16.msra.mxu0 0
  %1552 = vmatprep.subr.bf16.mxu0 0
  %1553 = vmatpush1.bf16.msra.mxu0 0
  %1554 = vmatprep.subr.bf16.mxu0 0
  %1555 = vmatpush1.bf16.msra.mxu0 0
  %1556 = vmatprep.subr.bf16.mxu0 0
  %1557 = vmatpush1.bf16.msra.mxu0 0
  %1558 = vmatprep.mubr.bf16.mxu0 0
  %1559 = vmatmul.mubr.bf16.gmra.mrb[0].mxu0 %v1506
  %v1560 = vpop.f32.mrb[0].mxu0
  %v1561 = vadd.f32 0.0, %v1560
  %v1562 = vpop.f32.mrb[0].mxu0
  %v1563 = vadd.f32 0.0, %v1562
  %v1564 = vpop.f32.mrb[0].mxu0
  %v1565 = vpop.f32.mrb[0].mxu0
  %1566 = vdwg.mxu0
  %1567 = vmatprep.subr.bf16.mxu0 %v1518
  %1568 = vmatpush1.bf16.msra.mxu0 %v1515
  %1569 = vmatprep.subr.bf16.mxu0 0
  %1570 = vmatpush1.bf16.msra.mxu0 0
  %1571 = vmatprep.subr.bf16.mxu0 0
  %1572 = vmatpush1.bf16.msra.mxu0 0
  %1573 = vmatprep.subr.bf16.mxu0 0
  %1574 = vmatpush1.bf16.msra.mxu0 0
  %1575 = vmatprep.subr.bf16.mxu0 0
  %1576 = vmatpush1.bf16.msra.mxu0 0
  %1577 = vmatprep.subr.bf16.mxu0 0
  %1578 = vmatpush1.bf16.msra.mxu0 0
  %1579 = vmatprep.subr.bf16.mxu0 0
  %1580 = vmatpush1.bf16.msra.mxu0 0
  %1581 = vmatprep.subr.bf16.mxu0 0
  %1582 = vmatpush1.bf16.msra.mxu0 0
  %1583 = vmatprep.subr.bf16.mxu0 0
  %1584 = vmatpush1.bf16.msra.mxu0 0
  %1585 = vmatprep.subr.bf16.mxu0 0
  %1586 = vmatpush1.bf16.msra.mxu0 0
  %1587 = vmatprep.subr.bf16.mxu0 0
  %1588 = vmatpush1.bf16.msra.mxu0 0
  %1589 = vmatprep.subr.bf16.mxu0 0
  %1590 = vmatpush1.bf16.msra.mxu0 0
  %1591 = vmatprep.subr.bf16.mxu0 0
  %1592 = vmatpush1.bf16.msra.mxu0 0
  %1593 = vmatprep.subr.bf16.mxu0 0
  %1594 = vmatpush1.bf16.msra.mxu0 0
  %1595 = vmatprep.subr.bf16.mxu0 0
  %1596 = vmatpush1.bf16.msra.mxu0 0
  %1597 = vmatprep.subr.bf16.mxu0 0
  %1598 = vmatpush1.bf16.msra.mxu0 0
  %1599 = vmatprep.mubr.bf16.mxu0 0
  %1600 = vmatmul.mubr.bf16.gmra.mrb[0].mxu0 %v1506
  %v1601 = vpop.f32.mrb[0].mxu0
  %v1602 = vadd.f32 0.0, %v1601
  %v1603 = vpop.f32.mrb[0].mxu0
  %v1604 = vadd.f32 0.0, %v1603
  %v1605 = vpop.f32.mrb[0].mxu0
  %v1606 = vpop.f32.mrb[0].mxu0
  %1607 = vdwg.mxu0
  %1608 = vmatprep.subr.bf16.mxu0 %v1524
  %1609 = vmatpush1.bf16.msra.mxu0 %v1521
  %1610 = vmatprep.subr.bf16.mxu0 0
  %1611 = vmatpush1.bf16.msra.mxu0 0
  %1612 = vmatprep.subr.bf16.mxu0 0
  %1613 = vmatpush1.bf16.msra.mxu0 0
  %1614 = vmatprep.subr.bf16.mxu0 0
  %1615 = vmatpush1.bf16.msra.mxu0 0
  %1616 = vmatprep.subr.bf16.mxu0 0
  %1617 = vmatpush1.bf16.msra.mxu0 0
  %1618 = vmatprep.subr.bf16.mxu0 0
  %1619 = vmatpush1.bf16.msra.mxu0 0
  %1620 = vmatprep.subr.bf16.mxu0 0
  %1621 = vmatpush1.bf16.msra.mxu0 0
  %1622 = vmatprep.subr.bf16.mxu0 0
  %1623 = vmatpush1.bf16.msra.mxu0 0
  %1624 = vmatprep.subr.bf16.mxu0 0
  %1625 = vmatpush1.bf16.msra.mxu0 0
  %1626 = vmatprep.subr.bf16.mxu0 0
  %1627 = vmatpush1.bf16.msra.mxu0 0
  %1628 = vmatprep.subr.bf16.mxu0 0
  %1629 = vmatpush1.bf16.msra.mxu0 0
  %1630 = vmatprep.subr.bf16.mxu0 0
  %1631 = vmatpush1.bf16.msra.mxu0 0
  %1632 = vmatprep.subr.bf16.mxu0 0
  %1633 = vmatpush1.bf16.msra.mxu0 0
  %1634 = vmatprep.subr.bf16.mxu0 0
  %1635 = vmatpush1.bf16.msra.mxu0 0
  %1636 = vmatprep.subr.bf16.mxu0 0
  %1637 = vmatpush1.bf16.msra.mxu0 0
  %1638 = vmatprep.subr.bf16.mxu0 0
  %1639 = vmatpush1.bf16.msra.mxu0 0
  %1640 = vmatprep.mubr.bf16.mxu0 0
  %1641 = vmatmul.mubr.bf16.gmra.mrb[0].mxu0 %v1506
  %v1642 = vpop.f32.mrb[0].mxu0
  %v1643 = vadd.f32 0.0, %v1642
  %v1644 = vpop.f32.mrb[0].mxu0
  %v1645 = vadd.f32 0.0, %v1644
  %v1646 = vpop.f32.mrb[0].mxu0
  %v1647 = vpop.f32.mrb[0].mxu0
  %1648 = vdwg.mxu0
  %v1649 = vadd.f32 %v1435, %v1561
  %v1650 = vadd.f32 %v1436, %v1563
  %v1651 = vadd.f32 %v1437, %v1602
  %v1652 = vadd.f32 %v1438, %v1604
  %v1653 = vadd.f32 %v1439, %v1643
  %v1654 = vadd.f32 %v1440, %v1645
  %v1655 = vld [vmem:[%s0 + $0x2] sm:$0xff]
  %v1656 = vld [vmem:[%s0 + $0xa] sm:$0x3f]
  %v1657 = vld [vmem:[%s1] sm:$0xf]
  %v1659 = vunpack.c.l.b16 %v1657
  %v1660 = vpack.c.b16 %v1659, %v1659
  %1661 = vrot.lane.b32.xlu0 %v1660, 96
  %v1662 = vpop.permute.xlu0 %1661
  %v1665 = vcombine.high %v1655, %v1655
  %v1667 = vunpack.c.l.s4 1983009808
  %v1668 = vunpack.c.0.s8 %v1667
  %v1669 = vlaneseq
  %v1670 = vshrl.u32 %v1669, 7
  %v1671 = vsub.s32 %v1668, %v1670
  %v1672 = vrot.slane %v1655, %v1671
  %v1674 = vunpack.c.l.s4 1983009808
  %v1675 = vunpack.c.0.s8 %v1674
  %v1676 = vlaneseq
  %v1677 = vshrl.u32 %v1676, 7
  %v1678 = vsub.s32 %v1675, %v1677
  %v1679 = vrot.slane %v1665, %v1678
  %v1680 = vcombine.high %v1672, %v1672
  %v1681 = vcombine.high %v1679, %v1679
  %v1682 = vcombine.high %v1656, %v1656
  %v1684 = vunpack.c.l.s4 1983009808
  %v1685 = vunpack.c.0.s8 %v1684
  %v1686 = vlaneseq
  %v1687 = vshrl.u32 %v1686, 7
  %v1688 = vsub.s32 %v1685, %v1687
  %v1689 = vrot.slane %v1656, %v1688
  %v1691 = vunpack.c.l.s4 1983009808
  %v1692 = vunpack.c.0.s8 %v1691
  %v1693 = vlaneseq
  %v1694 = vshrl.u32 %v1693, 7
  %v1695 = vsub.s32 %v1692, %v1694
  %v1696 = vrot.slane %v1682, %v1695
  %v1697 = vcombine.high %v1689, %v1689
  %1698 = vrot.lane.b32.xlu0 %v1672, 109
  %v1699 = vpop.permute.xlu0 %1698
  %1700 = vrot.lane.b32.xlu0 %v1680, 109
  %v1701 = vpop.permute.xlu0 %1700
  %1702 = vrot.lane.b32.xlu0 %v1679, 109
  %v1703 = vpop.permute.xlu0 %1702
  %1704 = vrot.lane.b32.xlu0 %v1681, 109
  %v1705 = vpop.permute.xlu0 %1704
  %1706 = vrot.lane.b32.xlu0 %v1689, 109
  %v1707 = vpop.permute.xlu0 %1706
  %1708 = vrot.lane.b32.xlu0 %v1697, 109
  %v1709 = vpop.permute.xlu0 %1708
  %1710 = vrot.lane.b32.xlu0 %v1696, 109
  %v1711 = vpop.permute.xlu0 %1710
  %vm1712 = vcmask 891904
  %v1713 = vsel %vm1712, %v1699, %v1701
  %v1714 = vsel %vm1712, %v1701, %v1703
  %v1715 = vsel %vm1712, %v1703, %v1705
  %v1716 = vsel %vm1712, %v1705, %v1707
  %v1717 = vsel %vm1712, %v1707, %v1709
  %v1718 = vsel %vm1712, %v1709, %v1711
  %v1720 = vsel %vm89, %v1662, 0
  %v1723 = vsel %vm93, %v1713, 0
  %v1726 = vsel %vm93, %v1714, 0
  %v1729 = vsel %vm93, %v1715, 0
  %v1732 = vsel %vm93, %v1716, 0
  %v1735 = vsel %vm93, %v1717, 0
  %v1738 = vsel %vm93, %v1718, 0
  %1740 = vmatprep.subr.bf16.mxu0 %v1726
  %1741 = vmatpush1.bf16.msra.mxu0 %v1723
  %1742 = vmatprep.subr.bf16.mxu0 0
  %1743 = vmatpush1.bf16.msra.mxu0 0
  %1744 = vmatprep.subr.bf16.mxu0 0
  %1745 = vmatpush1.bf16.msra.mxu0 0
  %1746 = vmatprep.subr.bf16.mxu0 0
  %1747 = vmatpush1.bf16.msra.mxu0 0
  %1748 = vmatprep.subr.bf16.mxu0 0
  %1749 = vmatpush1.bf16.msra.mxu0 0
  %1750 = vmatprep.subr.bf16.mxu0 0
  %1751 = vmatpush1.bf16.msra.mxu0 0
  %1752 = vmatprep.subr.bf16.mxu0 0
  %1753 = vmatpush1.bf16.msra.mxu0 0
  %1754 = vmatprep.subr.bf16.mxu0 0
  %1755 = vmatpush1.bf16.msra.mxu0 0
  %1756 = vmatprep.subr.bf16.mxu0 0
  %1757 = vmatpush1.bf16.msra.mxu0 0
  %1758 = vmatprep.subr.bf16.mxu0 0
  %1759 = vmatpush1.bf16.msra.mxu0 0
  %1760 = vmatprep.subr.bf16.mxu0 0
  %1761 = vmatpush1.bf16.msra.mxu0 0
  %1762 = vmatprep.subr.bf16.mxu0 0
  %1763 = vmatpush1.bf16.msra.mxu0 0
  %1764 = vmatprep.subr.bf16.mxu0 0
  %1765 = vmatpush1.bf16.msra.mxu0 0
  %1766 = vmatprep.subr.bf16.mxu0 0
  %1767 = vmatpush1.bf16.msra.mxu0 0
  %1768 = vmatprep.subr.bf16.mxu0 0
  %1769 = vmatpush1.bf16.msra.mxu0 0
  %1770 = vmatprep.subr.bf16.mxu0 0
  %1771 = vmatpush1.bf16.msra.mxu0 0
  %1772 = vmatprep.mubr.bf16.mxu0 0
  %1773 = vmatmul.mubr.bf16.gmra.mrb[0].mxu0 %v1720
  %v1774 = vpop.f32.mrb[0].mxu0
  %v1775 = vadd.f32 0.0, %v1774
  %v1776 = vpop.f32.mrb[0].mxu0
  %v1777 = vadd.f32 0.0, %v1776
  %v1778 = vpop.f32.mrb[0].mxu0
  %v1779 = vpop.f32.mrb[0].mxu0
  %1780 = vdwg.mxu0
  %1781 = vmatprep.subr.bf16.mxu0 %v1732
  %1782 = vmatpush1.bf16.msra.mxu0 %v1729
  %1783 = vmatprep.subr.bf16.mxu0 0
  %1784 = vmatpush1.bf16.msra.mxu0 0
  %1785 = vmatprep.subr.bf16.mxu0 0
  %1786 = vmatpush1.bf16.msra.mxu0 0
  %1787 = vmatprep.subr.bf16.mxu0 0
  %1788 = vmatpush1.bf16.msra.mxu0 0
  %1789 = vmatprep.subr.bf16.mxu0 0
  %1790 = vmatpush1.bf16.msra.mxu0 0
  %1791 = vmatprep.subr.bf16.mxu0 0
  %1792 = vmatpush1.bf16.msra.mxu0 0
  %1793 = vmatprep.subr.bf16.mxu0 0
  %1794 = vmatpush1.bf16.msra.mxu0 0
  %1795 = vmatprep.subr.bf16.mxu0 0
  %1796 = vmatpush1.bf16.msra.mxu0 0
  %1797 = vmatprep.subr.bf16.mxu0 0
  %1798 = vmatpush1.bf16.msra.mxu0 0
  %1799 = vmatprep.subr.bf16.mxu0 0
  %1800 = vmatpush1.bf16.msra.mxu0 0
  %1801 = vmatprep.subr.bf16.mxu0 0
  %1802 = vmatpush1.bf16.msra.mxu0 0
  %1803 = vmatprep.subr.bf16.mxu0 0
  %1804 = vmatpush1.bf16.msra.mxu0 0
  %1805 = vmatprep.subr.bf16.mxu0 0
  %1806 = vmatpush1.bf16.msra.mxu0 0
  %1807 = vmatprep.subr.bf16.mxu0 0
  %1808 = vmatpush1.bf16.msra.mxu0 0
  %1809 = vmatprep.subr.bf16.mxu0 0
  %1810 = vmatpush1.bf16.msra.mxu0 0
  %1811 = vmatprep.subr.bf16.mxu0 0
  %1812 = vmatpush1.bf16.msra.mxu0 0
  %1813 = vmatprep.mubr.bf16.mxu0 0
  %1814 = vmatmul.mubr.bf16.gmra.mrb[0].mxu0 %v1720
  %v1815 = vpop.f32.mrb[0].mxu0
  %v1816 = vadd.f32 0.0, %v1815
  %v1817 = vpop.f32.mrb[0].mxu0
  %v1818 = vadd.f32 0.0, %v1817
  %v1819 = vpop.f32.mrb[0].mxu0
  %v1820 = vpop.f32.mrb[0].mxu0
  %1821 = vdwg.mxu0
  %1822 = vmatprep.subr.bf16.mxu0 %v1738
  %1823 = vmatpush1.bf16.msra.mxu0 %v1735
  %1824 = vmatprep.subr.bf16.mxu0 0
  %1825 = vmatpush1.bf16.msra.mxu0 0
  %1826 = vmatprep.subr.bf16.mxu0 0
  %1827 = vmatpush1.bf16.msra.mxu0 0
  %1828 = vmatprep.subr.bf16.mxu0 0
  %1829 = vmatpush1.bf16.msra.mxu0 0
  %1830 = vmatprep.subr.bf16.mxu0 0
  %1831 = vmatpush1.bf16.msra.mxu0 0
  %1832 = vmatprep.subr.bf16.mxu0 0
  %1833 = vmatpush1.bf16.msra.mxu0 0
  %1834 = vmatprep.subr.bf16.mxu0 0
  %1835 = vmatpush1.bf16.msra.mxu0 0
  %1836 = vmatprep.subr.bf16.mxu0 0
  %1837 = vmatpush1.bf16.msra.mxu0 0
  %1838 = vmatprep.subr.bf16.mxu0 0
  %1839 = vmatpush1.bf16.msra.mxu0 0
  %1840 = vmatprep.subr.bf16.mxu0 0
  %1841 = vmatpush1.bf16.msra.mxu0 0
  %1842 = vmatprep.subr.bf16.mxu0 0
  %1843 = vmatpush1.bf16.msra.mxu0 0
  %1844 = vmatprep.subr.bf16.mxu0 0
  %1845 = vmatpush1.bf16.msra.mxu0 0
  %1846 = vmatprep.subr.bf16.mxu0 0
  %1847 = vmatpush1.bf16.msra.mxu0 0
  %1848 = vmatprep.subr.bf16.mxu0 0
  %1849 = vmatpush1.bf16.msra.mxu0 0
  %1850 = vmatprep.subr.bf16.mxu0 0
  %1851 = vmatpush1.bf16.msra.mxu0 0
  %1852 = vmatprep.subr.bf16.mxu0 0
  %1853 = vmatpush1.bf16.msra.mxu0 0
  %1854 = vmatprep.mubr.bf16.mxu0 0
  %1855 = vmatmul.mubr.bf16.gmra.mrb[0].mxu0 %v1720
  %v1856 = vpop.f32.mrb[0].mxu0
  %v1857 = vadd.f32 0.0, %v1856
  %v1858 = vpop.f32.mrb[0].mxu0
  %v1859 = vadd.f32 0.0, %v1858
  %v1860 = vpop.f32.mrb[0].mxu0
  %v1861 = vpop.f32.mrb[0].mxu0
  %1862 = vdwg.mxu0
  %v1863 = vadd.f32 %v1649, %v1775
  %v1864 = vadd.f32 %v1650, %v1777
  %v1865 = vadd.f32 %v1651, %v1816
  %v1866 = vadd.f32 %v1652, %v1818
  %v1867 = vadd.f32 %v1653, %v1857
  %v1868 = vadd.f32 %v1654, %v1859
  %v1869 = vld [vmem:[%s3] sm:$0xff]
  %1871 = vset.pattern.permute.xlu0 0
  %1872 = vperm.xlu0 %1871, %v1869
  %v1873 = vpop.permute.xlu0 %1872
  %v1875 = vadd.f32 %v1863, %v1873
  %v1876 = vadd.f32 %v1864, %v1873
  %v1877 = vadd.f32 %v1865, %v1873
  %v1878 = vadd.f32 %v1866, %v1873
  %v1879 = vadd.f32 %v1867, %v1873
  %v1880 = vadd.f32 %v1868, %v1873
  %v1882 = vlaneseq
  %v1883 = vshrl.u32 %v1882, 7
  %v1884 = vsub.s32 0, %v1883
  %v1885 = vrot.slane %v24, %v1884
  %v1886 = vlaneseq
  %v1887 = vshrl.u32 %v1886, 7
  %v1888 = vsub.s32 1, %v1887
  %v1889 = vrot.slane %v24, %v1888
  %v1890 = vlaneseq
  %v1891 = vshrl.u32 %v1890, 7
  %v1892 = vsub.s32 2, %v1891
  %v1893 = vrot.slane %v24, %v1892
  %v1894 = vlaneseq
  %v1895 = vshrl.u32 %v1894, 7
  %v1896 = vsub.s32 3, %v1895
  %v1897 = vrot.slane %v24, %v1896
  %v1898 = vlaneseq
  %v1899 = vshrl.u32 %v1898, 7
  %v1900 = vsub.s32 4, %v1899
  %v1901 = vrot.slane %v24, %v1900
  %v1902 = vlaneseq
  %v1903 = vshrl.u32 %v1902, 7
  %v1904 = vsub.s32 5, %v1903
  %v1905 = vrot.slane %v24, %v1904
  %v1912 = vmul.f32 %v1875, %v1885
  %v1913 = vmul.f32 %v1876, %v1889
  %v1914 = vmul.f32 %v1877, %v1893
  %v1915 = vmul.f32 %v1878, %v1897
  %v1916 = vmul.f32 %v1879, %v1901
  %v1917 = vmul.f32 %v1880, %v1905
  %v1918 = vadd.f32 %v1912, %v1913
  %v1919 = vadd.f32 %v1918, %v1914
  %v1920 = vadd.f32 %v1919, %v1915
  %v1921 = vadd.f32 %v1920, %v1916
  %v1922 = vadd.f32 %v1921, %v1917
  %1923 = vadd.xlane.f32.xlu0 %v1922
  %v1924 = vpop.xlane.xlu0 %1923
  %v1925 = vmul.f32 %v1924, 0.001953125
  %v1926 = vsub.f32 %v1875, %v1925
  %v1927 = vsub.f32 %v1876, %v1925
  %v1928 = vsub.f32 %v1877, %v1925
  %v1929 = vsub.f32 %v1878, %v1925
  %v1930 = vsub.f32 %v1879, %v1925
  %v1931 = vsub.f32 %v1880, %v1925
  %v1932 = vmul.f32 %v1926, %v1926
  %v1933 = vmul.f32 %v1927, %v1927
  %v1934 = vmul.f32 %v1928, %v1928
  %v1935 = vmul.f32 %v1929, %v1929
  %v1936 = vmul.f32 %v1930, %v1930
  %v1937 = vmul.f32 %v1931, %v1931
  %v1938 = vmul.f32 %v1932, %v1885
  %v1939 = vmul.f32 %v1933, %v1889
  %v1940 = vmul.f32 %v1934, %v1893
  %v1941 = vmul.f32 %v1935, %v1897
  %v1942 = vmul.f32 %v1936, %v1901
  %v1943 = vmul.f32 %v1937, %v1905
  %v1944 = vadd.f32 %v1938, %v1939
  %v1945 = vadd.f32 %v1944, %v1940
  %v1946 = vadd.f32 %v1945, %v1941
  %v1947 = vadd.f32 %v1946, %v1942
  %v1948 = vadd.f32 %v1947, %v1943
  %1949 = vadd.xlane.f32.xlu0 %v1948
  %v1950 = vpop.xlane.xlu0 %1949
  %v1951 = vmul.f32 %v1950, 0.001953125
  %v1952 = vadd.f32 %v1951, 1e-05
  %v1953 = vrsqrt.pop %v1952
  %v1954 = vmul.f32 %v1926, %v1953
  %v1955 = vmul.f32 %v1927, %v1953
  %v1956 = vmul.f32 %v1928, %v1953
  %v1957 = vmul.f32 %v1929, %v1953
  %v1958 = vmul.f32 %v1930, %v1953
  %v1959 = vmul.f32 %v1931, %v1953
  %1960 = vset.pattern.permute.xlu0 1
  %1961 = vperm.xlu0 %1960, %v1869
  %v1962 = vpop.permute.xlu0 %1961
  %v1964 = vmul.f32 %v1962, %v1954
  %v1965 = vmul.f32 %v1962, %v1955
  %v1966 = vmul.f32 %v1962, %v1956
  %v1967 = vmul.f32 %v1962, %v1957
  %v1968 = vmul.f32 %v1962, %v1958
  %v1969 = vmul.f32 %v1962, %v1959
  %1970 = vset.pattern.permute.xlu0 2
  %1971 = vperm.xlu0 %1970, %v1869
  %v1972 = vpop.permute.xlu0 %1971
  %v1974 = vadd.f32 %v1964, %v1972
  %v1975 = vadd.f32 %v1965, %v1972
  %v1976 = vadd.f32 %v1966, %v1972
  %v1977 = vadd.f32 %v1967, %v1972
  %v1978 = vadd.f32 %v1968, %v1972
  %v1979 = vadd.f32 %v1969, %v1972
  %vm1980 = vcmp.gt.f32.partialorder %v1974, 0.0
  %vm1981 = vcmp.gt.f32.partialorder %v1975, 0.0
  %vm1982 = vcmp.gt.f32.partialorder %v1976, 0.0
  %vm1983 = vcmp.gt.f32.partialorder %v1977, 0.0
  %vm1984 = vcmp.gt.f32.partialorder %v1978, 0.0
  %vm1985 = vcmp.gt.f32.partialorder %v1979, 0.0
  %v1986 = vmul.f32 %v1974, 0.01
  %v1987 = vmul.f32 %v1975, 0.01
  %v1988 = vmul.f32 %v1976, 0.01
  %v1989 = vmul.f32 %v1977, 0.01
  %v1990 = vmul.f32 %v1978, 0.01
  %v1991 = vmul.f32 %v1979, 0.01
  %v1992 = vsel %vm1980, %v1974, %v1986
  %v1993 = vsel %vm1981, %v1975, %v1987
  %v1994 = vsel %vm1982, %v1976, %v1988
  %v1995 = vsel %vm1983, %v1977, %v1989
  %v1996 = vsel %vm1984, %v1978, %v1990
  %v1997 = vsel %vm1985, %v1979, %v1991
  %v1998 = vmul.f32 %v1992, %v1885
  %v1999 = vmul.f32 %v1993, %v1889
  %v2000 = vmul.f32 %v1994, %v1893
  %v2001 = vmul.f32 %v1995, %v1897
  %v2002 = vmul.f32 %v1996, %v1901
  %v2003 = vmul.f32 %v1997, %v1905
  %2004 = vst [vmem:[#allocation2] sm:$0xf] 0
  %2005 = vst [vmem:[#allocation2 + $0x1c] sm:$0xf] 0
  %v2006 = vpack.c.bf16 %v1998, %v1998
  %v2007 = vpack.c.bf16 %v1999, %v1999
  %v2008 = vpack.c.bf16 %v2000, %v2000
  %v2009 = vpack.c.bf16 %v2001, %v2001
  %v2010 = vpack.c.bf16 %v2002, %v2002
  %v2011 = vpack.c.bf16 %v2003, %v2003
  %v2018 = vunpack.c.l.b16 %v2006
  %v2019 = vunpack.c.l.b16 %v2007
  %v2020 = vunpack.c.l.b16 %v2008
  %v2021 = vunpack.c.l.b16 %v2009
  %v2022 = vunpack.c.l.b16 %v2010
  %v2023 = vunpack.c.l.b16 %v2011
  %v2024 = vpack.c.b16 %v2019, %v2018
  %v2025 = vpack.c.b16 %v2021, %v2020
  %v2026 = vpack.c.b16 %v2023, %v2022
  %2030 = vst [vmem:[#allocation2 + $0x4] sm:$0xff] %v2024
  %2031 = vst [vmem:[#allocation2 + $0xc] sm:$0xff] %v2025
  %2032 = vst [vmem:[#allocation2 + $0x14] sm:$0xff] %v2026
  %v2033 = vld [vmem:[#allocation2] sm:$0xff]
  %v2034 = vld [vmem:[#allocation2 + $0x8] sm:$0xff]
  %v2035 = vld [vmem:[#allocation2 + $0x10] sm:$0xff]
  %v2036 = vld [vmem:[#allocation2 + $0x18] sm:$0xf]
  %v2037 = vld [vmem:[%s2] sm:$0xf]
  %v2039 = vunpack.c.l.b16 %v2037
  %v2040 = vpack.c.b16 %v2039, %v2039
  %2041 = vrot.lane.b32.xlu0 %v2040, 120
  %v2042 = vpop.permute.xlu0 %2041
  %v2047 = vunpack.c.l.b16 %v2033
  %v2048 = vunpack.c.h.b16 %v2033
  %v2049 = vunpack.c.l.b16 %v2034
  %v2050 = vunpack.c.h.b16 %v2034
  %v2051 = vunpack.c.l.b16 %v2035
  %v2052 = vunpack.c.h.b16 %v2035
  %v2053 = vunpack.c.l.b16 %v2036
  %v2054 = vpack.c.b16 %v2047, %v2047
  %v2055 = vpack.c.b16 %v2048, %v2048
  %v2056 = vpack.c.b16 %v2049, %v2049
  %v2057 = vpack.c.b16 %v2050, %v2050
  %v2058 = vpack.c.b16 %v2051, %v2051
  %v2059 = vpack.c.b16 %v2052, %v2052
  %v2060 = vpack.c.b16 %v2053, %v2053
  %2061 = vrot.lane.b32.xlu0 %v2054, 18
  %v2062 = vpop.permute.xlu0 %2061
  %2063 = vrot.lane.b32.xlu0 %v2055, 18
  %v2064 = vpop.permute.xlu0 %2063
  %2065 = vrot.lane.b32.xlu0 %v2056, 18
  %v2066 = vpop.permute.xlu0 %2065
  %2067 = vrot.lane.b32.xlu0 %v2057, 18
  %v2068 = vpop.permute.xlu0 %2067
  %2069 = vrot.lane.b32.xlu0 %v2058, 18
  %v2070 = vpop.permute.xlu0 %2069
  %2071 = vrot.lane.b32.xlu0 %v2059, 18
  %v2072 = vpop.permute.xlu0 %2071
  %2073 = vrot.lane.b32.xlu0 %v2060, 18
  %v2074 = vpop.permute.xlu0 %2073
  %v2075 = vsel %vm82, %v2062, %v2064
  %v2076 = vsel %vm82, %v2064, %v2066
  %v2077 = vsel %vm82, %v2066, %v2068
  %v2078 = vsel %vm82, %v2068, %v2070
  %v2079 = vsel %vm82, %v2070, %v2072
  %v2080 = vsel %vm82, %v2072, %v2074
  %vm2081 = vcmask 64512
  %v2083 = vsel %vm2081, %v2042, 0
  %vm2085 = vcmask 1043456
  %v2087 = vsel %vm2085, %v2075, 0
  %v2090 = vsel %vm2085, %v2076, 0
  %v2093 = vsel %vm2085, %v2077, 0
  %v2096 = vsel %vm2085, %v2078, 0
  %v2099 = vsel %vm2085, %v2079, 0
  %v2102 = vsel %vm2085, %v2080, 0
  %2104 = vmatprep.subr.bf16.mxu0 %v2090
  %2105 = vmatpush1.bf16.msra.mxu0 %v2087
  %2106 = vmatprep.subr.bf16.mxu0 0
  %2107 = vmatpush1.bf16.msra.mxu0 0
  %2108 = vmatprep.subr.bf16.mxu0 0
  %2109 = vmatpush1.bf16.msra.mxu0 0
  %2110 = vmatprep.subr.bf16.mxu0 0
  %2111 = vmatpush1.bf16.msra.mxu0 0
  %2112 = vmatprep.subr.bf16.mxu0 0
  %2113 = vmatpush1.bf16.msra.mxu0 0
  %2114 = vmatprep.subr.bf16.mxu0 0
  %2115 = vmatpush1.bf16.msra.mxu0 0
  %2116 = vmatprep.subr.bf16.mxu0 0
  %2117 = vmatpush1.bf16.msra.mxu0 0
  %2118 = vmatprep.subr.bf16.mxu0 0
  %2119 = vmatpush1.bf16.msra.mxu0 0
  %2120 = vmatprep.subr.bf16.mxu0 0
  %2121 = vmatpush1.bf16.msra.mxu0 0
  %2122 = vmatprep.subr.bf16.mxu0 0
  %2123 = vmatpush1.bf16.msra.mxu0 0
  %2124 = vmatprep.subr.bf16.mxu0 0
  %2125 = vmatpush1.bf16.msra.mxu0 0
  %2126 = vmatprep.subr.bf16.mxu0 0
  %2127 = vmatpush1.bf16.msra.mxu0 0
  %2128 = vmatprep.subr.bf16.mxu0 0
  %2129 = vmatpush1.bf16.msra.mxu0 0
  %2130 = vmatprep.subr.bf16.mxu0 0
  %2131 = vmatpush1.bf16.msra.mxu0 0
  %2132 = vmatprep.subr.bf16.mxu0 0
  %2133 = vmatpush1.bf16.msra.mxu0 0
  %2134 = vmatprep.subr.bf16.mxu0 0
  %2135 = vmatpush1.bf16.msra.mxu0 0
  %2136 = vmatprep.mubr.bf16.mxu0 0
  %2137 = vmatmul.mubr.bf16.gmra.mrb[0].mxu0 %v2083
  %v2138 = vpop.f32.mrb[0].mxu0
  %v2139 = vadd.f32 0.0, %v2138
  %v2140 = vpop.f32.mrb[0].mxu0
  %v2141 = vadd.f32 0.0, %v2140
  %v2142 = vpop.f32.mrb[0].mxu0
  %v2143 = vpop.f32.mrb[0].mxu0
  %2144 = vdwg.mxu0
  %2145 = vmatprep.subr.bf16.mxu0 %v2096
  %2146 = vmatpush1.bf16.msra.mxu0 %v2093
  %2147 = vmatprep.subr.bf16.mxu0 0
  %2148 = vmatpush1.bf16.msra.mxu0 0
  %2149 = vmatprep.subr.bf16.mxu0 0
  %2150 = vmatpush1.bf16.msra.mxu0 0
  %2151 = vmatprep.subr.bf16.mxu0 0
  %2152 = vmatpush1.bf16.msra.mxu0 0
  %2153 = vmatprep.subr.bf16.mxu0 0
  %2154 = vmatpush1.bf16.msra.mxu0 0
  %2155 = vmatprep.subr.bf16.mxu0 0
  %2156 = vmatpush1.bf16.msra.mxu0 0
  %2157 = vmatprep.subr.bf16.mxu0 0
  %2158 = vmatpush1.bf16.msra.mxu0 0
  %2159 = vmatprep.subr.bf16.mxu0 0
  %2160 = vmatpush1.bf16.msra.mxu0 0
  %2161 = vmatprep.subr.bf16.mxu0 0
  %2162 = vmatpush1.bf16.msra.mxu0 0
  %2163 = vmatprep.subr.bf16.mxu0 0
  %2164 = vmatpush1.bf16.msra.mxu0 0
  %2165 = vmatprep.subr.bf16.mxu0 0
  %2166 = vmatpush1.bf16.msra.mxu0 0
  %2167 = vmatprep.subr.bf16.mxu0 0
  %2168 = vmatpush1.bf16.msra.mxu0 0
  %2169 = vmatprep.subr.bf16.mxu0 0
  %2170 = vmatpush1.bf16.msra.mxu0 0
  %2171 = vmatprep.subr.bf16.mxu0 0
  %2172 = vmatpush1.bf16.msra.mxu0 0
  %2173 = vmatprep.subr.bf16.mxu0 0
  %2174 = vmatpush1.bf16.msra.mxu0 0
  %2175 = vmatprep.subr.bf16.mxu0 0
  %2176 = vmatpush1.bf16.msra.mxu0 0
  %2177 = vmatprep.mubr.bf16.mxu0 0
  %2178 = vmatmul.mubr.bf16.gmra.mrb[0].mxu0 %v2083
  %v2179 = vpop.f32.mrb[0].mxu0
  %v2180 = vadd.f32 0.0, %v2179
  %v2181 = vpop.f32.mrb[0].mxu0
  %v2182 = vadd.f32 0.0, %v2181
  %v2183 = vpop.f32.mrb[0].mxu0
  %v2184 = vpop.f32.mrb[0].mxu0
  %2185 = vdwg.mxu0
  %2186 = vmatprep.subr.bf16.mxu0 %v2102
  %2187 = vmatpush1.bf16.msra.mxu0 %v2099
  %2188 = vmatprep.subr.bf16.mxu0 0
  %2189 = vmatpush1.bf16.msra.mxu0 0
  %2190 = vmatprep.subr.bf16.mxu0 0
  %2191 = vmatpush1.bf16.msra.mxu0 0
  %2192 = vmatprep.subr.bf16.mxu0 0
  %2193 = vmatpush1.bf16.msra.mxu0 0
  %2194 = vmatprep.subr.bf16.mxu0 0
  %2195 = vmatpush1.bf16.msra.mxu0 0
  %2196 = vmatprep.subr.bf16.mxu0 0
  %2197 = vmatpush1.bf16.msra.mxu0 0
  %2198 = vmatprep.subr.bf16.mxu0 0
  %2199 = vmatpush1.bf16.msra.mxu0 0
  %2200 = vmatprep.subr.bf16.mxu0 0
  %2201 = vmatpush1.bf16.msra.mxu0 0
  %2202 = vmatprep.subr.bf16.mxu0 0
  %2203 = vmatpush1.bf16.msra.mxu0 0
  %2204 = vmatprep.subr.bf16.mxu0 0
  %2205 = vmatpush1.bf16.msra.mxu0 0
  %2206 = vmatprep.subr.bf16.mxu0 0
  %2207 = vmatpush1.bf16.msra.mxu0 0
  %2208 = vmatprep.subr.bf16.mxu0 0
  %2209 = vmatpush1.bf16.msra.mxu0 0
  %2210 = vmatprep.subr.bf16.mxu0 0
  %2211 = vmatpush1.bf16.msra.mxu0 0
  %2212 = vmatprep.subr.bf16.mxu0 0
  %2213 = vmatpush1.bf16.msra.mxu0 0
  %2214 = vmatprep.subr.bf16.mxu0 0
  %2215 = vmatpush1.bf16.msra.mxu0 0
  %2216 = vmatprep.subr.bf16.mxu0 0
  %2217 = vmatpush1.bf16.msra.mxu0 0
  %2218 = vmatprep.mubr.bf16.mxu0 0
  %2219 = vmatmul.mubr.bf16.gmra.mrb[0].mxu0 %v2083
  %v2220 = vpop.f32.mrb[0].mxu0
  %v2221 = vadd.f32 0.0, %v2220
  %v2222 = vpop.f32.mrb[0].mxu0
  %v2223 = vadd.f32 0.0, %v2222
  %v2224 = vpop.f32.mrb[0].mxu0
  %v2225 = vpop.f32.mrb[0].mxu0
  %2226 = vdwg.mxu0
  %2227 = vrot.lane.b32.xlu0 %v2054, 19
  %v2228 = vpop.permute.xlu0 %2227
  %2229 = vrot.lane.b32.xlu0 %v2055, 19
  %v2230 = vpop.permute.xlu0 %2229
  %2231 = vrot.lane.b32.xlu0 %v2056, 19
  %v2232 = vpop.permute.xlu0 %2231
  %2233 = vrot.lane.b32.xlu0 %v2057, 19
  %v2234 = vpop.permute.xlu0 %2233
  %2235 = vrot.lane.b32.xlu0 %v2058, 19
  %v2236 = vpop.permute.xlu0 %2235
  %2237 = vrot.lane.b32.xlu0 %v2059, 19
  %v2238 = vpop.permute.xlu0 %2237
  %2239 = vrot.lane.b32.xlu0 %v2060, 19
  %v2240 = vpop.permute.xlu0 %2239
  %v2241 = vsel %vm249, %v2228, %v2230
  %v2242 = vsel %vm249, %v2230, %v2232
  %v2243 = vsel %vm249, %v2232, %v2234
  %v2244 = vsel %vm249, %v2234, %v2236
  %v2245 = vsel %vm249, %v2236, %v2238
  %v2246 = vsel %vm249, %v2238, %v2240
  %v2248 = vsel %vm2081, %v2037, 0
  %v2251 = vsel %vm2085, %v2241, 0
  %v2254 = vsel %vm2085, %v2242, 0
  %v2257 = vsel %vm2085, %v2243, 0
  %v2260 = vsel %vm2085, %v2244, 0
  %v2263 = vsel %vm2085, %v2245, 0
  %v2266 = vsel %vm2085, %v2246, 0
  %2268 = vmatprep.subr.bf16.mxu0 %v2254
  %2269 = vmatpush1.bf16.msra.mxu0 %v2251
  %2270 = vmatprep.subr.bf16.mxu0 0
  %2271 = vmatpush1.bf16.msra.mxu0 0
  %2272 = vmatprep.subr.bf16.mxu0 0
  %2273 = vmatpush1.bf16.msra.mxu0 0
  %2274 = vmatprep.subr.bf16.mxu0 0
  %2275 = vmatpush1.bf16.msra.mxu0 0
  %2276 = vmatprep.subr.bf16.mxu0 0
  %2277 = vmatpush1.bf16.msra.mxu0 0
  %2278 = vmatprep.subr.bf16.mxu0 0
  %2279 = vmatpush1.bf16.msra.mxu0 0
  %2280 = vmatprep.subr.bf16.mxu0 0
  %2281 = vmatpush1.bf16.msra.mxu0 0
  %2282 = vmatprep.subr.bf16.mxu0 0
  %2283 = vmatpush1.bf16.msra.mxu0 0
  %2284 = vmatprep.subr.bf16.mxu0 0
  %2285 = vmatpush1.bf16.msra.mxu0 0
  %2286 = vmatprep.subr.bf16.mxu0 0
  %2287 = vmatpush1.bf16.msra.mxu0 0
  %2288 = vmatprep.subr.bf16.mxu0 0
  %2289 = vmatpush1.bf16.msra.mxu0 0
  %2290 = vmatprep.subr.bf16.mxu0 0
  %2291 = vmatpush1.bf16.msra.mxu0 0
  %2292 = vmatprep.subr.bf16.mxu0 0
  %2293 = vmatpush1.bf16.msra.mxu0 0
  %2294 = vmatprep.subr.bf16.mxu0 0
  %2295 = vmatpush1.bf16.msra.mxu0 0
  %2296 = vmatprep.subr.bf16.mxu0 0
  %2297 = vmatpush1.bf16.msra.mxu0 0
  %2298 = vmatprep.subr.bf16.mxu0 0
  %2299 = vmatpush1.bf16.msra.mxu0 0
  %2300 = vmatprep.mubr.bf16.mxu0 0
  %2301 = vmatmul.mubr.bf16.gmra.mrb[0].mxu0 %v2248
  %v2302 = vpop.f32.mrb[0].mxu0
  %v2303 = vadd.f32 %v2139, %v2302
  %v2304 = vpop.f32.mrb[0].mxu0
  %v2305 = vadd.f32 %v2141, %v2304
  %v2306 = vpop.f32.mrb[0].mxu0
  %v2307 = vpop.f32.mrb[0].mxu0
  %2308 = vdwg.mxu0
  %2309 = vmatprep.subr.bf16.mxu0 %v2260
  %2310 = vmatpush1.bf16.msra.mxu0 %v2257
  %2311 = vmatprep.subr.bf16.mxu0 0
  %2312 = vmatpush1.bf16.msra.mxu0 0
  %2313 = vmatprep.subr.bf16.mxu0 0
  %2314 = vmatpush1.bf16.msra.mxu0 0
  %2315 = vmatprep.subr.bf16.mxu0 0
  %2316 = vmatpush1.bf16.msra.mxu0 0
  %2317 = vmatprep.subr.bf16.mxu0 0
  %2318 = vmatpush1.bf16.msra.mxu0 0
  %2319 = vmatprep.subr.bf16.mxu0 0
  %2320 = vmatpush1.bf16.msra.mxu0 0
  %2321 = vmatprep.subr.bf16.mxu0 0
  %2322 = vmatpush1.bf16.msra.mxu0 0
  %2323 = vmatprep.subr.bf16.mxu0 0
  %2324 = vmatpush1.bf16.msra.mxu0 0
  %2325 = vmatprep.subr.bf16.mxu0 0
  %2326 = vmatpush1.bf16.msra.mxu0 0
  %2327 = vmatprep.subr.bf16.mxu0 0
  %2328 = vmatpush1.bf16.msra.mxu0 0
  %2329 = vmatprep.subr.bf16.mxu0 0
  %2330 = vmatpush1.bf16.msra.mxu0 0
  %2331 = vmatprep.subr.bf16.mxu0 0
  %2332 = vmatpush1.bf16.msra.mxu0 0
  %2333 = vmatprep.subr.bf16.mxu0 0
  %2334 = vmatpush1.bf16.msra.mxu0 0
  %2335 = vmatprep.subr.bf16.mxu0 0
  %2336 = vmatpush1.bf16.msra.mxu0 0
  %2337 = vmatprep.subr.bf16.mxu0 0
  %2338 = vmatpush1.bf16.msra.mxu0 0
  %2339 = vmatprep.subr.bf16.mxu0 0
  %2340 = vmatpush1.bf16.msra.mxu0 0
  %2341 = vmatprep.mubr.bf16.mxu0 0
  %2342 = vmatmul.mubr.bf16.gmra.mrb[0].mxu0 %v2248
  %v2343 = vpop.f32.mrb[0].mxu0
  %v2344 = vadd.f32 %v2180, %v2343
  %v2345 = vpop.f32.mrb[0].mxu0
  %v2346 = vadd.f32 %v2182, %v2345
  %v2347 = vpop.f32.mrb[0].mxu0
  %v2348 = vpop.f32.mrb[0].mxu0
  %2349 = vdwg.mxu0
  %2350 = vmatprep.subr.bf16.mxu0 %v2266
  %2351 = vmatpush1.bf16.msra.mxu0 %v2263
  %2352 = vmatprep.subr.bf16.mxu0 0
  %2353 = vmatpush1.bf16.msra.mxu0 0
  %2354 = vmatprep.subr.bf16.mxu0 0
  %2355 = vmatpush1.bf16.msra.mxu0 0
  %2356 = vmatprep.subr.bf16.mxu0 0
  %2357 = vmatpush1.bf16.msra.mxu0 0
  %2358 = vmatprep.subr.bf16.mxu0 0
  %2359 = vmatpush1.bf16.msra.mxu0 0
  %2360 = vmatprep.subr.bf16.mxu0 0
  %2361 = vmatpush1.bf16.msra.mxu0 0
  %2362 = vmatprep.subr.bf16.mxu0 0
  %2363 = vmatpush1.bf16.msra.mxu0 0
  %2364 = vmatprep.subr.bf16.mxu0 0
  %2365 = vmatpush1.bf16.msra.mxu0 0
  %2366 = vmatprep.subr.bf16.mxu0 0
  %2367 = vmatpush1.bf16.msra.mxu0 0
  %2368 = vmatprep.subr.bf16.mxu0 0
  %2369 = vmatpush1.bf16.msra.mxu0 0
  %2370 = vmatprep.subr.bf16.mxu0 0
  %2371 = vmatpush1.bf16.msra.mxu0 0
  %2372 = vmatprep.subr.bf16.mxu0 0
  %2373 = vmatpush1.bf16.msra.mxu0 0
  %2374 = vmatprep.subr.bf16.mxu0 0
  %2375 = vmatpush1.bf16.msra.mxu0 0
  %2376 = vmatprep.subr.bf16.mxu0 0
  %2377 = vmatpush1.bf16.msra.mxu0 0
  %2378 = vmatprep.subr.bf16.mxu0 0
  %2379 = vmatpush1.bf16.msra.mxu0 0
  %2380 = vmatprep.subr.bf16.mxu0 0
  %2381 = vmatpush1.bf16.msra.mxu0 0
  %2382 = vmatprep.mubr.bf16.mxu0 0
  %2383 = vmatmul.mubr.bf16.gmra.mrb[0].mxu0 %v2248
  %v2384 = vpop.f32.mrb[0].mxu0
  %v2385 = vadd.f32 %v2221, %v2384
  %v2386 = vpop.f32.mrb[0].mxu0
  %v2387 = vadd.f32 %v2223, %v2386
  %v2388 = vpop.f32.mrb[0].mxu0
  %v2389 = vpop.f32.mrb[0].mxu0
  %2390 = vdwg.mxu0
  %2391 = vrot.lane.b32.xlu0 %v2040, 112
  %v2392 = vpop.permute.xlu0 %2391
  %2393 = vrot.lane.b32.xlu0 %v2054, 17
  %v2394 = vpop.permute.xlu0 %2393
  %2395 = vrot.lane.b32.xlu0 %v2055, 17
  %v2396 = vpop.permute.xlu0 %2395
  %2397 = vrot.lane.b32.xlu0 %v2056, 17
  %v2398 = vpop.permute.xlu0 %2397
  %2399 = vrot.lane.b32.xlu0 %v2057, 17
  %v2400 = vpop.permute.xlu0 %2399
  %2401 = vrot.lane.b32.xlu0 %v2058, 17
  %v2402 = vpop.permute.xlu0 %2401
  %2403 = vrot.lane.b32.xlu0 %v2059, 17
  %v2404 = vpop.permute.xlu0 %2403
  %2405 = vrot.lane.b32.xlu0 %v2060, 17
  %v2406 = vpop.permute.xlu0 %2405
  %v2407 = vsel %vm457, %v2394, %v2396
  %v2408 = vsel %vm457, %v2396, %v2398
  %v2409 = vsel %vm457, %v2398, %v2400
  %v2410 = vsel %vm457, %v2400, %v2402
  %v2411 = vsel %vm457, %v2402, %v2404
  %v2412 = vsel %vm457, %v2404, %v2406
  %v2414 = vsel %vm2081, %v2392, 0
  %v2417 = vsel %vm2085, %v2407, 0
  %v2420 = vsel %vm2085, %v2408, 0
  %v2423 = vsel %vm2085, %v2409, 0
  %v2426 = vsel %vm2085, %v2410, 0
  %v2429 = vsel %vm2085, %v2411, 0
  %v2432 = vsel %vm2085, %v2412, 0
  %2434 = vmatprep.subr.bf16.mxu0 %v2420
  %2435 = vmatpush1.bf16.msra.mxu0 %v2417
  %2436 = vmatprep.subr.bf16.mxu0 0
  %2437 = vmatpush1.bf16.msra.mxu0 0
  %2438 = vmatprep.subr.bf16.mxu0 0
  %2439 = vmatpush1.bf16.msra.mxu0 0
  %2440 = vmatprep.subr.bf16.mxu0 0
  %2441 = vmatpush1.bf16.msra.mxu0 0
  %2442 = vmatprep.subr.bf16.mxu0 0
  %2443 = vmatpush1.bf16.msra.mxu0 0
  %2444 = vmatprep.subr.bf16.mxu0 0
  %2445 = vmatpush1.bf16.msra.mxu0 0
  %2446 = vmatprep.subr.bf16.mxu0 0
  %2447 = vmatpush1.bf16.msra.mxu0 0
  %2448 = vmatprep.subr.bf16.mxu0 0
  %2449 = vmatpush1.bf16.msra.mxu0 0
  %2450 = vmatprep.subr.bf16.mxu0 0
  %2451 = vmatpush1.bf16.msra.mxu0 0
  %2452 = vmatprep.subr.bf16.mxu0 0
  %2453 = vmatpush1.bf16.msra.mxu0 0
  %2454 = vmatprep.subr.bf16.mxu0 0
  %2455 = vmatpush1.bf16.msra.mxu0 0
  %2456 = vmatprep.subr.bf16.mxu0 0
  %2457 = vmatpush1.bf16.msra.mxu0 0
  %2458 = vmatprep.subr.bf16.mxu0 0
  %2459 = vmatpush1.bf16.msra.mxu0 0
  %2460 = vmatprep.subr.bf16.mxu0 0
  %2461 = vmatpush1.bf16.msra.mxu0 0
  %2462 = vmatprep.subr.bf16.mxu0 0
  %2463 = vmatpush1.bf16.msra.mxu0 0
  %2464 = vmatprep.subr.bf16.mxu0 0
  %2465 = vmatpush1.bf16.msra.mxu0 0
  %2466 = vmatprep.mubr.bf16.mxu0 0
  %2467 = vmatmul.mubr.bf16.gmra.mrb[0].mxu0 %v2414
  %v2468 = vpop.f32.mrb[0].mxu0
  %v2469 = vadd.f32 0.0, %v2468
  %v2470 = vpop.f32.mrb[0].mxu0
  %v2471 = vadd.f32 0.0, %v2470
  %v2472 = vpop.f32.mrb[0].mxu0
  %v2473 = vpop.f32.mrb[0].mxu0
  %2474 = vdwg.mxu0
  %2475 = vmatprep.subr.bf16.mxu0 %v2426
  %2476 = vmatpush1.bf16.msra.mxu0 %v2423
  %2477 = vmatprep.subr.bf16.mxu0 0
  %2478 = vmatpush1.bf16.msra.mxu0 0
  %2479 = vmatprep.subr.bf16.mxu0 0
  %2480 = vmatpush1.bf16.msra.mxu0 0
  %2481 = vmatprep.subr.bf16.mxu0 0
  %2482 = vmatpush1.bf16.msra.mxu0 0
  %2483 = vmatprep.subr.bf16.mxu0 0
  %2484 = vmatpush1.bf16.msra.mxu0 0
  %2485 = vmatprep.subr.bf16.mxu0 0
  %2486 = vmatpush1.bf16.msra.mxu0 0
  %2487 = vmatprep.subr.bf16.mxu0 0
  %2488 = vmatpush1.bf16.msra.mxu0 0
  %2489 = vmatprep.subr.bf16.mxu0 0
  %2490 = vmatpush1.bf16.msra.mxu0 0
  %2491 = vmatprep.subr.bf16.mxu0 0
  %2492 = vmatpush1.bf16.msra.mxu0 0
  %2493 = vmatprep.subr.bf16.mxu0 0
  %2494 = vmatpush1.bf16.msra.mxu0 0
  %2495 = vmatprep.subr.bf16.mxu0 0
  %2496 = vmatpush1.bf16.msra.mxu0 0
  %2497 = vmatprep.subr.bf16.mxu0 0
  %2498 = vmatpush1.bf16.msra.mxu0 0
  %2499 = vmatprep.subr.bf16.mxu0 0
  %2500 = vmatpush1.bf16.msra.mxu0 0
  %2501 = vmatprep.subr.bf16.mxu0 0
  %2502 = vmatpush1.bf16.msra.mxu0 0
  %2503 = vmatprep.subr.bf16.mxu0 0
  %2504 = vmatpush1.bf16.msra.mxu0 0
  %2505 = vmatprep.subr.bf16.mxu0 0
  %2506 = vmatpush1.bf16.msra.mxu0 0
  %2507 = vmatprep.mubr.bf16.mxu0 0
  %2508 = vmatmul.mubr.bf16.gmra.mrb[0].mxu0 %v2414
  %v2509 = vpop.f32.mrb[0].mxu0
  %v2510 = vadd.f32 0.0, %v2509
  %v2511 = vpop.f32.mrb[0].mxu0
  %v2512 = vadd.f32 0.0, %v2511
  %v2513 = vpop.f32.mrb[0].mxu0
  %v2514 = vpop.f32.mrb[0].mxu0
  %2515 = vdwg.mxu0
  %2516 = vmatprep.subr.bf16.mxu0 %v2432
  %2517 = vmatpush1.bf16.msra.mxu0 %v2429
  %2518 = vmatprep.subr.bf16.mxu0 0
  %2519 = vmatpush1.bf16.msra.mxu0 0
  %2520 = vmatprep.subr.bf16.mxu0 0
  %2521 = vmatpush1.bf16.msra.mxu0 0
  %2522 = vmatprep.subr.bf16.mxu0 0
  %2523 = vmatpush1.bf16.msra.mxu0 0
  %2524 = vmatprep.subr.bf16.mxu0 0
  %2525 = vmatpush1.bf16.msra.mxu0 0
  %2526 = vmatprep.subr.bf16.mxu0 0
  %2527 = vmatpush1.bf16.msra.mxu0 0
  %2528 = vmatprep.subr.bf16.mxu0 0
  %2529 = vmatpush1.bf16.msra.mxu0 0
  %2530 = vmatprep.subr.bf16.mxu0 0
  %2531 = vmatpush1.bf16.msra.mxu0 0
  %2532 = vmatprep.subr.bf16.mxu0 0
  %2533 = vmatpush1.bf16.msra.mxu0 0
  %2534 = vmatprep.subr.bf16.mxu0 0
  %2535 = vmatpush1.bf16.msra.mxu0 0
  %2536 = vmatprep.subr.bf16.mxu0 0
  %2537 = vmatpush1.bf16.msra.mxu0 0
  %2538 = vmatprep.subr.bf16.mxu0 0
  %2539 = vmatpush1.bf16.msra.mxu0 0
  %2540 = vmatprep.subr.bf16.mxu0 0
  %2541 = vmatpush1.bf16.msra.mxu0 0
  %2542 = vmatprep.subr.bf16.mxu0 0
  %2543 = vmatpush1.bf16.msra.mxu0 0
  %2544 = vmatprep.subr.bf16.mxu0 0
  %2545 = vmatpush1.bf16.msra.mxu0 0
  %2546 = vmatprep.subr.bf16.mxu0 0
  %2547 = vmatpush1.bf16.msra.mxu0 0
  %2548 = vmatprep.mubr.bf16.mxu0 0
  %2549 = vmatmul.mubr.bf16.gmra.mrb[0].mxu0 %v2414
  %v2550 = vpop.f32.mrb[0].mxu0
  %v2551 = vadd.f32 0.0, %v2550
  %v2552 = vpop.f32.mrb[0].mxu0
  %v2553 = vadd.f32 0.0, %v2552
  %v2554 = vpop.f32.mrb[0].mxu0
  %v2555 = vpop.f32.mrb[0].mxu0
  %2556 = vdwg.mxu0
  %v2557 = vadd.f32 %v2303, %v2469
  %v2558 = vadd.f32 %v2305, %v2471
  %v2559 = vadd.f32 %v2344, %v2510
  %v2560 = vadd.f32 %v2346, %v2512
  %v2561 = vadd.f32 %v2385, %v2551
  %v2562 = vadd.f32 %v2387, %v2553
  %2563 = vrot.lane.b32.xlu0 %v2040, 104
  %v2564 = vpop.permute.xlu0 %2563
  %2565 = vrot.lane.b32.xlu0 %v2054, 1
  %v2566 = vpop.permute.xlu0 %2565
  %2567 = vrot.lane.b32.xlu0 %v2055, 1
  %v2568 = vpop.permute.xlu0 %2567
  %2569 = vrot.lane.b32.xlu0 %v2056, 1
  %v2570 = vpop.permute.xlu0 %2569
  %2571 = vrot.lane.b32.xlu0 %v2057, 1
  %v2572 = vpop.permute.xlu0 %2571
  %2573 = vrot.lane.b32.xlu0 %v2058, 1
  %v2574 = vpop.permute.xlu0 %2573
  %2575 = vrot.lane.b32.xlu0 %v2059, 1
  %v2576 = vpop.permute.xlu0 %2575
  %2577 = vrot.lane.b32.xlu0 %v2060, 1
  %v2578 = vpop.permute.xlu0 %2577
  %v2579 = vsel %vm671, %v2566, %v2568
  %v2580 = vsel %vm671, %v2568, %v2570
  %v2581 = vsel %vm671, %v2570, %v2572
  %v2582 = vsel %vm671, %v2572, %v2574
  %v2583 = vsel %vm671, %v2574, %v2576
  %v2584 = vsel %vm671, %v2576, %v2578
  %v2586 = vsel %vm2081, %v2564, 0
  %v2589 = vsel %vm2085, %v2579, 0
  %v2592 = vsel %vm2085, %v2580, 0
  %v2595 = vsel %vm2085, %v2581, 0
  %v2598 = vsel %vm2085, %v2582, 0
  %v2601 = vsel %vm2085, %v2583, 0
  %v2604 = vsel %vm2085, %v2584, 0
  %2606 = vmatprep.subr.bf16.mxu0 %v2592
  %2607 = vmatpush1.bf16.msra.mxu0 %v2589
  %2608 = vmatprep.subr.bf16.mxu0 0
  %2609 = vmatpush1.bf16.msra.mxu0 0
  %2610 = vmatprep.subr.bf16.mxu0 0
  %2611 = vmatpush1.bf16.msra.mxu0 0
  %2612 = vmatprep.subr.bf16.mxu0 0
  %2613 = vmatpush1.bf16.msra.mxu0 0
  %2614 = vmatprep.subr.bf16.mxu0 0
  %2615 = vmatpush1.bf16.msra.mxu0 0
  %2616 = vmatprep.subr.bf16.mxu0 0
  %2617 = vmatpush1.bf16.msra.mxu0 0
  %2618 = vmatprep.subr.bf16.mxu0 0
  %2619 = vmatpush1.bf16.msra.mxu0 0
  %2620 = vmatprep.subr.bf16.mxu0 0
  %2621 = vmatpush1.bf16.msra.mxu0 0
  %2622 = vmatprep.subr.bf16.mxu0 0
  %2623 = vmatpush1.bf16.msra.mxu0 0
  %2624 = vmatprep.subr.bf16.mxu0 0
  %2625 = vmatpush1.bf16.msra.mxu0 0
  %2626 = vmatprep.subr.bf16.mxu0 0
  %2627 = vmatpush1.bf16.msra.mxu0 0
  %2628 = vmatprep.subr.bf16.mxu0 0
  %2629 = vmatpush1.bf16.msra.mxu0 0
  %2630 = vmatprep.subr.bf16.mxu0 0
  %2631 = vmatpush1.bf16.msra.mxu0 0
  %2632 = vmatprep.subr.bf16.mxu0 0
  %2633 = vmatpush1.bf16.msra.mxu0 0
  %2634 = vmatprep.subr.bf16.mxu0 0
  %2635 = vmatpush1.bf16.msra.mxu0 0
  %2636 = vmatprep.subr.bf16.mxu0 0
  %2637 = vmatpush1.bf16.msra.mxu0 0
  %2638 = vmatprep.mubr.bf16.mxu0 0
  %2639 = vmatmul.mubr.bf16.gmra.mrb[0].mxu0 %v2586
  %v2640 = vpop.f32.mrb[0].mxu0
  %v2641 = vadd.f32 0.0, %v2640
  %v2642 = vpop.f32.mrb[0].mxu0
  %v2643 = vadd.f32 0.0, %v2642
  %v2644 = vpop.f32.mrb[0].mxu0
  %v2645 = vpop.f32.mrb[0].mxu0
  %2646 = vdwg.mxu0
  %2647 = vmatprep.subr.bf16.mxu0 %v2598
  %2648 = vmatpush1.bf16.msra.mxu0 %v2595
  %2649 = vmatprep.subr.bf16.mxu0 0
  %2650 = vmatpush1.bf16.msra.mxu0 0
  %2651 = vmatprep.subr.bf16.mxu0 0
  %2652 = vmatpush1.bf16.msra.mxu0 0
  %2653 = vmatprep.subr.bf16.mxu0 0
  %2654 = vmatpush1.bf16.msra.mxu0 0
  %2655 = vmatprep.subr.bf16.mxu0 0
  %2656 = vmatpush1.bf16.msra.mxu0 0
  %2657 = vmatprep.subr.bf16.mxu0 0
  %2658 = vmatpush1.bf16.msra.mxu0 0
  %2659 = vmatprep.subr.bf16.mxu0 0
  %2660 = vmatpush1.bf16.msra.mxu0 0
  %2661 = vmatprep.subr.bf16.mxu0 0
  %2662 = vmatpush1.bf16.msra.mxu0 0
  %2663 = vmatprep.subr.bf16.mxu0 0
  %2664 = vmatpush1.bf16.msra.mxu0 0
  %2665 = vmatprep.subr.bf16.mxu0 0
  %2666 = vmatpush1.bf16.msra.mxu0 0
  %2667 = vmatprep.subr.bf16.mxu0 0
  %2668 = vmatpush1.bf16.msra.mxu0 0
  %2669 = vmatprep.subr.bf16.mxu0 0
  %2670 = vmatpush1.bf16.msra.mxu0 0
  %2671 = vmatprep.subr.bf16.mxu0 0
  %2672 = vmatpush1.bf16.msra.mxu0 0
  %2673 = vmatprep.subr.bf16.mxu0 0
  %2674 = vmatpush1.bf16.msra.mxu0 0
  %2675 = vmatprep.subr.bf16.mxu0 0
  %2676 = vmatpush1.bf16.msra.mxu0 0
  %2677 = vmatprep.subr.bf16.mxu0 0
  %2678 = vmatpush1.bf16.msra.mxu0 0
  %2679 = vmatprep.mubr.bf16.mxu0 0
  %2680 = vmatmul.mubr.bf16.gmra.mrb[0].mxu0 %v2586
  %v2681 = vpop.f32.mrb[0].mxu0
  %v2682 = vadd.f32 0.0, %v2681
  %v2683 = vpop.f32.mrb[0].mxu0
  %v2684 = vadd.f32 0.0, %v2683
  %v2685 = vpop.f32.mrb[0].mxu0
  %v2686 = vpop.f32.mrb[0].mxu0
  %2687 = vdwg.mxu0
  %2688 = vmatprep.subr.bf16.mxu0 %v2604
  %2689 = vmatpush1.bf16.msra.mxu0 %v2601
  %2690 = vmatprep.subr.bf16.mxu0 0
  %2691 = vmatpush1.bf16.msra.mxu0 0
  %2692 = vmatprep.subr.bf16.mxu0 0
  %2693 = vmatpush1.bf16.msra.mxu0 0
  %2694 = vmatprep.subr.bf16.mxu0 0
  %2695 = vmatpush1.bf16.msra.mxu0 0
  %2696 = vmatprep.subr.bf16.mxu0 0
  %2697 = vmatpush1.bf16.msra.mxu0 0
  %2698 = vmatprep.subr.bf16.mxu0 0
  %2699 = vmatpush1.bf16.msra.mxu0 0
  %2700 = vmatprep.subr.bf16.mxu0 0
  %2701 = vmatpush1.bf16.msra.mxu0 0
  %2702 = vmatprep.subr.bf16.mxu0 0
  %2703 = vmatpush1.bf16.msra.mxu0 0
  %2704 = vmatprep.subr.bf16.mxu0 0
  %2705 = vmatpush1.bf16.msra.mxu0 0
  %2706 = vmatprep.subr.bf16.mxu0 0
  %2707 = vmatpush1.bf16.msra.mxu0 0
  %2708 = vmatprep.subr.bf16.mxu0 0
  %2709 = vmatpush1.bf16.msra.mxu0 0
  %2710 = vmatprep.subr.bf16.mxu0 0
  %2711 = vmatpush1.bf16.msra.mxu0 0
  %2712 = vmatprep.subr.bf16.mxu0 0
  %2713 = vmatpush1.bf16.msra.mxu0 0
  %2714 = vmatprep.subr.bf16.mxu0 0
  %2715 = vmatpush1.bf16.msra.mxu0 0
  %2716 = vmatprep.subr.bf16.mxu0 0
  %2717 = vmatpush1.bf16.msra.mxu0 0
  %2718 = vmatprep.subr.bf16.mxu0 0
  %2719 = vmatpush1.bf16.msra.mxu0 0
  %2720 = vmatprep.mubr.bf16.mxu0 0
  %2721 = vmatmul.mubr.bf16.gmra.mrb[0].mxu0 %v2586
  %v2722 = vpop.f32.mrb[0].mxu0
  %v2723 = vadd.f32 0.0, %v2722
  %v2724 = vpop.f32.mrb[0].mxu0
  %v2725 = vadd.f32 0.0, %v2724
  %v2726 = vpop.f32.mrb[0].mxu0
  %v2727 = vpop.f32.mrb[0].mxu0
  %2728 = vdwg.mxu0
  %v2729 = vadd.f32 %v2557, %v2641
  %v2730 = vadd.f32 %v2558, %v2643
  %v2731 = vadd.f32 %v2559, %v2682
  %v2732 = vadd.f32 %v2560, %v2684
  %v2733 = vadd.f32 %v2561, %v2723
  %v2734 = vadd.f32 %v2562, %v2725
  %v2735 = vld [vmem:[#allocation2 + $0x4] sm:$0xff]
  %v2736 = vld [vmem:[#allocation2 + $0xc] sm:$0xff]
  %v2737 = vld [vmem:[#allocation2 + $0x14] sm:$0xff]
  %2738 = vrot.lane.b32.xlu0 %v2040, 96
  %v2739 = vpop.permute.xlu0 %2738
  %v2743 = vunpack.c.l.b16 %v2735
  %v2744 = vunpack.c.h.b16 %v2735
  %v2745 = vunpack.c.l.b16 %v2736
  %v2746 = vunpack.c.h.b16 %v2736
  %v2747 = vunpack.c.l.b16 %v2737
  %v2748 = vunpack.c.h.b16 %v2737
  %v2749 = vpack.c.b16 %v2743, %v2743
  %v2750 = vpack.c.b16 %v2744, %v2744
  %v2751 = vpack.c.b16 %v2745, %v2745
  %v2752 = vpack.c.b16 %v2746, %v2746
  %v2753 = vpack.c.b16 %v2747, %v2747
  %v2754 = vpack.c.b16 %v2748, %v2748
  %v2756 = vsel %vm2081, %v2739, 0
  %v2759 = vsel %vm2085, %v2749, 0
  %v2762 = vsel %vm2085, %v2750, 0
  %v2765 = vsel %vm2085, %v2751, 0
  %v2768 = vsel %vm2085, %v2752, 0
  %v2771 = vsel %vm2085, %v2753, 0
  %v2774 = vsel %vm2085, %v2754, 0
  %2776 = vmatprep.subr.bf16.mxu0 %v2762
  %2777 = vmatpush1.bf16.msra.mxu0 %v2759
  %2778 = vmatprep.subr.bf16.mxu0 0
  %2779 = vmatpush1.bf16.msra.mxu0 0
  %2780 = vmatprep.subr.bf16.mxu0 0
  %2781 = vmatpush1.bf16.msra.mxu0 0
  %2782 = vmatprep.subr.bf16.mxu0 0
  %2783 = vmatpush1.bf16.msra.mxu0 0
  %2784 = vmatprep.subr.bf16.mxu0 0
  %2785 = vmatpush1.bf16.msra.mxu0 0
  %2786 = vmatprep.subr.bf16.mxu0 0
  %2787 = vmatpush1.bf16.msra.mxu0 0
  %2788 = vmatprep.subr.bf16.mxu0 0
  %2789 = vmatpush1.bf16.msra.mxu0 0
  %2790 = vmatprep.subr.bf16.mxu0 0
  %2791 = vmatpush1.bf16.msra.mxu0 0
  %2792 = vmatprep.subr.bf16.mxu0 0
  %2793 = vmatpush1.bf16.msra.mxu0 0
  %2794 = vmatprep.subr.bf16.mxu0 0
  %2795 = vmatpush1.bf16.msra.mxu0 0
  %2796 = vmatprep.subr.bf16.mxu0 0
  %2797 = vmatpush1.bf16.msra.mxu0 0
  %2798 = vmatprep.subr.bf16.mxu0 0
  %2799 = vmatpush1.bf16.msra.mxu0 0
  %2800 = vmatprep.subr.bf16.mxu0 0
  %2801 = vmatpush1.bf16.msra.mxu0 0
  %2802 = vmatprep.subr.bf16.mxu0 0
  %2803 = vmatpush1.bf16.msra.mxu0 0
  %2804 = vmatprep.subr.bf16.mxu0 0
  %2805 = vmatpush1.bf16.msra.mxu0 0
  %2806 = vmatprep.subr.bf16.mxu0 0
  %2807 = vmatpush1.bf16.msra.mxu0 0
  %2808 = vmatprep.mubr.bf16.mxu0 0
  %2809 = vmatmul.mubr.bf16.gmra.mrb[0].mxu0 %v2756
  %v2810 = vpop.f32.mrb[0].mxu0
  %v2811 = vadd.f32 0.0, %v2810
  %v2812 = vpop.f32.mrb[0].mxu0
  %v2813 = vadd.f32 0.0, %v2812
  %v2814 = vpop.f32.mrb[0].mxu0
  %v2815 = vpop.f32.mrb[0].mxu0
  %2816 = vdwg.mxu0
  %2817 = vmatprep.subr.bf16.mxu0 %v2768
  %2818 = vmatpush1.bf16.msra.mxu0 %v2765
  %2819 = vmatprep.subr.bf16.mxu0 0
  %2820 = vmatpush1.bf16.msra.mxu0 0
  %2821 = vmatprep.subr.bf16.mxu0 0
  %2822 = vmatpush1.bf16.msra.mxu0 0
  %2823 = vmatprep.subr.bf16.mxu0 0
  %2824 = vmatpush1.bf16.msra.mxu0 0
  %2825 = vmatprep.subr.bf16.mxu0 0
  %2826 = vmatpush1.bf16.msra.mxu0 0
  %2827 = vmatprep.subr.bf16.mxu0 0
  %2828 = vmatpush1.bf16.msra.mxu0 0
  %2829 = vmatprep.subr.bf16.mxu0 0
  %2830 = vmatpush1.bf16.msra.mxu0 0
  %2831 = vmatprep.subr.bf16.mxu0 0
  %2832 = vmatpush1.bf16.msra.mxu0 0
  %2833 = vmatprep.subr.bf16.mxu0 0
  %2834 = vmatpush1.bf16.msra.mxu0 0
  %2835 = vmatprep.subr.bf16.mxu0 0
  %2836 = vmatpush1.bf16.msra.mxu0 0
  %2837 = vmatprep.subr.bf16.mxu0 0
  %2838 = vmatpush1.bf16.msra.mxu0 0
  %2839 = vmatprep.subr.bf16.mxu0 0
  %2840 = vmatpush1.bf16.msra.mxu0 0
  %2841 = vmatprep.subr.bf16.mxu0 0
  %2842 = vmatpush1.bf16.msra.mxu0 0
  %2843 = vmatprep.subr.bf16.mxu0 0
  %2844 = vmatpush1.bf16.msra.mxu0 0
  %2845 = vmatprep.subr.bf16.mxu0 0
  %2846 = vmatpush1.bf16.msra.mxu0 0
  %2847 = vmatprep.subr.bf16.mxu0 0
  %2848 = vmatpush1.bf16.msra.mxu0 0
  %2849 = vmatprep.mubr.bf16.mxu0 0
  %2850 = vmatmul.mubr.bf16.gmra.mrb[0].mxu0 %v2756
  %v2851 = vpop.f32.mrb[0].mxu0
  %v2852 = vadd.f32 0.0, %v2851
  %v2853 = vpop.f32.mrb[0].mxu0
  %v2854 = vadd.f32 0.0, %v2853
  %v2855 = vpop.f32.mrb[0].mxu0
  %v2856 = vpop.f32.mrb[0].mxu0
  %2857 = vdwg.mxu0
  %2858 = vmatprep.subr.bf16.mxu0 %v2774
  %2859 = vmatpush1.bf16.msra.mxu0 %v2771
  %2860 = vmatprep.subr.bf16.mxu0 0
  %2861 = vmatpush1.bf16.msra.mxu0 0
  %2862 = vmatprep.subr.bf16.mxu0 0
  %2863 = vmatpush1.bf16.msra.mxu0 0
  %2864 = vmatprep.subr.bf16.mxu0 0
  %2865 = vmatpush1.bf16.msra.mxu0 0
  %2866 = vmatprep.subr.bf16.mxu0 0
  %2867 = vmatpush1.bf16.msra.mxu0 0
  %2868 = vmatprep.subr.bf16.mxu0 0
  %2869 = vmatpush1.bf16.msra.mxu0 0
  %2870 = vmatprep.subr.bf16.mxu0 0
  %2871 = vmatpush1.bf16.msra.mxu0 0
  %2872 = vmatprep.subr.bf16.mxu0 0
  %2873 = vmatpush1.bf16.msra.mxu0 0
  %2874 = vmatprep.subr.bf16.mxu0 0
  %2875 = vmatpush1.bf16.msra.mxu0 0
  %2876 = vmatprep.subr.bf16.mxu0 0
  %2877 = vmatpush1.bf16.msra.mxu0 0
  %2878 = vmatprep.subr.bf16.mxu0 0
  %2879 = vmatpush1.bf16.msra.mxu0 0
  %2880 = vmatprep.subr.bf16.mxu0 0
  %2881 = vmatpush1.bf16.msra.mxu0 0
  %2882 = vmatprep.subr.bf16.mxu0 0
  %2883 = vmatpush1.bf16.msra.mxu0 0
  %2884 = vmatprep.subr.bf16.mxu0 0
  %2885 = vmatpush1.bf16.msra.mxu0 0
  %2886 = vmatprep.subr.bf16.mxu0 0
  %2887 = vmatpush1.bf16.msra.mxu0 0
  %2888 = vmatprep.subr.bf16.mxu0 0
  %2889 = vmatpush1.bf16.msra.mxu0 0
  %2890 = vmatprep.mubr.bf16.mxu0 0
  %2891 = vmatmul.mubr.bf16.gmra.mrb[0].mxu0 %v2756
  %v2892 = vpop.f32.mrb[0].mxu0
  %v2893 = vadd.f32 0.0, %v2892
  %v2894 = vpop.f32.mrb[0].mxu0
  %v2895 = vadd.f32 0.0, %v2894
  %v2896 = vpop.f32.mrb[0].mxu0
  %v2897 = vpop.f32.mrb[0].mxu0
  %2898 = vdwg.mxu0
  %v2899 = vadd.f32 %v2729, %v2811
  %v2900 = vadd.f32 %v2730, %v2813
  %v2901 = vadd.f32 %v2731, %v2852
  %v2902 = vadd.f32 %v2732, %v2854
  %v2903 = vadd.f32 %v2733, %v2893
  %v2904 = vadd.f32 %v2734, %v2895
  %v2905 = vld [vmem:[#allocation2 + $0x4] sm:$0xff]
  %v2906 = vld [vmem:[#allocation2 + $0xc] sm:$0xff]
  %v2907 = vld [vmem:[#allocation2 + $0x14] sm:$0xff]
  %v2908 = vld [vmem:[#allocation2 + $0x1c] sm:$0xf]
  %2909 = vrot.lane.b32.xlu0 %v2040, 88
  %v2910 = vpop.permute.xlu0 %2909
  %v2915 = vunpack.c.l.b16 %v2905
  %v2916 = vunpack.c.h.b16 %v2905
  %v2917 = vunpack.c.l.b16 %v2906
  %v2918 = vunpack.c.h.b16 %v2906
  %v2919 = vunpack.c.l.b16 %v2907
  %v2920 = vunpack.c.h.b16 %v2907
  %v2921 = vunpack.c.l.b16 %v2908
  %v2922 = vpack.c.b16 %v2915, %v2915
  %v2923 = vpack.c.b16 %v2916, %v2916
  %v2924 = vpack.c.b16 %v2917, %v2917
  %v2925 = vpack.c.b16 %v2918, %v2918
  %v2926 = vpack.c.b16 %v2919, %v2919
  %v2927 = vpack.c.b16 %v2920, %v2920
  %v2928 = vpack.c.b16 %v2921, %v2921
  %2929 = vrot.lane.b32.xlu0 %v2922, 127
  %v2930 = vpop.permute.xlu0 %2929
  %2931 = vrot.lane.b32.xlu0 %v2923, 127
  %v2932 = vpop.permute.xlu0 %2931
  %2933 = vrot.lane.b32.xlu0 %v2924, 127
  %v2934 = vpop.permute.xlu0 %2933
  %2935 = vrot.lane.b32.xlu0 %v2925, 127
  %v2936 = vpop.permute.xlu0 %2935
  %2937 = vrot.lane.b32.xlu0 %v2926, 127
  %v2938 = vpop.permute.xlu0 %2937
  %2939 = vrot.lane.b32.xlu0 %v2927, 127
  %v2940 = vpop.permute.xlu0 %2939
  %2941 = vrot.lane.b32.xlu0 %v2928, 127
  %v2942 = vpop.permute.xlu0 %2941
  %v2943 = vsel %vm1070, %v2930, %v2932
  %v2944 = vsel %vm1070, %v2932, %v2934
  %v2945 = vsel %vm1070, %v2934, %v2936
  %v2946 = vsel %vm1070, %v2936, %v2938
  %v2947 = vsel %vm1070, %v2938, %v2940
  %v2948 = vsel %vm1070, %v2940, %v2942
  %v2950 = vsel %vm2081, %v2910, 0
  %v2953 = vsel %vm2085, %v2943, 0
  %v2956 = vsel %vm2085, %v2944, 0
  %v2959 = vsel %vm2085, %v2945, 0
  %v2962 = vsel %vm2085, %v2946, 0
  %v2965 = vsel %vm2085, %v2947, 0
  %v2968 = vsel %vm2085, %v2948, 0
  %2970 = vmatprep.subr.bf16.mxu0 %v2956
  %2971 = vmatpush1.bf16.msra.mxu0 %v2953
  %2972 = vmatprep.subr.bf16.mxu0 0
  %2973 = vmatpush1.bf16.msra.mxu0 0
  %2974 = vmatprep.subr.bf16.mxu0 0
  %2975 = vmatpush1.bf16.msra.mxu0 0
  %2976 = vmatprep.subr.bf16.mxu0 0
  %2977 = vmatpush1.bf16.msra.mxu0 0
  %2978 = vmatprep.subr.bf16.mxu0 0
  %2979 = vmatpush1.bf16.msra.mxu0 0
  %2980 = vmatprep.subr.bf16.mxu0 0
  %2981 = vmatpush1.bf16.msra.mxu0 0
  %2982 = vmatprep.subr.bf16.mxu0 0
  %2983 = vmatpush1.bf16.msra.mxu0 0
  %2984 = vmatprep.subr.bf16.mxu0 0
  %2985 = vmatpush1.bf16.msra.mxu0 0
  %2986 = vmatprep.subr.bf16.mxu0 0
  %2987 = vmatpush1.bf16.msra.mxu0 0
  %2988 = vmatprep.subr.bf16.mxu0 0
  %2989 = vmatpush1.bf16.msra.mxu0 0
  %2990 = vmatprep.subr.bf16.mxu0 0
  %2991 = vmatpush1.bf16.msra.mxu0 0
  %2992 = vmatprep.subr.bf16.mxu0 0
  %2993 = vmatpush1.bf16.msra.mxu0 0
  %2994 = vmatprep.subr.bf16.mxu0 0
  %2995 = vmatpush1.bf16.msra.mxu0 0
  %2996 = vmatprep.subr.bf16.mxu0 0
  %2997 = vmatpush1.bf16.msra.mxu0 0
  %2998 = vmatprep.subr.bf16.mxu0 0
  %2999 = vmatpush1.bf16.msra.mxu0 0
  %3000 = vmatprep.subr.bf16.mxu0 0
  %3001 = vmatpush1.bf16.msra.mxu0 0
  %3002 = vmatprep.mubr.bf16.mxu0 0
  %3003 = vmatmul.mubr.bf16.gmra.mrb[0].mxu0 %v2950
  %v3004 = vpop.f32.mrb[0].mxu0
  %v3005 = vadd.f32 0.0, %v3004
  %v3006 = vpop.f32.mrb[0].mxu0
  %v3007 = vadd.f32 0.0, %v3006
  %v3008 = vpop.f32.mrb[0].mxu0
  %v3009 = vpop.f32.mrb[0].mxu0
  %3010 = vdwg.mxu0
  %3011 = vmatprep.subr.bf16.mxu0 %v2962
  %3012 = vmatpush1.bf16.msra.mxu0 %v2959
  %3013 = vmatprep.subr.bf16.mxu0 0
  %3014 = vmatpush1.bf16.msra.mxu0 0
  %3015 = vmatprep.subr.bf16.mxu0 0
  %3016 = vmatpush1.bf16.msra.mxu0 0
  %3017 = vmatprep.subr.bf16.mxu0 0
  %3018 = vmatpush1.bf16.msra.mxu0 0
  %3019 = vmatprep.subr.bf16.mxu0 0
  %3020 = vmatpush1.bf16.msra.mxu0 0
  %3021 = vmatprep.subr.bf16.mxu0 0
  %3022 = vmatpush1.bf16.msra.mxu0 0
  %3023 = vmatprep.subr.bf16.mxu0 0
  %3024 = vmatpush1.bf16.msra.mxu0 0
  %3025 = vmatprep.subr.bf16.mxu0 0
  %3026 = vmatpush1.bf16.msra.mxu0 0
  %3027 = vmatprep.subr.bf16.mxu0 0
  %3028 = vmatpush1.bf16.msra.mxu0 0
  %3029 = vmatprep.subr.bf16.mxu0 0
  %3030 = vmatpush1.bf16.msra.mxu0 0
  %3031 = vmatprep.subr.bf16.mxu0 0
  %3032 = vmatpush1.bf16.msra.mxu0 0
  %3033 = vmatprep.subr.bf16.mxu0 0
  %3034 = vmatpush1.bf16.msra.mxu0 0
  %3035 = vmatprep.subr.bf16.mxu0 0
  %3036 = vmatpush1.bf16.msra.mxu0 0
  %3037 = vmatprep.subr.bf16.mxu0 0
  %3038 = vmatpush1.bf16.msra.mxu0 0
  %3039 = vmatprep.subr.bf16.mxu0 0
  %3040 = vmatpush1.bf16.msra.mxu0 0
  %3041 = vmatprep.subr.bf16.mxu0 0
  %3042 = vmatpush1.bf16.msra.mxu0 0
  %3043 = vmatprep.mubr.bf16.mxu0 0
  %3044 = vmatmul.mubr.bf16.gmra.mrb[0].mxu0 %v2950
  %v3045 = vpop.f32.mrb[0].mxu0
  %v3046 = vadd.f32 0.0, %v3045
  %v3047 = vpop.f32.mrb[0].mxu0
  %v3048 = vadd.f32 0.0, %v3047
  %v3049 = vpop.f32.mrb[0].mxu0
  %v3050 = vpop.f32.mrb[0].mxu0
  %3051 = vdwg.mxu0
  %3052 = vmatprep.subr.bf16.mxu0 %v2968
  %3053 = vmatpush1.bf16.msra.mxu0 %v2965
  %3054 = vmatprep.subr.bf16.mxu0 0
  %3055 = vmatpush1.bf16.msra.mxu0 0
  %3056 = vmatprep.subr.bf16.mxu0 0
  %3057 = vmatpush1.bf16.msra.mxu0 0
  %3058 = vmatprep.subr.bf16.mxu0 0
  %3059 = vmatpush1.bf16.msra.mxu0 0
  %3060 = vmatprep.subr.bf16.mxu0 0
  %3061 = vmatpush1.bf16.msra.mxu0 0
  %3062 = vmatprep.subr.bf16.mxu0 0
  %3063 = vmatpush1.bf16.msra.mxu0 0
  %3064 = vmatprep.subr.bf16.mxu0 0
  %3065 = vmatpush1.bf16.msra.mxu0 0
  %3066 = vmatprep.subr.bf16.mxu0 0
  %3067 = vmatpush1.bf16.msra.mxu0 0
  %3068 = vmatprep.subr.bf16.mxu0 0
  %3069 = vmatpush1.bf16.msra.mxu0 0
  %3070 = vmatprep.subr.bf16.mxu0 0
  %3071 = vmatpush1.bf16.msra.mxu0 0
  %3072 = vmatprep.subr.bf16.mxu0 0
  %3073 = vmatpush1.bf16.msra.mxu0 0
  %3074 = vmatprep.subr.bf16.mxu0 0
  %3075 = vmatpush1.bf16.msra.mxu0 0
  %3076 = vmatprep.subr.bf16.mxu0 0
  %3077 = vmatpush1.bf16.msra.mxu0 0
  %3078 = vmatprep.subr.bf16.mxu0 0
  %3079 = vmatpush1.bf16.msra.mxu0 0
  %3080 = vmatprep.subr.bf16.mxu0 0
  %3081 = vmatpush1.bf16.msra.mxu0 0
  %3082 = vmatprep.subr.bf16.mxu0 0
  %3083 = vmatpush1.bf16.msra.mxu0 0
  %3084 = vmatprep.mubr.bf16.mxu0 0
  %3085 = vmatmul.mubr.bf16.gmra.mrb[0].mxu0 %v2950
  %v3086 = vpop.f32.mrb[0].mxu0
  %v3087 = vadd.f32 0.0, %v3086
  %v3088 = vpop.f32.mrb[0].mxu0
  %v3089 = vadd.f32 0.0, %v3088
  %v3090 = vpop.f32.mrb[0].mxu0
  %v3091 = vpop.f32.mrb[0].mxu0
  %3092 = vdwg.mxu0
  %v3093 = vadd.f32 %v2899, %v3005
  %v3094 = vadd.f32 %v2900, %v3007
  %v3095 = vadd.f32 %v2901, %v3046
  %v3096 = vadd.f32 %v2902, %v3048
  %v3097 = vadd.f32 %v2903, %v3087
  %v3098 = vadd.f32 %v2904, %v3089
  %3099 = vrot.lane.b32.xlu0 %v2040, 80
  %v3100 = vpop.permute.xlu0 %3099
  %3101 = vrot.lane.b32.xlu0 %v2922, 111
  %v3102 = vpop.permute.xlu0 %3101
  %3103 = vrot.lane.b32.xlu0 %v2923, 111
  %v3104 = vpop.permute.xlu0 %3103
  %3105 = vrot.lane.b32.xlu0 %v2924, 111
  %v3106 = vpop.permute.xlu0 %3105
  %3107 = vrot.lane.b32.xlu0 %v2925, 111
  %v3108 = vpop.permute.xlu0 %3107
  %3109 = vrot.lane.b32.xlu0 %v2926, 111
  %v3110 = vpop.permute.xlu0 %3109
  %3111 = vrot.lane.b32.xlu0 %v2927, 111
  %v3112 = vpop.permute.xlu0 %3111
  %3113 = vrot.lane.b32.xlu0 %v2928, 111
  %v3114 = vpop.permute.xlu0 %3113
  %v3115 = vsel %vm1284, %v3102, %v3104
  %v3116 = vsel %vm1284, %v3104, %v3106
  %v3117 = vsel %vm1284, %v3106, %v3108
  %v3118 = vsel %vm1284, %v3108, %v3110
  %v3119 = vsel %vm1284, %v3110, %v3112
  %v3120 = vsel %vm1284, %v3112, %v3114
  %v3122 = vsel %vm2081, %v3100, 0
  %v3125 = vsel %vm2085, %v3115, 0
  %v3128 = vsel %vm2085, %v3116, 0
  %v3131 = vsel %vm2085, %v3117, 0
  %v3134 = vsel %vm2085, %v3118, 0
  %v3137 = vsel %vm2085, %v3119, 0
  %v3140 = vsel %vm2085, %v3120, 0
  %3142 = vmatprep.subr.bf16.mxu0 %v3128
  %3143 = vmatpush1.bf16.msra.mxu0 %v3125
  %3144 = vmatprep.subr.bf16.mxu0 0
  %3145 = vmatpush1.bf16.msra.mxu0 0
  %3146 = vmatprep.subr.bf16.mxu0 0
  %3147 = vmatpush1.bf16.msra.mxu0 0
  %3148 = vmatprep.subr.bf16.mxu0 0
  %3149 = vmatpush1.bf16.msra.mxu0 0
  %3150 = vmatprep.subr.bf16.mxu0 0
  %3151 = vmatpush1.bf16.msra.mxu0 0
  %3152 = vmatprep.subr.bf16.mxu0 0
  %3153 = vmatpush1.bf16.msra.mxu0 0
  %3154 = vmatprep.subr.bf16.mxu0 0
  %3155 = vmatpush1.bf16.msra.mxu0 0
  %3156 = vmatprep.subr.bf16.mxu0 0
  %3157 = vmatpush1.bf16.msra.mxu0 0
  %3158 = vmatprep.subr.bf16.mxu0 0
  %3159 = vmatpush1.bf16.msra.mxu0 0
  %3160 = vmatprep.subr.bf16.mxu0 0
  %3161 = vmatpush1.bf16.msra.mxu0 0
  %3162 = vmatprep.subr.bf16.mxu0 0
  %3163 = vmatpush1.bf16.msra.mxu0 0
  %3164 = vmatprep.subr.bf16.mxu0 0
  %3165 = vmatpush1.bf16.msra.mxu0 0
  %3166 = vmatprep.subr.bf16.mxu0 0
  %3167 = vmatpush1.bf16.msra.mxu0 0
  %3168 = vmatprep.subr.bf16.mxu0 0
  %3169 = vmatpush1.bf16.msra.mxu0 0
  %3170 = vmatprep.subr.bf16.mxu0 0
  %3171 = vmatpush1.bf16.msra.mxu0 0
  %3172 = vmatprep.subr.bf16.mxu0 0
  %3173 = vmatpush1.bf16.msra.mxu0 0
  %3174 = vmatprep.mubr.bf16.mxu0 0
  %3175 = vmatmul.mubr.bf16.gmra.mrb[0].mxu0 %v3122
  %v3176 = vpop.f32.mrb[0].mxu0
  %v3177 = vadd.f32 0.0, %v3176
  %v3178 = vpop.f32.mrb[0].mxu0
  %v3179 = vadd.f32 0.0, %v3178
  %v3180 = vpop.f32.mrb[0].mxu0
  %v3181 = vpop.f32.mrb[0].mxu0
  %3182 = vdwg.mxu0
  %3183 = vmatprep.subr.bf16.mxu0 %v3134
  %3184 = vmatpush1.bf16.msra.mxu0 %v3131
  %3185 = vmatprep.subr.bf16.mxu0 0
  %3186 = vmatpush1.bf16.msra.mxu0 0
  %3187 = vmatprep.subr.bf16.mxu0 0
  %3188 = vmatpush1.bf16.msra.mxu0 0
  %3189 = vmatprep.subr.bf16.mxu0 0
  %3190 = vmatpush1.bf16.msra.mxu0 0
  %3191 = vmatprep.subr.bf16.mxu0 0
  %3192 = vmatpush1.bf16.msra.mxu0 0
  %3193 = vmatprep.subr.bf16.mxu0 0
  %3194 = vmatpush1.bf16.msra.mxu0 0
  %3195 = vmatprep.subr.bf16.mxu0 0
  %3196 = vmatpush1.bf16.msra.mxu0 0
  %3197 = vmatprep.subr.bf16.mxu0 0
  %3198 = vmatpush1.bf16.msra.mxu0 0
  %3199 = vmatprep.subr.bf16.mxu0 0
  %3200 = vmatpush1.bf16.msra.mxu0 0
  %3201 = vmatprep.subr.bf16.mxu0 0
  %3202 = vmatpush1.bf16.msra.mxu0 0
  %3203 = vmatprep.subr.bf16.mxu0 0
  %3204 = vmatpush1.bf16.msra.mxu0 0
  %3205 = vmatprep.subr.bf16.mxu0 0
  %3206 = vmatpush1.bf16.msra.mxu0 0
  %3207 = vmatprep.subr.bf16.mxu0 0
  %3208 = vmatpush1.bf16.msra.mxu0 0
  %3209 = vmatprep.subr.bf16.mxu0 0
  %3210 = vmatpush1.bf16.msra.mxu0 0
  %3211 = vmatprep.subr.bf16.mxu0 0
  %3212 = vmatpush1.bf16.msra.mxu0 0
  %3213 = vmatprep.subr.bf16.mxu0 0
  %3214 = vmatpush1.bf16.msra.mxu0 0
  %3215 = vmatprep.mubr.bf16.mxu0 0
  %3216 = vmatmul.mubr.bf16.gmra.mrb[0].mxu0 %v3122
  %v3217 = vpop.f32.mrb[0].mxu0
  %v3218 = vadd.f32 0.0, %v3217
  %v3219 = vpop.f32.mrb[0].mxu0
  %v3220 = vadd.f32 0.0, %v3219
  %v3221 = vpop.f32.mrb[0].mxu0
  %v3222 = vpop.f32.mrb[0].mxu0
  %3223 = vdwg.mxu0
  %3224 = vmatprep.subr.bf16.mxu0 %v3140
  %3225 = vmatpush1.bf16.msra.mxu0 %v3137
  %3226 = vmatprep.subr.bf16.mxu0 0
  %3227 = vmatpush1.bf16.msra.mxu0 0
  %3228 = vmatprep.subr.bf16.mxu0 0
  %3229 = vmatpush1.bf16.msra.mxu0 0
  %3230 = vmatprep.subr.bf16.mxu0 0
  %3231 = vmatpush1.bf16.msra.mxu0 0
  %3232 = vmatprep.subr.bf16.mxu0 0
  %3233 = vmatpush1.bf16.msra.mxu0 0
  %3234 = vmatprep.subr.bf16.mxu0 0
  %3235 = vmatpush1.bf16.msra.mxu0 0
  %3236 = vmatprep.subr.bf16.mxu0 0
  %3237 = vmatpush1.bf16.msra.mxu0 0
  %3238 = vmatprep.subr.bf16.mxu0 0
  %3239 = vmatpush1.bf16.msra.mxu0 0
  %3240 = vmatprep.subr.bf16.mxu0 0
  %3241 = vmatpush1.bf16.msra.mxu0 0
  %3242 = vmatprep.subr.bf16.mxu0 0
  %3243 = vmatpush1.bf16.msra.mxu0 0
  %3244 = vmatprep.subr.bf16.mxu0 0
  %3245 = vmatpush1.bf16.msra.mxu0 0
  %3246 = vmatprep.subr.bf16.mxu0 0
  %3247 = vmatpush1.bf16.msra.mxu0 0
  %3248 = vmatprep.subr.bf16.mxu0 0
  %3249 = vmatpush1.bf16.msra.mxu0 0
  %3250 = vmatprep.subr.bf16.mxu0 0
  %3251 = vmatpush1.bf16.msra.mxu0 0
  %3252 = vmatprep.subr.bf16.mxu0 0
  %3253 = vmatpush1.bf16.msra.mxu0 0
  %3254 = vmatprep.subr.bf16.mxu0 0
  %3255 = vmatpush1.bf16.msra.mxu0 0
  %3256 = vmatprep.mubr.bf16.mxu0 0
  %3257 = vmatmul.mubr.bf16.gmra.mrb[0].mxu0 %v3122
  %v3258 = vpop.f32.mrb[0].mxu0
  %v3259 = vadd.f32 0.0, %v3258
  %v3260 = vpop.f32.mrb[0].mxu0
  %v3261 = vadd.f32 0.0, %v3260
  %v3262 = vpop.f32.mrb[0].mxu0
  %v3263 = vpop.f32.mrb[0].mxu0
  %3264 = vdwg.mxu0
  %v3265 = vadd.f32 %v3093, %v3177
  %v3266 = vadd.f32 %v3094, %v3179
  %v3267 = vadd.f32 %v3095, %v3218
  %v3268 = vadd.f32 %v3096, %v3220
  %v3269 = vadd.f32 %v3097, %v3259
  %v3270 = vadd.f32 %v3098, %v3261
  %3271 = vrot.lane.b32.xlu0 %v2040, 72
  %v3272 = vpop.permute.xlu0 %3271
  %3273 = vrot.lane.b32.xlu0 %v2922, 110
  %v3274 = vpop.permute.xlu0 %3273
  %3275 = vrot.lane.b32.xlu0 %v2923, 110
  %v3276 = vpop.permute.xlu0 %3275
  %3277 = vrot.lane.b32.xlu0 %v2924, 110
  %v3278 = vpop.permute.xlu0 %3277
  %3279 = vrot.lane.b32.xlu0 %v2925, 110
  %v3280 = vpop.permute.xlu0 %3279
  %3281 = vrot.lane.b32.xlu0 %v2926, 110
  %v3282 = vpop.permute.xlu0 %3281
  %3283 = vrot.lane.b32.xlu0 %v2927, 110
  %v3284 = vpop.permute.xlu0 %3283
  %3285 = vrot.lane.b32.xlu0 %v2928, 110
  %v3286 = vpop.permute.xlu0 %3285
  %v3287 = vsel %vm1498, %v3274, %v3276
  %v3288 = vsel %vm1498, %v3276, %v3278
  %v3289 = vsel %vm1498, %v3278, %v3280
  %v3290 = vsel %vm1498, %v3280, %v3282
  %v3291 = vsel %vm1498, %v3282, %v3284
  %v3292 = vsel %vm1498, %v3284, %v3286
  %v3294 = vsel %vm2081, %v3272, 0
  %v3297 = vsel %vm2085, %v3287, 0
  %v3300 = vsel %vm2085, %v3288, 0
  %v3303 = vsel %vm2085, %v3289, 0
  %v3306 = vsel %vm2085, %v3290, 0
  %v3309 = vsel %vm2085, %v3291, 0
  %v3312 = vsel %vm2085, %v3292, 0
  %3314 = vmatprep.subr.bf16.mxu0 %v3300
  %3315 = vmatpush1.bf16.msra.mxu0 %v3297
  %3316 = vmatprep.subr.bf16.mxu0 0
  %3317 = vmatpush1.bf16.msra.mxu0 0
  %3318 = vmatprep.subr.bf16.mxu0 0
  %3319 = vmatpush1.bf16.msra.mxu0 0
  %3320 = vmatprep.subr.bf16.mxu0 0
  %3321 = vmatpush1.bf16.msra.mxu0 0
  %3322 = vmatprep.subr.bf16.mxu0 0
  %3323 = vmatpush1.bf16.msra.mxu0 0
  %3324 = vmatprep.subr.bf16.mxu0 0
  %3325 = vmatpush1.bf16.msra.mxu0 0
  %3326 = vmatprep.subr.bf16.mxu0 0
  %3327 = vmatpush1.bf16.msra.mxu0 0
  %3328 = vmatprep.subr.bf16.mxu0 0
  %3329 = vmatpush1.bf16.msra.mxu0 0
  %3330 = vmatprep.subr.bf16.mxu0 0
  %3331 = vmatpush1.bf16.msra.mxu0 0
  %3332 = vmatprep.subr.bf16.mxu0 0
  %3333 = vmatpush1.bf16.msra.mxu0 0
  %3334 = vmatprep.subr.bf16.mxu0 0
  %3335 = vmatpush1.bf16.msra.mxu0 0
  %3336 = vmatprep.subr.bf16.mxu0 0
  %3337 = vmatpush1.bf16.msra.mxu0 0
  %3338 = vmatprep.subr.bf16.mxu0 0
  %3339 = vmatpush1.bf16.msra.mxu0 0
  %3340 = vmatprep.subr.bf16.mxu0 0
  %3341 = vmatpush1.bf16.msra.mxu0 0
  %3342 = vmatprep.subr.bf16.mxu0 0
  %3343 = vmatpush1.bf16.msra.mxu0 0
  %3344 = vmatprep.subr.bf16.mxu0 0
  %3345 = vmatpush1.bf16.msra.mxu0 0
  %3346 = vmatprep.mubr.bf16.mxu0 0
  %3347 = vmatmul.mubr.bf16.gmra.mrb[0].mxu0 %v3294
  %v3348 = vpop.f32.mrb[0].mxu0
  %v3349 = vadd.f32 0.0, %v3348
  %v3350 = vpop.f32.mrb[0].mxu0
  %v3351 = vadd.f32 0.0, %v3350
  %v3352 = vpop.f32.mrb[0].mxu0
  %v3353 = vpop.f32.mrb[0].mxu0
  %3354 = vdwg.mxu0
  %3355 = vmatprep.subr.bf16.mxu0 %v3306
  %3356 = vmatpush1.bf16.msra.mxu0 %v3303
  %3357 = vmatprep.subr.bf16.mxu0 0
  %3358 = vmatpush1.bf16.msra.mxu0 0
  %3359 = vmatprep.subr.bf16.mxu0 0
  %3360 = vmatpush1.bf16.msra.mxu0 0
  %3361 = vmatprep.subr.bf16.mxu0 0
  %3362 = vmatpush1.bf16.msra.mxu0 0
  %3363 = vmatprep.subr.bf16.mxu0 0
  %3364 = vmatpush1.bf16.msra.mxu0 0
  %3365 = vmatprep.subr.bf16.mxu0 0
  %3366 = vmatpush1.bf16.msra.mxu0 0
  %3367 = vmatprep.subr.bf16.mxu0 0
  %3368 = vmatpush1.bf16.msra.mxu0 0
  %3369 = vmatprep.subr.bf16.mxu0 0
  %3370 = vmatpush1.bf16.msra.mxu0 0
  %3371 = vmatprep.subr.bf16.mxu0 0
  %3372 = vmatpush1.bf16.msra.mxu0 0
  %3373 = vmatprep.subr.bf16.mxu0 0
  %3374 = vmatpush1.bf16.msra.mxu0 0
  %3375 = vmatprep.subr.bf16.mxu0 0
  %3376 = vmatpush1.bf16.msra.mxu0 0
  %3377 = vmatprep.subr.bf16.mxu0 0
  %3378 = vmatpush1.bf16.msra.mxu0 0
  %3379 = vmatprep.subr.bf16.mxu0 0
  %3380 = vmatpush1.bf16.msra.mxu0 0
  %3381 = vmatprep.subr.bf16.mxu0 0
  %3382 = vmatpush1.bf16.msra.mxu0 0
  %3383 = vmatprep.subr.bf16.mxu0 0
  %3384 = vmatpush1.bf16.msra.mxu0 0
  %3385 = vmatprep.subr.bf16.mxu0 0
  %3386 = vmatpush1.bf16.msra.mxu0 0
  %3387 = vmatprep.mubr.bf16.mxu0 0
  %3388 = vmatmul.mubr.bf16.gmra.mrb[0].mxu0 %v3294
  %v3389 = vpop.f32.mrb[0].mxu0
  %v3390 = vadd.f32 0.0, %v3389
  %v3391 = vpop.f32.mrb[0].mxu0
  %v3392 = vadd.f32 0.0, %v3391
  %v3393 = vpop.f32.mrb[0].mxu0
  %v3394 = vpop.f32.mrb[0].mxu0
  %3395 = vdwg.mxu0
  %3396 = vmatprep.subr.bf16.mxu0 %v3312
  %3397 = vmatpush1.bf16.msra.mxu0 %v3309
  %3398 = vmatprep.subr.bf16.mxu0 0
  %3399 = vmatpush1.bf16.msra.mxu0 0
  %3400 = vmatprep.subr.bf16.mxu0 0
  %3401 = vmatpush1.bf16.msra.mxu0 0
  %3402 = vmatprep.subr.bf16.mxu0 0
  %3403 = vmatpush1.bf16.msra.mxu0 0
  %3404 = vmatprep.subr.bf16.mxu0 0
  %3405 = vmatpush1.bf16.msra.mxu0 0
  %3406 = vmatprep.subr.bf16.mxu0 0
  %3407 = vmatpush1.bf16.msra.mxu0 0
  %3408 = vmatprep.subr.bf16.mxu0 0
  %3409 = vmatpush1.bf16.msra.mxu0 0
  %3410 = vmatprep.subr.bf16.mxu0 0
  %3411 = vmatpush1.bf16.msra.mxu0 0
  %3412 = vmatprep.subr.bf16.mxu0 0
  %3413 = vmatpush1.bf16.msra.mxu0 0
  %3414 = vmatprep.subr.bf16.mxu0 0
  %3415 = vmatpush1.bf16.msra.mxu0 0
  %3416 = vmatprep.subr.bf16.mxu0 0
  %3417 = vmatpush1.bf16.msra.mxu0 0
  %3418 = vmatprep.subr.bf16.mxu0 0
  %3419 = vmatpush1.bf16.msra.mxu0 0
  %3420 = vmatprep.subr.bf16.mxu0 0
  %3421 = vmatpush1.bf16.msra.mxu0 0
  %3422 = vmatprep.subr.bf16.mxu0 0
  %3423 = vmatpush1.bf16.msra.mxu0 0
  %3424 = vmatprep.subr.bf16.mxu0 0
  %3425 = vmatpush1.bf16.msra.mxu0 0
  %3426 = vmatprep.subr.bf16.mxu0 0
  %3427 = vmatpush1.bf16.msra.mxu0 0
  %3428 = vmatprep.mubr.bf16.mxu0 0
  %3429 = vmatmul.mubr.bf16.gmra.mrb[0].mxu0 %v3294
  %v3430 = vpop.f32.mrb[0].mxu0
  %v3431 = vadd.f32 0.0, %v3430
  %v3432 = vpop.f32.mrb[0].mxu0
  %v3433 = vadd.f32 0.0, %v3432
  %v3434 = vpop.f32.mrb[0].mxu0
  %v3435 = vpop.f32.mrb[0].mxu0
  %3436 = vdwg.mxu0
  %v3437 = vadd.f32 %v3265, %v3349
  %v3438 = vadd.f32 %v3266, %v3351
  %v3439 = vadd.f32 %v3267, %v3390
  %v3440 = vadd.f32 %v3268, %v3392
  %v3441 = vadd.f32 %v3269, %v3431
  %v3442 = vadd.f32 %v3270, %v3433
  %3443 = vrot.lane.b32.xlu0 %v2040, 64
  %v3444 = vpop.permute.xlu0 %3443
  %3445 = vrot.lane.b32.xlu0 %v2922, 109
  %v3446 = vpop.permute.xlu0 %3445
  %3447 = vrot.lane.b32.xlu0 %v2923, 109
  %v3448 = vpop.permute.xlu0 %3447
  %3449 = vrot.lane.b32.xlu0 %v2924, 109
  %v3450 = vpop.permute.xlu0 %3449
  %3451 = vrot.lane.b32.xlu0 %v2925, 109
  %v3452 = vpop.permute.xlu0 %3451
  %3453 = vrot.lane.b32.xlu0 %v2926, 109
  %v3454 = vpop.permute.xlu0 %3453
  %3455 = vrot.lane.b32.xlu0 %v2927, 109
  %v3456 = vpop.permute.xlu0 %3455
  %3457 = vrot.lane.b32.xlu0 %v2928, 109
  %v3458 = vpop.permute.xlu0 %3457
  %v3459 = vsel %vm1712, %v3446, %v3448
  %v3460 = vsel %vm1712, %v3448, %v3450
  %v3461 = vsel %vm1712, %v3450, %v3452
  %v3462 = vsel %vm1712, %v3452, %v3454
  %v3463 = vsel %vm1712, %v3454, %v3456
  %v3464 = vsel %vm1712, %v3456, %v3458
  %v3466 = vsel %vm2081, %v3444, 0
  %v3469 = vsel %vm2085, %v3459, 0
  %v3472 = vsel %vm2085, %v3460, 0
  %v3475 = vsel %vm2085, %v3461, 0
  %v3478 = vsel %vm2085, %v3462, 0
  %v3481 = vsel %vm2085, %v3463, 0
  %v3484 = vsel %vm2085, %v3464, 0
  %3486 = vmatprep.subr.bf16.mxu0 %v3472
  %3487 = vmatpush1.bf16.msra.mxu0 %v3469
  %3488 = vmatprep.subr.bf16.mxu0 0
  %3489 = vmatpush1.bf16.msra.mxu0 0
  %3490 = vmatprep.subr.bf16.mxu0 0
  %3491 = vmatpush1.bf16.msra.mxu0 0
  %3492 = vmatprep.subr.bf16.mxu0 0
  %3493 = vmatpush1.bf16.msra.mxu0 0
  %3494 = vmatprep.subr.bf16.mxu0 0
  %3495 = vmatpush1.bf16.msra.mxu0 0
  %3496 = vmatprep.subr.bf16.mxu0 0
  %3497 = vmatpush1.bf16.msra.mxu0 0
  %3498 = vmatprep.subr.bf16.mxu0 0
  %3499 = vmatpush1.bf16.msra.mxu0 0
  %3500 = vmatprep.subr.bf16.mxu0 0
  %3501 = vmatpush1.bf16.msra.mxu0 0
  %3502 = vmatprep.subr.bf16.mxu0 0
  %3503 = vmatpush1.bf16.msra.mxu0 0
  %3504 = vmatprep.subr.bf16.mxu0 0
  %3505 = vmatpush1.bf16.msra.mxu0 0
  %3506 = vmatprep.subr.bf16.mxu0 0
  %3507 = vmatpush1.bf16.msra.mxu0 0
  %3508 = vmatprep.subr.bf16.mxu0 0
  %3509 = vmatpush1.bf16.msra.mxu0 0
  %3510 = vmatprep.subr.bf16.mxu0 0
  %3511 = vmatpush1.bf16.msra.mxu0 0
  %3512 = vmatprep.subr.bf16.mxu0 0
  %3513 = vmatpush1.bf16.msra.mxu0 0
  %3514 = vmatprep.subr.bf16.mxu0 0
  %3515 = vmatpush1.bf16.msra.mxu0 0
  %3516 = vmatprep.subr.bf16.mxu0 0
  %3517 = vmatpush1.bf16.msra.mxu0 0
  %3518 = vmatprep.mubr.bf16.mxu0 0
  %3519 = vmatmul.mubr.bf16.gmra.mrb[0].mxu0 %v3466
  %v3520 = vpop.f32.mrb[0].mxu0
  %v3521 = vadd.f32 0.0, %v3520
  %v3522 = vpop.f32.mrb[0].mxu0
  %v3523 = vadd.f32 0.0, %v3522
  %v3524 = vpop.f32.mrb[0].mxu0
  %v3525 = vpop.f32.mrb[0].mxu0
  %3526 = vdwg.mxu0
  %3527 = vmatprep.subr.bf16.mxu0 %v3478
  %3528 = vmatpush1.bf16.msra.mxu0 %v3475
  %3529 = vmatprep.subr.bf16.mxu0 0
  %3530 = vmatpush1.bf16.msra.mxu0 0
  %3531 = vmatprep.subr.bf16.mxu0 0
  %3532 = vmatpush1.bf16.msra.mxu0 0
  %3533 = vmatprep.subr.bf16.mxu0 0
  %3534 = vmatpush1.bf16.msra.mxu0 0
  %3535 = vmatprep.subr.bf16.mxu0 0
  %3536 = vmatpush1.bf16.msra.mxu0 0
  %3537 = vmatprep.subr.bf16.mxu0 0
  %3538 = vmatpush1.bf16.msra.mxu0 0
  %3539 = vmatprep.subr.bf16.mxu0 0
  %3540 = vmatpush1.bf16.msra.mxu0 0
  %3541 = vmatprep.subr.bf16.mxu0 0
  %3542 = vmatpush1.bf16.msra.mxu0 0
  %3543 = vmatprep.subr.bf16.mxu0 0
  %3544 = vmatpush1.bf16.msra.mxu0 0
  %3545 = vmatprep.subr.bf16.mxu0 0
  %3546 = vmatpush1.bf16.msra.mxu0 0
  %3547 = vmatprep.subr.bf16.mxu0 0
  %3548 = vmatpush1.bf16.msra.mxu0 0
  %3549 = vmatprep.subr.bf16.mxu0 0
  %3550 = vmatpush1.bf16.msra.mxu0 0
  %3551 = vmatprep.subr.bf16.mxu0 0
  %3552 = vmatpush1.bf16.msra.mxu0 0
  %3553 = vmatprep.subr.bf16.mxu0 0
  %3554 = vmatpush1.bf16.msra.mxu0 0
  %3555 = vmatprep.subr.bf16.mxu0 0
  %3556 = vmatpush1.bf16.msra.mxu0 0
  %3557 = vmatprep.subr.bf16.mxu0 0
  %3558 = vmatpush1.bf16.msra.mxu0 0
  %3559 = vmatprep.mubr.bf16.mxu0 0
  %3560 = vmatmul.mubr.bf16.gmra.mrb[0].mxu0 %v3466
  %v3561 = vpop.f32.mrb[0].mxu0
  %v3562 = vadd.f32 0.0, %v3561
  %v3563 = vpop.f32.mrb[0].mxu0
  %v3564 = vadd.f32 0.0, %v3563
  %v3565 = vpop.f32.mrb[0].mxu0
  %v3566 = vpop.f32.mrb[0].mxu0
  %3567 = vdwg.mxu0
  %3568 = vmatprep.subr.bf16.mxu0 %v3484
  %3569 = vmatpush1.bf16.msra.mxu0 %v3481
  %3570 = vmatprep.subr.bf16.mxu0 0
  %3571 = vmatpush1.bf16.msra.mxu0 0
  %3572 = vmatprep.subr.bf16.mxu0 0
  %3573 = vmatpush1.bf16.msra.mxu0 0
  %3574 = vmatprep.subr.bf16.mxu0 0
  %3575 = vmatpush1.bf16.msra.mxu0 0
  %3576 = vmatprep.subr.bf16.mxu0 0
  %3577 = vmatpush1.bf16.msra.mxu0 0
  %3578 = vmatprep.subr.bf16.mxu0 0
  %3579 = vmatpush1.bf16.msra.mxu0 0
  %3580 = vmatprep.subr.bf16.mxu0 0
  %3581 = vmatpush1.bf16.msra.mxu0 0
  %3582 = vmatprep.subr.bf16.mxu0 0
  %3583 = vmatpush1.bf16.msra.mxu0 0
  %3584 = vmatprep.subr.bf16.mxu0 0
  %3585 = vmatpush1.bf16.msra.mxu0 0
  %3586 = vmatprep.subr.bf16.mxu0 0
  %3587 = vmatpush1.bf16.msra.mxu0 0
  %3588 = vmatprep.subr.bf16.mxu0 0
  %3589 = vmatpush1.bf16.msra.mxu0 0
  %3590 = vmatprep.subr.bf16.mxu0 0
  %3591 = vmatpush1.bf16.msra.mxu0 0
  %3592 = vmatprep.subr.bf16.mxu0 0
  %3593 = vmatpush1.bf16.msra.mxu0 0
  %3594 = vmatprep.subr.bf16.mxu0 0
  %3595 = vmatpush1.bf16.msra.mxu0 0
  %3596 = vmatprep.subr.bf16.mxu0 0
  %3597 = vmatpush1.bf16.msra.mxu0 0
  %3598 = vmatprep.subr.bf16.mxu0 0
  %3599 = vmatpush1.bf16.msra.mxu0 0
  %3600 = vmatprep.mubr.bf16.mxu0 0
  %3601 = vmatmul.mubr.bf16.gmra.mrb[0].mxu0 %v3466
  %v3602 = vpop.f32.mrb[0].mxu0
  %v3603 = vadd.f32 0.0, %v3602
  %v3604 = vpop.f32.mrb[0].mxu0
  %v3605 = vadd.f32 0.0, %v3604
  %v3606 = vpop.f32.mrb[0].mxu0
  %v3607 = vpop.f32.mrb[0].mxu0
  %3608 = vdwg.mxu0
  %v3609 = vadd.f32 %v3437, %v3521
  %v3610 = vadd.f32 %v3438, %v3523
  %v3611 = vadd.f32 %v3439, %v3562
  %v3612 = vadd.f32 %v3440, %v3564
  %v3613 = vadd.f32 %v3441, %v3603
  %v3614 = vadd.f32 %v3442, %v3605
  %v3615 = vld [vmem:[%s4] sm:$0xff]
  %3617 = vset.pattern.permute.xlu0 0
  %3618 = vperm.xlu0 %3617, %v3615
  %v3619 = vpop.permute.xlu0 %3618
  %v3621 = vadd.f32 %v3609, %v3619
  %v3622 = vadd.f32 %v3610, %v3619
  %v3623 = vadd.f32 %v3611, %v3619
  %v3624 = vadd.f32 %v3612, %v3619
  %v3625 = vadd.f32 %v3613, %v3619
  %v3626 = vadd.f32 %v3614, %v3619
  %v3627 = vmul.f32 %v3621, %v1885
  %v3628 = vmul.f32 %v3622, %v1889
  %v3629 = vmul.f32 %v3623, %v1893
  %v3630 = vmul.f32 %v3624, %v1897
  %v3631 = vmul.f32 %v3625, %v1901
  %v3632 = vmul.f32 %v3626, %v1905
  %v3633 = vadd.f32 %v3627, %v3628
  %v3634 = vadd.f32 %v3633, %v3629
  %v3635 = vadd.f32 %v3634, %v3630
  %v3636 = vadd.f32 %v3635, %v3631
  %v3637 = vadd.f32 %v3636, %v3632
  %3638 = vadd.xlane.f32.xlu0 %v3637
  %v3639 = vpop.xlane.xlu0 %3638
  %v3640 = vmul.f32 %v3639, 0.001953125
  %v3641 = vsub.f32 %v3621, %v3640
  %v3642 = vsub.f32 %v3622, %v3640
  %v3643 = vsub.f32 %v3623, %v3640
  %v3644 = vsub.f32 %v3624, %v3640
  %v3645 = vsub.f32 %v3625, %v3640
  %v3646 = vsub.f32 %v3626, %v3640
  %v3647 = vmul.f32 %v3641, %v3641
  %v3648 = vmul.f32 %v3642, %v3642
  %v3649 = vmul.f32 %v3643, %v3643
  %v3650 = vmul.f32 %v3644, %v3644
  %v3651 = vmul.f32 %v3645, %v3645
  %v3652 = vmul.f32 %v3646, %v3646
  %v3653 = vmul.f32 %v3647, %v1885
  %v3654 = vmul.f32 %v3648, %v1889
  %v3655 = vmul.f32 %v3649, %v1893
  %v3656 = vmul.f32 %v3650, %v1897
  %v3657 = vmul.f32 %v3651, %v1901
  %v3658 = vmul.f32 %v3652, %v1905
  %v3659 = vadd.f32 %v3653, %v3654
  %v3660 = vadd.f32 %v3659, %v3655
  %v3661 = vadd.f32 %v3660, %v3656
  %v3662 = vadd.f32 %v3661, %v3657
  %v3663 = vadd.f32 %v3662, %v3658
  %3664 = vadd.xlane.f32.xlu0 %v3663
  %v3665 = vpop.xlane.xlu0 %3664
  %v3666 = vmul.f32 %v3665, 0.001953125
  %v3667 = vadd.f32 %v3666, 1e-05
  %v3668 = vrsqrt.pop %v3667
  %v3669 = vmul.f32 %v3641, %v3668
  %v3670 = vmul.f32 %v3642, %v3668
  %v3671 = vmul.f32 %v3643, %v3668
  %v3672 = vmul.f32 %v3644, %v3668
  %v3673 = vmul.f32 %v3645, %v3668
  %v3674 = vmul.f32 %v3646, %v3668
  %3675 = vset.pattern.permute.xlu0 1
  %3676 = vperm.xlu0 %3675, %v3615
  %v3677 = vpop.permute.xlu0 %3676
  %v3679 = vmul.f32 %v3677, %v3669
  %v3680 = vmul.f32 %v3677, %v3670
  %v3681 = vmul.f32 %v3677, %v3671
  %v3682 = vmul.f32 %v3677, %v3672
  %v3683 = vmul.f32 %v3677, %v3673
  %v3684 = vmul.f32 %v3677, %v3674
  %3685 = vset.pattern.permute.xlu0 2
  %3686 = vperm.xlu0 %3685, %v3615
  %v3687 = vpop.permute.xlu0 %3686
  %v3689 = vadd.f32 %v3679, %v3687
  %v3690 = vadd.f32 %v3680, %v3687
  %v3691 = vadd.f32 %v3681, %v3687
  %v3692 = vadd.f32 %v3682, %v3687
  %v3693 = vadd.f32 %v3683, %v3687
  %v3694 = vadd.f32 %v3684, %v3687
  %vm3695 = vcmp.gt.f32.partialorder %v3689, 0.0
  %vm3696 = vcmp.gt.f32.partialorder %v3690, 0.0
  %vm3697 = vcmp.gt.f32.partialorder %v3691, 0.0
  %vm3698 = vcmp.gt.f32.partialorder %v3692, 0.0
  %vm3699 = vcmp.gt.f32.partialorder %v3693, 0.0
  %vm3700 = vcmp.gt.f32.partialorder %v3694, 0.0
  %v3701 = vmul.f32 %v3689, 0.01
  %v3702 = vmul.f32 %v3690, 0.01
  %v3703 = vmul.f32 %v3691, 0.01
  %v3704 = vmul.f32 %v3692, 0.01
  %v3705 = vmul.f32 %v3693, 0.01
  %v3706 = vmul.f32 %v3694, 0.01
  %v3707 = vsel %vm3695, %v3689, %v3701
  %v3708 = vsel %vm3696, %v3690, %v3702
  %v3709 = vsel %vm3697, %v3691, %v3703
  %v3710 = vsel %vm3698, %v3692, %v3704
  %v3711 = vsel %vm3699, %v3693, %v3705
  %v3712 = vsel %vm3700, %v3694, %v3706
  %v3713 = vmul.f32 %v3707, %v1885
  %v3714 = vmul.f32 %v3708, %v1889
  %v3715 = vmul.f32 %v3709, %v1893
  %v3716 = vmul.f32 %v3710, %v1897
  %v3717 = vmul.f32 %v3711, %v1901
  %v3718 = vmul.f32 %v3712, %v1905
  %3719 = vst [vmem:[%s6] sm:$0xff] %v3713
  %3720 = vst [vmem:[%s6 + $0x8] sm:$0xff] %v3714
  %3721 = vst [vmem:[%s6 + $0x10] sm:$0xff] %v3715
  %3722 = vst [vmem:[%s6 + $0x18] sm:$0xff] %v3716
  %3723 = vst [vmem:[%s6 + $0x20] sm:$0xff] %v3717
  %3724 = vst [vmem:[%s6 + $0x28] sm:$0xff] %v3718
  // Predicated region
  $region26: #{conv_batchnorm_act_x2.1} parent=0 // pred_check
    _
  $region27: #{conv_batchnorm_act_x2.1} parent=0 // pred_check_branch
    %3726 = sbr.rel (0) target = $region29
  $region28: #{conv_batchnorm_act_x2.1} parent=0 // pred_region
    _
  $region29: #{conv_batchnorm_act_x2.1} parent=0 // pred_fallthru
    _
  // Predicated region
  $region30: #{conv_batchnorm_act_x2.1} parent=0 // pred_check
    _
  $region31: #{conv_batchnorm_act_x2.1} parent=0 // pred_check_branch
    %3728 = sbr.rel (0) target = $region33
  $region32: #{conv_batchnorm_act_x2.1} parent=0 // pred_region
    _
  $region33: #{conv_batchnorm_act_x2.1} parent=0 // pred_fallthru
    _

</llo_original>
